<compile_context>
chip_gen: v6e
topology: v6e:2x2x1
jax: 0.10.0
libtpu: 0.0.40
codegen_flags: <defaults>
</compile_context>

<pallas_src>
import numpy as np
import jax
import jax.numpy as jnp
from jax.experimental import pallas as pl
from jax.experimental.pallas import tpu as pltpu


# --------------------------------------------------------------------------- tiling

def _vmem_budget():
    try:
        phys = int(pltpu.get_tpu_info().vmem_capacity_bytes)
    except Exception:
        phys = 64 << 20                       # conservative (v7x-sized) fallback
    return int(min(100 << 20, (phys * 3) // 4))


def _pick_row_tile(H, W, C_in, C4, N, vmem_limit):
    """Largest divisor TR of H whose per-grid-step VMEM footprint fits the budget."""
    LANE = 128
    budget = vmem_limit // 2                  # headroom for compiler temps / pipelining

    def step_bytes(TR):
        TRW = TR * W
        cpad = -(-C4 // LANE) * LANE
        kpad = -(-(9 * C_in) // LANE) * LANE
        in_b = (TR + 2) * (W + 2) * LANE * 2      # bf16 slab (C_in lane-padded in VMEM)
        out_b = TRW * cpad * 4                    # f32 output block (pass 2)
        patch = TRW * kpad * 2                    # bf16 im2col patch
        acc = TRW * cpad * 4                      # f32 matmul result
        w_b = 9 * C_in * cpad * 2
        return 2 * (in_b + out_b) + patch + acc + w_b   # x2: double-buffered in/out

    # TODO(synk): for H with no friendly divisors this degenerates toward small TR;
    #             switch to cdiv tiling with a pl.when-guarded remainder tile.
    TR = 1
    for d in range(1, H + 1):
        if H % d:
            continue
        if d * W > 2048:                      # keep several grid steps / sane matmul M
            continue
        if N * (H // d) < 2 and d != 1:       # keep >=2 grid steps for the 2-TC chips
            continue
        if step_bytes(d) > budget:
            continue
        TR = d
    return TR


# --------------------------------------------------------------------------- kernels

def _build_patch(xs_ref, TR, W, C_in):
    """(TR*W, 9*C_in) bf16 im2col patch from the haloed slab, built once in VMEM."""
    cols = []
    for a in range(3):
        for b in range(3):
            cols.append(xs_ref[0, a:a + TR, b:b + W, :])     # (TR, W, C_in) bf16
    patch = jnp.concatenate(cols, axis=-1)                   # (TR, W, 9*C_in)
    return patch.reshape(TR * W, 9 * C_in)


def _make_stats_kernel(TR, W, C_in):
    """Pass 1: fused 3x3 conv (one MXU matmul) -> per-tile sum + centered sum-of-squares."""
    TRW = TR * W
    inv_n = 1.0 / float(TRW)

    def kernel(xs_ref, w_ref, sum_ref, ss_ref):
        patch = _build_patch(xs_ref, TR, W, C_in)                       # bf16
        acc = jnp.dot(patch, w_ref[...], preferred_element_type=jnp.float32)  # (TRW, C4) f32
        s = jnp.sum(acc, axis=0, keepdims=True)                         # (1, C4)
        c = acc - s * inv_n                                             # tile-mean centered
        ss = jnp.sum(c * c, axis=0, keepdims=True)
        sum_ref[...] = s[None]
        ss_ref[...] = ss[None]

    return kernel


def _make_conv_bn_relu_kernel(TR, W, C_in):
    """Pass 2: recompute conv, fuse BatchNorm affine + ReLU, write unpadded f32 block."""
    def kernel(xs_ref, w_ref, sc_ref, sh_ref, o_ref):
        patch = _build_patch(xs_ref, TR, W, C_in)
        acc = jnp.dot(patch, w_ref[...], preferred_element_type=jnp.float32)
        o_ref[...] = jnp.maximum(acc * sc_ref[...] + sh_ref[...], 0.0)[None]

    return kernel


# --------------------------------------------------------------------------- wrapper

def unet_up_conv(x, w, b, gamma, beta, eps=1e-5):
    """Forward of UNetUpConv (BatchNorm2d in training mode, i.e. batch statistics).

    x: (N, C_in, H, W) f32; w: (C_out, C_in, 3, 3); b/gamma/beta: (C_out,).
    Returns (N, C_out, 2H, 2W) f32.  `b` is accepted but unused: BN over batch
    statistics cancels a constant per-channel bias exactly (training mode only).
    """
    del b
    N, C_in, H, W = x.shape
    C_out = w.shape[0]
    Hu, Wu = 2 * H, 2 * W
    C4 = 4 * C_out

    vmem_limit = _vmem_budget()
    TR = _pick_row_tile(H, W, C_in, C4, N, vmem_limit)
    n_t = H // TR
    G = N * n_t
    TRW = TR * W

    # ---- fold (nearest x2 upsample o conv3x3 pad=1) into one 3x3 valid conv on the
    #      zero-padded ORIGINAL image with 4*C_out phase channels.
    # R[dy, a, ky] = 1 iff conv tap ky of upsampled output row 2m+dy reads padded row m+a.
    R = np.zeros((2, 3, 3), np.float32)
    R[0, 0, 0] = 1.0; R[0, 1, 1] = 1.0; R[0, 1, 2] = 1.0       # dy = 0
    R[1, 1, 0] = 1.0; R[1, 1, 1] = 1.0; R[1, 2, 2] = 1.0       # dy = 1
    Rj = jnp.asarray(R)
    # W_eff[a, b, ci, dy, dx, co] -> rows ordered (tap=a*3+b, ci), cols (dy, dx, co)
    w_eff = jnp.einsum("yak,xbl,oikl->abiyxo", Rj, Rj, w.astype(jnp.float32))
    w_eff = w_eff.reshape(9 * C_in, C4).astype(jnp.bfloat16)

    # ---- haloed bf16 row slabs at ORIGINAL resolution (~1.1x input bytes)
    x_nhwc = jnp.transpose(x, (0, 2, 3, 1)).astype(jnp.bfloat16)   # (N, H, W, C_in)
    xpad = jnp.pad(x_nhwc, ((0, 0), (1, 1), (1, 1), (0, 0)))       # (N, H+2, W+2, C_in)
    rows = np.arange(n_t)[:, None] * TR + np.arange(TR + 2)[None, :]
    xslab = xpad[:, rows].reshape(G, TR + 2, W + 2, C_in)

    cparams = pltpu.CompilerParams(dimension_semantics=("parallel",),
                                   vmem_limit_bytes=vmem_limit)
    in_specs_common = [
        pl.BlockSpec((1, TR + 2, W + 2, C_in), lambda i: (i, 0, 0, 0)),
        pl.BlockSpec((9 * C_in, C4), lambda i: (0, 0)),
    ]

    # ---- pass 1: stats only (no intermediate activation round-trip through HBM)
    ps, pss = pl.pallas_call(
        _make_stats_kernel(TR, W, C_in),
        out_shape=(jax.ShapeDtypeStruct((G, 1, C4), jnp.float32),
                   jax.ShapeDtypeStruct((G, 1, C4), jnp.float32)),
        grid_spec=pltpu.PrefetchScalarGridSpec(
            num_scalar_prefetch=0, grid=(G,),
            in_specs=in_specs_common,
            out_specs=(pl.BlockSpec((1, 1, C4), lambda i: (i, 0, 0)),
                       pl.BlockSpec((1, 1, C4), lambda i: (i, 0, 0)))),
        compiler_params=cparams,
    )(xslab, w_eff)

    # ---- BatchNorm batch statistics: parallel-variance merge of the tiny partials
    n_chunk = float(TRW)
    total = float(N * Hu * Wu)                       # == G * 4 * TRW
    cs = ps.reshape(G * 4, C_out)                    # per (tile, phase) sums
    css = pss.reshape(G * 4, C_out)                  # per (tile, phase) centered SS
    mean = cs.sum(axis=0) / total
    cmean = cs / n_chunk
    var = (css.sum(axis=0) + (n_chunk * (cmean - mean) ** 2).sum(axis=0)) / total
    scale = gamma.astype(jnp.float32) / jnp.sqrt(var + eps)
    shift = beta.astype(jnp.float32) - mean * scale
    scale4 = jnp.tile(scale, 4).reshape(1, C4)       # phase-major (dy, dx, co)
    shift4 = jnp.tile(shift, 4).reshape(1, C4)

    # ---- pass 2: recompute conv + fused BN affine + ReLU.  Output carries NO lane
    #      padding in HBM (C4 minor dim; masked stores accepted for small C4).
    z = pl.pallas_call(
        _make_conv_bn_relu_kernel(TR, W, C_in),
        out_shape=jax.ShapeDtypeStruct((G, TRW, C4), jnp.float32),
        grid_spec=pltpu.PrefetchScalarGridSpec(
            num_scalar_prefetch=0, grid=(G,),
            in_specs=in_specs_common + [pl.BlockSpec((1, C4), lambda i: (0, 0)),
                                        pl.BlockSpec((1, C4), lambda i: (0, 0))],
            out_specs=pl.BlockSpec((1, TRW, C4), lambda i: (i, 0, 0))),
        compiler_params=cparams,
    )(xslab, w_eff, scale4, shift4)

    # ---- pixel shuffle (dy, dx, co) and back to NCHW
    # TODO(synk): fold this relayout into pass 2's out_spec (write NCHW blocks directly)
    #             to avoid one extra XLA read+write of the f32 output.
    z = z.reshape(N, n_t, TR, W, 2, 2, C_out)            # (n, t, r, q, dy, dx, co)
    out = z.transpose(0, 6, 1, 2, 4, 3, 5).reshape(N, C_out, Hu, Wu)
    return out


# --------------------------------------------------------------------------- reference

def _reference(x, w, b, gamma, beta, eps=1e-5):
    xu = jnp.repeat(jnp.repeat(x, 2, axis=2), 2, axis=3)
    y = jax.lax.conv_general_dilated(
        xu, w, window_strides=(1, 1), padding="SAME",
        dimension_numbers=("NCHW", "OIHW", "NCHW")) + b.reshape(1, -1, 1, 1)
    mu = y.mean(axis=(0, 2, 3), keepdims=True)
    va = ((y - mu) ** 2).mean(axis=(0, 2, 3), keepdims=True)   # biased, like PyTorch BN
    yn = (y - mu) / jnp.sqrt(va + eps)
    return jnp.maximum(yn * gamma.reshape(1, -1, 1, 1) + beta.reshape(1, -1, 1, 1), 0.0)


if __name__ == "__main__":
    # small shapes consistent with the module: N=2, C_in=4, C_out=8, 16x16 -> 32x32
    N, C_in, C_out, H, W = 2, 4, 8, 16, 16
    key = jax.random.PRNGKey(0)
    kx_, kw_, kb_, kg_, kbe_ = jax.random.split(key, 5)

    x = jax.random.normal(kx_, (N, C_in, H, W), dtype=jnp.float32)
    fan_in = C_in * 9
    lim = 1.0 / float(np.sqrt(fan_in))
    w = jax.random.uniform(kw_, (C_out, C_in, 3, 3), jnp.float32, -lim, lim)
    b = jax.random.uniform(kb_, (C_out,), jnp.float32, -lim, lim)
    gamma = 1.0 + 0.1 * jax.random.normal(kg_, (C_out,), jnp.float32)
    beta = 0.1 * jax.random.normal(kbe_, (C_out,), jnp.float32)

    fwd = jax.jit(unet_up_conv)
    out = jax.block_until_ready(fwd(x, w, b, gamma, beta))
    assert out.shape == (N, C_out, 2 * H, 2 * W)

    ref = jax.block_until_ready(_reference(x, w, b, gamma, beta))
    o, r = np.asarray(out), np.asarray(ref)
    # bf16 MXU operands (f32 accumulation / stats / BN) => small abs error on the
    # normalized output; stats are computed from the same values that get normalized.
    np.testing.assert_allclose(o, r, atol=5e-2, rtol=5e-2)
    assert float(np.sqrt(np.mean((o - r) ** 2))) < 1e-2

    print("KERNEL_OK")
</pallas_src>

<mosaic_0001>
module attributes {stable_mosaic.version = 11 : i64} {
  func.func @kernel(%arg0: i32, %arg1: memref<1x18x18x4xbf16, #tpu.memory_space<vmem>>, %arg2: memref<36x32xbf16, #tpu.memory_space<vmem>>, %arg3: memref<1x1x32xf32, #tpu.memory_space<vmem>>, %arg4: memref<1x1x32xf32, #tpu.memory_space<vmem>>) attributes {dimension_semantics = [#tpu.dimension_semantics<parallel>], iteration_bounds = array<i64: 2>, scalar_prefetch = 0 : i64, scratch_operands = 0 : i64, tpu.core_type = #tpu.core_type<tc>, window_params = [{transform_indices = @transform_0, window_bounds = array<i64: 1, 18, 18, 4>}, {pipeline_mode = #tpu.pipeline_mode<synchronous>, transform_indices = @transform_1, window_bounds = array<i64: 36, 32>}, {transform_indices = @transform_2, window_bounds = array<i64: 1, 1, 32>}, {transform_indices = @transform_3, window_bounds = array<i64: 1, 1, 32>}]} {
    %c0 = arith.constant 0 : index
    %c0_0 = arith.constant 0 : index
    %c0_1 = arith.constant 0 : index
    %c0_2 = arith.constant 0 : index
    %0 = vector.load %arg1[%c0, %c0_0, %c0_1, %c0_2] : memref<1x18x18x4xbf16, #tpu.memory_space<vmem>>, vector<1x16x16x4xbf16>
    %1 = vector.shape_cast %0 : vector<1x16x16x4xbf16> to vector<16x16x4xbf16>
    %c0_3 = arith.constant 0 : index
    %c0_4 = arith.constant 0 : index
    %c1 = arith.constant 1 : index
    %c0_5 = arith.constant 0 : index
    %2 = vector.load %arg1[%c0_3, %c0_4, %c1, %c0_5] : memref<1x18x18x4xbf16, #tpu.memory_space<vmem>>, vector<1x16x16x4xbf16>
    %3 = vector.shape_cast %2 : vector<1x16x16x4xbf16> to vector<16x16x4xbf16>
    %c0_6 = arith.constant 0 : index
    %c0_7 = arith.constant 0 : index
    %c2 = arith.constant 2 : index
    %c0_8 = arith.constant 0 : index
    %4 = vector.load %arg1[%c0_6, %c0_7, %c2, %c0_8] : memref<1x18x18x4xbf16, #tpu.memory_space<vmem>>, vector<1x16x16x4xbf16>
    %5 = vector.shape_cast %4 : vector<1x16x16x4xbf16> to vector<16x16x4xbf16>
    %c0_9 = arith.constant 0 : index
    %c1_10 = arith.constant 1 : index
    %c0_11 = arith.constant 0 : index
    %c0_12 = arith.constant 0 : index
    %6 = vector.load %arg1[%c0_9, %c1_10, %c0_11, %c0_12] : memref<1x18x18x4xbf16, #tpu.memory_space<vmem>>, vector<1x16x16x4xbf16>
    %7 = vector.shape_cast %6 : vector<1x16x16x4xbf16> to vector<16x16x4xbf16>
    %c0_13 = arith.constant 0 : index
    %c1_14 = arith.constant 1 : index
    %c1_15 = arith.constant 1 : index
    %c0_16 = arith.constant 0 : index
    %8 = vector.load %arg1[%c0_13, %c1_14, %c1_15, %c0_16] : memref<1x18x18x4xbf16, #tpu.memory_space<vmem>>, vector<1x16x16x4xbf16>
    %9 = vector.shape_cast %8 : vector<1x16x16x4xbf16> to vector<16x16x4xbf16>
    %c0_17 = arith.constant 0 : index
    %c1_18 = arith.constant 1 : index
    %c2_19 = arith.constant 2 : index
    %c0_20 = arith.constant 0 : index
    %10 = vector.load %arg1[%c0_17, %c1_18, %c2_19, %c0_20] : memref<1x18x18x4xbf16, #tpu.memory_space<vmem>>, vector<1x16x16x4xbf16>
    %11 = vector.shape_cast %10 : vector<1x16x16x4xbf16> to vector<16x16x4xbf16>
    %c0_21 = arith.constant 0 : index
    %c2_22 = arith.constant 2 : index
    %c0_23 = arith.constant 0 : index
    %c0_24 = arith.constant 0 : index
    %12 = vector.load %arg1[%c0_21, %c2_22, %c0_23, %c0_24] : memref<1x18x18x4xbf16, #tpu.memory_space<vmem>>, vector<1x16x16x4xbf16>
    %13 = vector.shape_cast %12 : vector<1x16x16x4xbf16> to vector<16x16x4xbf16>
    %c0_25 = arith.constant 0 : index
    %c2_26 = arith.constant 2 : index
    %c1_27 = arith.constant 1 : index
    %c0_28 = arith.constant 0 : index
    %14 = vector.load %arg1[%c0_25, %c2_26, %c1_27, %c0_28] : memref<1x18x18x4xbf16, #tpu.memory_space<vmem>>, vector<1x16x16x4xbf16>
    %15 = vector.shape_cast %14 : vector<1x16x16x4xbf16> to vector<16x16x4xbf16>
    %c0_29 = arith.constant 0 : index
    %c2_30 = arith.constant 2 : index
    %c2_31 = arith.constant 2 : index
    %c0_32 = arith.constant 0 : index
    %16 = vector.load %arg1[%c0_29, %c2_30, %c2_31, %c0_32] : memref<1x18x18x4xbf16, #tpu.memory_space<vmem>>, vector<1x16x16x4xbf16>
    %17 = vector.shape_cast %16 : vector<1x16x16x4xbf16> to vector<16x16x4xbf16>
    %18 = tpu.concatenate %1, %3, %5, %7, %9, %11, %13, %15, %17 in 2 : vector<16x16x4xbf16>, vector<16x16x4xbf16>, vector<16x16x4xbf16>, vector<16x16x4xbf16>, vector<16x16x4xbf16>, vector<16x16x4xbf16>, vector<16x16x4xbf16>, vector<16x16x4xbf16>, vector<16x16x4xbf16> -> vector<16x16x36xbf16>
    %19 = vector.shape_cast %18 : vector<16x16x36xbf16> to vector<256x36xbf16>
    %c0_33 = arith.constant 0 : index
    %c0_34 = arith.constant 0 : index
    %20 = vector.load %arg2[%c0_33, %c0_34] : memref<36x32xbf16, #tpu.memory_space<vmem>>, vector<36x32xbf16>
    %cst = arith.constant dense<0.000000e+00> : vector<256x32xf32>
    %21 = tpu.matmul %19, %20, %cst {dimension_numbers = #tpu.dot_dimension_numbers<[1], [0], [0], [1], [0, 0, 1, 1], [], []>} : vector<256x36xbf16>, vector<36x32xbf16>, vector<256x32xf32> -> vector<256x32xf32>
    %cst_35 = arith.constant dense<0.000000e+00> : vector<32xf32>
    %22 = vector.multi_reduction <add>, %21, %cst_35 [0] : vector<256x32xf32> to vector<32xf32>
    %23 = vector.shape_cast %22 : vector<32xf32> to vector<1x32xf32>
    %cst_36 = arith.constant 3.906250e-03 : f32
    %24 = vector.broadcast %cst_36 : f32 to vector<1x32xf32>
    %25 = arith.mulf %23, %24 : vector<1x32xf32>
    %26 = vector.broadcast %25 : vector<1x32xf32> to vector<256x32xf32>
    %27 = arith.subf %21, %26 : vector<256x32xf32>
    %28 = arith.mulf %27, %27 : vector<256x32xf32>
    %cst_37 = arith.constant dense<0.000000e+00> : vector<32xf32>
    %29 = vector.multi_reduction <add>, %28, %cst_37 [0] : vector<256x32xf32> to vector<32xf32>
    %30 = vector.shape_cast %29 : vector<32xf32> to vector<1x32xf32>
    %31 = vector.shape_cast %23 : vector<1x32xf32> to vector<1x1x32xf32>
    %c0_38 = arith.constant 0 : index
    %c0_39 = arith.constant 0 : index
    %c0_40 = arith.constant 0 : index
    %32 = vector.load %arg3[%c0_38, %c0_39, %c0_40] : memref<1x1x32xf32, #tpu.memory_space<vmem>>, vector<1x1x32xf32>
    tpu.vector_store %arg3[%c0_38, %c0_39, %c0_40], %31 {strides = array<i32>} : memref<1x1x32xf32, #tpu.memory_space<vmem>>, vector<1x1x32xf32>,
    %33 = vector.shape_cast %30 : vector<1x32xf32> to vector<1x1x32xf32>
    %c0_41 = arith.constant 0 : index
    %c0_42 = arith.constant 0 : index
    %c0_43 = arith.constant 0 : index
    %34 = vector.load %arg4[%c0_41, %c0_42, %c0_43] : memref<1x1x32xf32, #tpu.memory_space<vmem>>, vector<1x1x32xf32>
    tpu.vector_store %arg4[%c0_41, %c0_42, %c0_43], %33 {strides = array<i32>} : memref<1x1x32xf32, #tpu.memory_space<vmem>>, vector<1x1x32xf32>,
    return
  }
  func.func @transform_0(%arg0: i32) -> (i32, i32, i32, i32) {
    %c0_i32 = arith.constant 0 : i32
    %c0_i32_0 = arith.constant 0 : i32
    %c0_i32_1 = arith.constant 0 : i32
    %c0_i32_2 = arith.constant 0 : i32
    return %arg0, %c0_i32, %c0_i32_0, %c0_i32_1 : i32, i32, i32, i32
  }
  func.func @transform_1(%arg0: i32) -> (i32, i32) {
    %c0_i32 = arith.constant 0 : i32
    %c0_i32_0 = arith.constant 0 : i32
    %c0_i32_1 = arith.constant 0 : i32
    return %c0_i32, %c0_i32_0 : i32, i32
  }
  func.func @transform_2(%arg0: i32) -> (i32, i32, i32) {
    %c0_i32 = arith.constant 0 : i32
    %c0_i32_0 = arith.constant 0 : i32
    %c0_i32_1 = arith.constant 0 : i32
    return %arg0, %c0_i32, %c0_i32_0 : i32, i32, i32
  }
  func.func @transform_3(%arg0: i32) -> (i32, i32, i32) {
    %c0_i32 = arith.constant 0 : i32
    %c0_i32_0 = arith.constant 0 : i32
    %c0_i32_1 = arith.constant 0 : i32
    return %arg0, %c0_i32, %c0_i32_0 : i32, i32, i32
  }
}

module attributes {stable_mosaic.version = 11 : i64} {
  func.func @kernel(%arg0: i32, %arg1: memref<1x18x18x4xbf16, #tpu.memory_space<vmem>>, %arg2: memref<36x32xbf16, #tpu.memory_space<vmem>>, %arg3: memref<1x32xf32, #tpu.memory_space<vmem>>, %arg4: memref<1x32xf32, #tpu.memory_space<vmem>>, %arg5: memref<1x256x32xf32, #tpu.memory_space<vmem>>) attributes {dimension_semantics = [#tpu.dimension_semantics<parallel>], iteration_bounds = array<i64: 2>, scalar_prefetch = 0 : i64, scratch_operands = 0 : i64, tpu.core_type = #tpu.core_type<tc>, window_params = [{transform_indices = @transform_0, window_bounds = array<i64: 1, 18, 18, 4>}, {pipeline_mode = #tpu.pipeline_mode<synchronous>, transform_indices = @transform_1, window_bounds = array<i64: 36, 32>}, {pipeline_mode = #tpu.pipeline_mode<synchronous>, transform_indices = @transform_2, window_bounds = array<i64: 1, 32>}, {pipeline_mode = #tpu.pipeline_mode<synchronous>, transform_indices = @transform_3, window_bounds = array<i64: 1, 32>}, {transform_indices = @transform_4, window_bounds = array<i64: 1, 256, 32>}]} {
    %c0 = arith.constant 0 : index
    %c0_0 = arith.constant 0 : index
    %c0_1 = arith.constant 0 : index
    %c0_2 = arith.constant 0 : index
    %0 = vector.load %arg1[%c0, %c0_0, %c0_1, %c0_2] : memref<1x18x18x4xbf16, #tpu.memory_space<vmem>>, vector<1x16x16x4xbf16>
    %1 = vector.shape_cast %0 : vector<1x16x16x4xbf16> to vector<16x16x4xbf16>
    %c0_3 = arith.constant 0 : index
    %c0_4 = arith.constant 0 : index
    %c1 = arith.constant 1 : index
    %c0_5 = arith.constant 0 : index
    %2 = vector.load %arg1[%c0_3, %c0_4, %c1, %c0_5] : memref<1x18x18x4xbf16, #tpu.memory_space<vmem>>, vector<1x16x16x4xbf16>
    %3 = vector.shape_cast %2 : vector<1x16x16x4xbf16> to vector<16x16x4xbf16>
    %c0_6 = arith.constant 0 : index
    %c0_7 = arith.constant 0 : index
    %c2 = arith.constant 2 : index
    %c0_8 = arith.constant 0 : index
    %4 = vector.load %arg1[%c0_6, %c0_7, %c2, %c0_8] : memref<1x18x18x4xbf16, #tpu.memory_space<vmem>>, vector<1x16x16x4xbf16>
    %5 = vector.shape_cast %4 : vector<1x16x16x4xbf16> to vector<16x16x4xbf16>
    %c0_9 = arith.constant 0 : index
    %c1_10 = arith.constant 1 : index
    %c0_11 = arith.constant 0 : index
    %c0_12 = arith.constant 0 : index
    %6 = vector.load %arg1[%c0_9, %c1_10, %c0_11, %c0_12] : memref<1x18x18x4xbf16, #tpu.memory_space<vmem>>, vector<1x16x16x4xbf16>
    %7 = vector.shape_cast %6 : vector<1x16x16x4xbf16> to vector<16x16x4xbf16>
    %c0_13 = arith.constant 0 : index
    %c1_14 = arith.constant 1 : index
    %c1_15 = arith.constant 1 : index
    %c0_16 = arith.constant 0 : index
    %8 = vector.load %arg1[%c0_13, %c1_14, %c1_15, %c0_16] : memref<1x18x18x4xbf16, #tpu.memory_space<vmem>>, vector<1x16x16x4xbf16>
    %9 = vector.shape_cast %8 : vector<1x16x16x4xbf16> to vector<16x16x4xbf16>
    %c0_17 = arith.constant 0 : index
    %c1_18 = arith.constant 1 : index
    %c2_19 = arith.constant 2 : index
    %c0_20 = arith.constant 0 : index
    %10 = vector.load %arg1[%c0_17, %c1_18, %c2_19, %c0_20] : memref<1x18x18x4xbf16, #tpu.memory_space<vmem>>, vector<1x16x16x4xbf16>
    %11 = vector.shape_cast %10 : vector<1x16x16x4xbf16> to vector<16x16x4xbf16>
    %c0_21 = arith.constant 0 : index
    %c2_22 = arith.constant 2 : index
    %c0_23 = arith.constant 0 : index
    %c0_24 = arith.constant 0 : index
    %12 = vector.load %arg1[%c0_21, %c2_22, %c0_23, %c0_24] : memref<1x18x18x4xbf16, #tpu.memory_space<vmem>>, vector<1x16x16x4xbf16>
    %13 = vector.shape_cast %12 : vector<1x16x16x4xbf16> to vector<16x16x4xbf16>
    %c0_25 = arith.constant 0 : index
    %c2_26 = arith.constant 2 : index
    %c1_27 = arith.constant 1 : index
    %c0_28 = arith.constant 0 : index
    %14 = vector.load %arg1[%c0_25, %c2_26, %c1_27, %c0_28] : memref<1x18x18x4xbf16, #tpu.memory_space<vmem>>, vector<1x16x16x4xbf16>
    %15 = vector.shape_cast %14 : vector<1x16x16x4xbf16> to vector<16x16x4xbf16>
    %c0_29 = arith.constant 0 : index
    %c2_30 = arith.constant 2 : index
    %c2_31 = arith.constant 2 : index
    %c0_32 = arith.constant 0 : index
    %16 = vector.load %arg1[%c0_29, %c2_30, %c2_31, %c0_32] : memref<1x18x18x4xbf16, #tpu.memory_space<vmem>>, vector<1x16x16x4xbf16>
    %17 = vector.shape_cast %16 : vector<1x16x16x4xbf16> to vector<16x16x4xbf16>
    %18 = tpu.concatenate %1, %3, %5, %7, %9, %11, %13, %15, %17 in 2 : vector<16x16x4xbf16>, vector<16x16x4xbf16>, vector<16x16x4xbf16>, vector<16x16x4xbf16>, vector<16x16x4xbf16>, vector<16x16x4xbf16>, vector<16x16x4xbf16>, vector<16x16x4xbf16>, vector<16x16x4xbf16> -> vector<16x16x36xbf16>
    %19 = vector.shape_cast %18 : vector<16x16x36xbf16> to vector<256x36xbf16>
    %c0_33 = arith.constant 0 : index
    %c0_34 = arith.constant 0 : index
    %20 = vector.load %arg2[%c0_33, %c0_34] : memref<36x32xbf16, #tpu.memory_space<vmem>>, vector<36x32xbf16>
    %cst = arith.constant dense<0.000000e+00> : vector<256x32xf32>
    %21 = tpu.matmul %19, %20, %cst {dimension_numbers = #tpu.dot_dimension_numbers<[1], [0], [0], [1], [0, 0, 1, 1], [], []>} : vector<256x36xbf16>, vector<36x32xbf16>, vector<256x32xf32> -> vector<256x32xf32>
    %c0_35 = arith.constant 0 : index
    %c0_36 = arith.constant 0 : index
    %22 = vector.load %arg3[%c0_35, %c0_36] : memref<1x32xf32, #tpu.memory_space<vmem>>, vector<1x32xf32>
    %23 = vector.broadcast %22 : vector<1x32xf32> to vector<256x32xf32>
    %24 = arith.mulf %21, %23 : vector<256x32xf32>
    %c0_37 = arith.constant 0 : index
    %c0_38 = arith.constant 0 : index
    %25 = vector.load %arg4[%c0_37, %c0_38] : memref<1x32xf32, #tpu.memory_space<vmem>>, vector<1x32xf32>
    %26 = vector.broadcast %25 : vector<1x32xf32> to vector<256x32xf32>
    %27 = arith.addf %24, %26 : vector<256x32xf32>
    %cst_39 = arith.constant 0.000000e+00 : f32
    %28 = vector.broadcast %cst_39 : f32 to vector<256x32xf32>
    %29 = arith.maximumf %27, %28 : vector<256x32xf32>
    %30 = vector.shape_cast %29 : vector<256x32xf32> to vector<1x256x32xf32>
    %c0_40 = arith.constant 0 : index
    %c0_41 = arith.constant 0 : index
    %c0_42 = arith.constant 0 : index
    %31 = vector.load %arg5[%c0_40, %c0_41, %c0_42] : memref<1x256x32xf32, #tpu.memory_space<vmem>>, vector<1x256x32xf32>
    tpu.vector_store %arg5[%c0_40, %c0_41, %c0_42], %30 {strides = array<i32>} : memref<1x256x32xf32, #tpu.memory_space<vmem>>, vector<1x256x32xf32>,
    return
  }
  func.func @transform_0(%arg0: i32) -> (i32, i32, i32, i32) {
    %c0_i32 = arith.constant 0 : i32
    %c0_i32_0 = arith.constant 0 : i32
    %c0_i32_1 = arith.constant 0 : i32
    %c0_i32_2 = arith.constant 0 : i32
    return %arg0, %c0_i32, %c0_i32_0, %c0_i32_1 : i32, i32, i32, i32
  }
  func.func @transform_1(%arg0: i32) -> (i32, i32) {
    %c0_i32 = arith.constant 0 : i32
    %c0_i32_0 = arith.constant 0 : i32
    %c0_i32_1 = arith.constant 0 : i32
    return %c0_i32, %c0_i32_0 : i32, i32
  }
  func.func @transform_2(%arg0: i32) -> (i32, i32) {
    %c0_i32 = arith.constant 0 : i32
    %c0_i32_0 = arith.constant 0 : i32
    %c0_i32_1 = arith.constant 0 : i32
    return %c0_i32, %c0_i32_0 : i32, i32
  }
  func.func @transform_3(%arg0: i32) -> (i32, i32) {
    %c0_i32 = arith.constant 0 : i32
    %c0_i32_0 = arith.constant 0 : i32
    %c0_i32_1 = arith.constant 0 : i32
    return %c0_i32, %c0_i32_0 : i32, i32
  }
  func.func @transform_4(%arg0: i32) -> (i32, i32, i32) {
    %c0_i32 = arith.constant 0 : i32
    %c0_i32_0 = arith.constant 0 : i32
    %c0_i32_1 = arith.constant 0 : i32
    return %arg0, %c0_i32, %c0_i32_0 : i32, i32, i32
  }
}

</mosaic_0001>

<llo_original>
// kernel: tile.18
$region0: #{tile.18}
  #allocation0 [shape = 's32[1]{0}', space=sflag, size = 0x4, scoped, tag = 'scoped memory for tile.18']
  %s0 = inlined_call_operand.vmem [shape: f32[8], index: 0, kind: input, shape index: {}]
  %s1 = inlined_call_operand.vmem [shape: f32[4,8], index: 1, kind: output, shape index: {}]
  // Predicated region
  $region2: #{tile.18} parent=0 // pred_check
    _
  $region3: #{tile.18} parent=0 // pred_check_branch
    %3 = sbr.rel (0) target = $region5
  $region4: #{tile.18} parent=0 // pred_region
    _
  $region5: #{tile.18} parent=0 // pred_fallthru
    _
  %v4 = vld [vmem:[%s0] ss:$0 sm:$0xff]
  %5 = vst [vmem:[%s1] sm:$0xf] %v4

// kernel: tile.19
$region0: #{tile.19}
  %s0 = inlined_call_operand.vmem [shape: f32[4,8], index: 0, kind: input, shape index: {}]
  %s1 = inlined_call_operand.vmem [shape: f32[1,32], index: 1, kind: output, shape index: {}]
  $region1: #{tile.19} parent=0
    #allocation0 [shape = 'u8[4096]{0}', space=vmem, size = 0x1000, scoped, tag = 'scoped mem for output reshape']
    #allocation1 [shape = 'u8[4096]{0}', space=vmem, size = 0x1000, scoped, tag = 'scoped mem for input reshape']
    %s3 = sshll.u32 1, 4
    %s4 = ssub.s32 %s3, 1
    %v5 = vld [vmem:[%s0] sm:%s4]
    %6 = vst [vmem:[#allocation1] sm:%s4] %v5
    %v7 = vld [vmem:[#allocation1] sm:$0x1]
    %vm8 = vcmask 64512
    %9 = vst.msk [vmem:[#allocation0] sm:$0x1] %vm8, %v7
    %s10 = scalar_lea.vmem [#allocation1], 3
    %v11 = vld [vmem:[%s10] sm:$0x1]
    %12 = vrot.lane.b32.xlu0 %v11, 24
    %v13 = vpop.permute.xlu0 %12
    %vm14 = vcmask 261312
    %15 = vst.msk [vmem:[#allocation0] sm:$0x1] %vm14, %v13
    %s16 = scalar_lea.vmem [#allocation1], 2
    %v17 = vld [vmem:[%s16] sm:$0x1]
    %18 = vrot.lane.b32.xlu0 %v17, 16
    %v19 = vpop.permute.xlu0 %18
    %vm20 = vcmask 195712
    %21 = vst.msk [vmem:[#allocation0] sm:$0x1] %vm20, %v19
    %s22 = scalar_lea.vmem [#allocation1], 1
    %v23 = vld [vmem:[%s22] sm:$0x1]
    %24 = vrot.lane.b32.xlu0 %v23, 8
    %v25 = vpop.permute.xlu0 %24
    %vm26 = vcmask 130112
    %27 = vst.msk [vmem:[#allocation0] sm:$0x1] %vm26, %v25
    %s29 = sshll.u32 1, 1
    %s30 = ssub.s32 %s29, 1
    %v32 = vld [vmem:[#allocation0] sm:%s30]
    %s33 = sshll.u32 1, 1
    %s34 = ssub.s32 %s33, 1
    %35 = vst [vmem:[%s1] sm:%s34] %v32

// kernel: unet_up_conv.2
$region0: #{unet_up_conv.2}
  #allocation0 [shape = 'u32[]', space=smem, size = 0x4, offset = 0x4, fixed_abs, tag = 'smem constant byte address 0x4 - core index']
  #allocation1 [shape = 'u32[144,128]{1,0:T(1,128)}', space=vmem, size = 0x12000, scoped, tag = 'internal scratch']
  %s0 = inlined_call_operand.vmem [shape: bf16[2,18,18,4], index: 0, kind: input, shape index: {}]
  %s1 = inlined_call_operand.vmem [shape: bf16[36,32], index: 1, kind: input, shape index: {}]
  %s2 = inlined_call_operand.vmem [shape: f32[2,1,32], index: 2, kind: output, shape index: {0}]
  %s3 = inlined_call_operand.vmem [shape: f32[2,1,32], index: 3, kind: output, shape index: {1}]
  %4 = xla_tuple %s2, %s3
  %s5 = sld [smem:[#allocation0]]
  $region49: #{unet_up_conv.2} parent=0
    _
  %s7 = ssub.s32 1, %s5
  %s8 = scalar_select 0, %s7, %s5
  loop: start=0, step=1, limit=4
  $region2: #{unet_up_conv.2} parent=0 // loop_pre_header
    _
  $region3: #{unet_up_conv.2} parent=0 // loop_header
    %s10 = sphi 0, %s14
    %p11 = scmp.ge.s32.totalorder %s10, 4
    %s20 = sphi 0, %s22
    %s23 = sphi 0, %s20
    %s24 = sphi 0, %s23
    %s40 = sphi 0, %s24
    %s44 = sphi 0, %s44
    %s46 = sphi 0, %s44
    %s47 = sphi 0, %s46
    %s61 = sphi 0, %s47
    %s67 = sphi 0, %s69
    %s70 = sphi 0, %s67
    %s71 = sphi 0, %s70
    %s87 = sphi 0, %s71
    %s93 = sphi 0, %s95
    %s96 = sphi 0, %s93
    %s97 = sphi 0, %s96
    %s113 = sphi 0, %s97
  $region4: #{unet_up_conv.2} parent=0 // loop_header_branch
    %13 = sbr.rel (%p11) target = $region8
  $region5: #{unet_up_conv.2} parent=0 // loop_body
    %s15 = ssub.s32 %s10, 1
    %s16 = ssub.s32 %s10, 2
    %s17 = sadd.s32 %s10, 1
    %s18 = ssub.s32 %s10, %s17
    %p19 = scmp.eq.s32.totalorder %s18, 0
    %s21 = sadd.s32 %s20, 1
    %s22 = scalar_select %p19, %s20, %s21
    %p25 = pneg %p19
    %p26 = scmp.eq.s32.totalorder %s10, 1
    %p27 = por %p25, %p26
    %p28 = scmp.ne.s32.totalorder %s20, %s23
    %p29 = scmp.eq.s32.totalorder %s10, 0
    %p30 = por %p28, %p29
    %p31 = scmp.ne.s32.totalorder %s20, %s23
    %p32 = scmp.eq.s32.totalorder %s15, 1
    %p33 = por %p31, %p32
    %p34 = scmp.ne.s32.totalorder %s23, %s24
    %p35 = scmp.eq.s32.totalorder %s15, 0
    %p36 = por %p34, %p35
    %p37 = scmp.ne.s32.totalorder %s23, %s24
    %p38 = scmp.eq.s32.totalorder %s16, 1
    %p39 = por %p37, %p38
    %p41 = scmp.ne.s32.totalorder %s24, %s40
    %p42 = scmp.eq.s32.totalorder %s16, 0
    %p43 = por %p41, %p42
    %s45 = sadd.s32 %s44, 1
    %p48 = scmp.eq.s32.totalorder %s10, 1
    %p49 = scmp.ne.s32.totalorder %s44, %s46
    %p50 = scmp.eq.s32.totalorder %s10, 0
    %p51 = por %p49, %p50
    %p52 = scmp.ne.s32.totalorder %s44, %s46
    %p53 = scmp.eq.s32.totalorder %s15, 1
    %p54 = por %p52, %p53
    %p55 = scmp.ne.s32.totalorder %s46, %s47
    %p56 = scmp.eq.s32.totalorder %s15, 0
    %p57 = por %p55, %p56
    %p58 = scmp.ne.s32.totalorder %s46, %s47
    %p59 = scmp.eq.s32.totalorder %s16, 1
    %p60 = por %p58, %p59
    %p62 = scmp.ne.s32.totalorder %s47, %s61
    %p63 = scmp.eq.s32.totalorder %s16, 0
    %p64 = por %p62, %p63
    %s65 = ssub.s32 %s10, %s17
    %p66 = scmp.eq.s32.totalorder %s65, 0
    %s68 = sadd.s32 %s67, 1
    %s69 = scalar_select %p66, %s67, %s68
    %p72 = pneg %p66
    %p73 = scmp.eq.s32.totalorder %s10, 1
    %p74 = por %p72, %p73
    %p75 = scmp.ne.s32.totalorder %s67, %s70
    %p76 = scmp.eq.s32.totalorder %s10, 0
    %p77 = por %p75, %p76
    %p78 = scmp.ne.s32.totalorder %s67, %s70
    %p79 = scmp.eq.s32.totalorder %s15, 1
    %p80 = por %p78, %p79
    %p81 = scmp.ne.s32.totalorder %s70, %s71
    %p82 = scmp.eq.s32.totalorder %s15, 0
    %p83 = por %p81, %p82
    %p84 = scmp.ne.s32.totalorder %s70, %s71
    %p85 = scmp.eq.s32.totalorder %s16, 1
    %p86 = por %p84, %p85
    %p88 = scmp.ne.s32.totalorder %s71, %s87
    %p89 = scmp.eq.s32.totalorder %s16, 0
    %p90 = por %p88, %p89
    %s91 = ssub.s32 %s10, %s17
    %p92 = scmp.eq.s32.totalorder %s91, 0
    %s94 = sadd.s32 %s93, 1
    %s95 = scalar_select %p92, %s93, %s94
    %p98 = pneg %p92
    %p99 = scmp.eq.s32.totalorder %s10, 1
    %p100 = por %p98, %p99
    %p101 = scmp.ne.s32.totalorder %s93, %s96
    %p102 = scmp.eq.s32.totalorder %s10, 0
    %p103 = por %p101, %p102
    %p104 = scmp.ne.s32.totalorder %s93, %s96
    %p105 = scmp.eq.s32.totalorder %s15, 1
    %p106 = por %p104, %p105
    %p107 = scmp.ne.s32.totalorder %s96, %s97
    %p108 = scmp.eq.s32.totalorder %s15, 0
    %p109 = por %p107, %p108
    %p110 = scmp.ne.s32.totalorder %s96, %s97
    %p111 = scmp.eq.s32.totalorder %s16, 1
    %p112 = por %p110, %p111
    %p114 = scmp.ne.s32.totalorder %s97, %s113
    %p115 = scmp.eq.s32.totalorder %s16, 0
    %p116 = por %p114, %p115
    %p117 = scmp.le.s32.totalorder 1, %s10
    %p118 = scmp.lt.s32.totalorder %s10, 3
    %p119 = pnand %p117, %p118
    %p120 = pneg %p119
    // Predicated region
    $region9: #{unet_up_conv.2} parent=5 // pred_check
      _
    $region10: #{unet_up_conv.2} parent=5 // pred_check_branch
      %122 = sbr.rel (%p119) target = $region12
    $region11: #{unet_up_conv.2} parent=5 // pred_region
      %s123 = ssub.s32 %s10, 1
      // Predicated region
      $region13: #{unet_up_conv.2} parent=11 // pred_check
        %p124 = pneg %p57
      $region14: #{unet_up_conv.2} parent=11 // pred_check_branch
        %126 = sbr.rel (%p124) target = $region16
      $region15: #{unet_up_conv.2} parent=11 // pred_region
        _
      $region16: #{unet_up_conv.2} parent=11 // pred_fallthru
        _
    $region12: #{unet_up_conv.2} parent=5 // pred_fallthru
      _
    %p127 = scmp.lt.s32.totalorder %s10, 2
    // Predicated region
    $region17: #{unet_up_conv.2} parent=5 // pred_check
      %p128 = pneg %p127
    $region18: #{unet_up_conv.2} parent=5 // pred_check_branch
      %130 = sbr.rel (%p128) target = $region20
    $region19: #{unet_up_conv.2} parent=5 // pred_region
      // Predicated region
      $region21: #{unet_up_conv.2} parent=19 // pred_check
        %p131 = pneg %p30
      $region22: #{unet_up_conv.2} parent=19 // pred_check_branch
        %133 = sbr.rel (%p131) target = $region24
      $region23: #{unet_up_conv.2} parent=19 // pred_region
        %p134 = scmp.lt.s32.totalorder %s10, 1
        %s135 = scalar_select %p134, %s10, 1
        %s136 = smul.addr %s135, 54
        %s137 = smul.addr %s136, 4
        %s138 = scalar_lea.vmem %s0, %s137
      $region24: #{unet_up_conv.2} parent=19 // pred_fallthru
        _
    $region20: #{unet_up_conv.2} parent=5 // pred_fallthru
      _
    %p139 = scmp.le.s32.totalorder 1, %s10
    %p140 = scmp.lt.s32.totalorder %s10, 3
    %p141 = pnand %p139, %p140
    %p142 = pneg %p141
    // Predicated region
    $region25: #{unet_up_conv.2} parent=5 // pred_check
      _
    $region26: #{unet_up_conv.2} parent=5 // pred_check_branch
      %144 = sbr.rel (%p141) target = $region28
    $region27: #{unet_up_conv.2} parent=5 // pred_region
      %s145 = ssub.s32 %s10, 1
      %p146 = scmp.lt.s32.totalorder %s15, 1
      %s147 = scalar_select %p146, %s15, 1
      %s148 = smul.addr %s147, 54
      %s149 = smul.addr %s148, 4
      %s150 = scalar_lea.vmem %s0, %s149
      %p151 = pneg %p36
      %p152 = pneg %p33
      %p153 = pneg %p57
      %p154 = pneg %p54
      %p155 = pneg %p83
      %p156 = pneg %p80
      %p157 = scmp.lt.s32.totalorder %s15, 1
      %s158 = scalar_select %p157, %s15, 1
      %s159 = scalar_lea.vmem %s2, %s158
      %p160 = pneg %p109
      %p161 = pneg %p106
      %p162 = scmp.lt.s32.totalorder %s15, 1
      %s163 = scalar_select %p162, %s15, 1
      %s164 = scalar_lea.vmem %s3, %s163
      %p165 = scmp.lt.s32.totalorder %s15, 1
      %s166 = scalar_select %p165, %s15, 1
      %s167 = smul.addr %s166, 54
      %s168 = smul.addr %s167, 4
      %s169 = scalar_lea.vmem %s0, %s168
      %p170 = scmp.lt.s32.totalorder %s15, 1
      %s171 = scalar_select %p170, %s15, 1
      %s172 = scalar_lea.vmem %s2, %s171
      %p173 = scmp.lt.s32.totalorder %s15, 1
      %s174 = scalar_select %p173, %s15, 1
      %s175 = scalar_lea.vmem %s3, %s174
      %v177 = vld [vmem:[%s169] sm:$0xf]
      %v178 = vld [vmem:[%s169 + $0x4] sm:$0xf]
      %v179 = vld [vmem:[%s169 + $0xc] sm:$0xf]
      %v180 = vld [vmem:[%s169 + $0x10] sm:$0xf]
      %v181 = vld [vmem:[%s169 + $0x18] sm:$0xf]
      %v182 = vld [vmem:[%s169 + $0x1c] sm:$0xf]
      %v183 = vld [vmem:[%s169 + $0x24] sm:$0xf]
      %v184 = vld [vmem:[%s169 + $0x28] sm:$0xf]
      %v185 = vld [vmem:[%s169 + $0x30] sm:$0xf]
      %v186 = vld [vmem:[%s169 + $0x34] sm:$0xf]
      %v187 = vld [vmem:[%s169 + $0x3c] sm:$0xf]
      %v188 = vld [vmem:[%s169 + $0x40] sm:$0xf]
      %v189 = vld [vmem:[%s169 + $0x48] sm:$0xf]
      %v190 = vld [vmem:[%s169 + $0x4c] sm:$0xf]
      %v191 = vld [vmem:[%s169 + $0x54] sm:$0xf]
      %v192 = vld [vmem:[%s169 + $0x58] sm:$0xf]
      %v193 = vld [vmem:[%s169 + $0x60] sm:$0xf]
      %v194 = vld [vmem:[%s169 + $0x64] sm:$0xf]
      %v195 = vld [vmem:[%s169 + $0x6c] sm:$0xf]
      %v196 = vld [vmem:[%s169 + $0x70] sm:$0xf]
      %v197 = vld [vmem:[%s169 + $0x78] sm:$0xf]
      %v198 = vld [vmem:[%s169 + $0x7c] sm:$0xf]
      %v199 = vld [vmem:[%s169 + $0x84] sm:$0xf]
      %v200 = vld [vmem:[%s169 + $0x88] sm:$0xf]
      %v201 = vld [vmem:[%s169 + $0x90] sm:$0xf]
      %v202 = vld [vmem:[%s169 + $0x94] sm:$0xf]
      %v203 = vld [vmem:[%s169 + $0x9c] sm:$0xf]
      %v204 = vld [vmem:[%s169 + $0xa0] sm:$0xf]
      %v205 = vld [vmem:[%s169 + $0xa8] sm:$0xf]
      %v206 = vld [vmem:[%s169 + $0xac] sm:$0xf]
      %v207 = vld [vmem:[%s169 + $0xb4] sm:$0xf]
      %v208 = vld [vmem:[%s169 + $0xb8] sm:$0xf]
      %v209 = vld [vmem:[%s169 + $0x8] sm:$0x1]
      %v210 = vld [vmem:[%s169 + $0x14] sm:$0x1]
      %v211 = vld [vmem:[%s169 + $0x20] sm:$0x1]
      %v212 = vld [vmem:[%s169 + $0x2c] sm:$0x1]
      %v213 = vld [vmem:[%s169 + $0x38] sm:$0x1]
      %v214 = vld [vmem:[%s169 + $0x44] sm:$0x1]
      %v215 = vld [vmem:[%s169 + $0x50] sm:$0x1]
      %v216 = vld [vmem:[%s169 + $0x5c] sm:$0x1]
      %v217 = vld [vmem:[%s169 + $0x68] sm:$0x1]
      %v218 = vld [vmem:[%s169 + $0x74] sm:$0x1]
      %v219 = vld [vmem:[%s169 + $0x80] sm:$0x1]
      %v220 = vld [vmem:[%s169 + $0x8c] sm:$0x1]
      %v221 = vld [vmem:[%s169 + $0x98] sm:$0x1]
      %v222 = vld [vmem:[%s169 + $0xa4] sm:$0x1]
      %v223 = vld [vmem:[%s169 + $0xb0] sm:$0x1]
      %v224 = vld [vmem:[%s169 + $0xbc] sm:$0x1]
      %v225 = vld [vmem:[%s169] sm:$0xe]
      %v226 = vld [vmem:[%s169 + $0xc] sm:$0xe]
      %v227 = vld [vmem:[%s169 + $0x18] sm:$0xe]
      %v228 = vld [vmem:[%s169 + $0x24] sm:$0xe]
      %v229 = vld [vmem:[%s169 + $0x30] sm:$0xe]
      %v230 = vld [vmem:[%s169 + $0x3c] sm:$0xe]
      %v231 = vld [vmem:[%s169 + $0x48] sm:$0xe]
      %v232 = vld [vmem:[%s169 + $0x54] sm:$0xe]
      %v233 = vld [vmem:[%s169 + $0x60] sm:$0xe]
      %v234 = vld [vmem:[%s169 + $0x6c] sm:$0xe]
      %v235 = vld [vmem:[%s169 + $0x78] sm:$0xe]
      %v236 = vld [vmem:[%s169 + $0x84] sm:$0xe]
      %v237 = vld [vmem:[%s169 + $0x90] sm:$0xe]
      %v238 = vld [vmem:[%s169 + $0x9c] sm:$0xe]
      %v239 = vld [vmem:[%s169 + $0xa8] sm:$0xe]
      %v240 = vld [vmem:[%s169 + $0xb4] sm:$0xe]
      %s241 = scalar_lea.vmem %s169, 12
      %v242 = vld [vmem:[%s241] sm:$0xf]
      %v243 = vld [vmem:[%s241 + $0x4] sm:$0xf]
      %v244 = vld [vmem:[%s241 + $0xc] sm:$0xf]
      %v245 = vld [vmem:[%s241 + $0x10] sm:$0xf]
      %v246 = vld [vmem:[%s241 + $0x18] sm:$0xf]
      %v247 = vld [vmem:[%s241 + $0x1c] sm:$0xf]
      %v248 = vld [vmem:[%s241 + $0x24] sm:$0xf]
      %v249 = vld [vmem:[%s241 + $0x28] sm:$0xf]
      %v250 = vld [vmem:[%s241 + $0x30] sm:$0xf]
      %v251 = vld [vmem:[%s241 + $0x34] sm:$0xf]
      %v252 = vld [vmem:[%s241 + $0x3c] sm:$0xf]
      %v253 = vld [vmem:[%s241 + $0x40] sm:$0xf]
      %v254 = vld [vmem:[%s241 + $0x48] sm:$0xf]
      %v255 = vld [vmem:[%s241 + $0x4c] sm:$0xf]
      %v256 = vld [vmem:[%s241 + $0x54] sm:$0xf]
      %v257 = vld [vmem:[%s241 + $0x58] sm:$0xf]
      %v258 = vld [vmem:[%s241 + $0x60] sm:$0xf]
      %v259 = vld [vmem:[%s241 + $0x64] sm:$0xf]
      %v260 = vld [vmem:[%s241 + $0x6c] sm:$0xf]
      %v261 = vld [vmem:[%s241 + $0x70] sm:$0xf]
      %v262 = vld [vmem:[%s241 + $0x78] sm:$0xf]
      %v263 = vld [vmem:[%s241 + $0x7c] sm:$0xf]
      %v264 = vld [vmem:[%s241 + $0x84] sm:$0xf]
      %v265 = vld [vmem:[%s241 + $0x88] sm:$0xf]
      %v266 = vld [vmem:[%s241 + $0x90] sm:$0xf]
      %v267 = vld [vmem:[%s241 + $0x94] sm:$0xf]
      %v268 = vld [vmem:[%s241 + $0x9c] sm:$0xf]
      %v269 = vld [vmem:[%s241 + $0xa0] sm:$0xf]
      %v270 = vld [vmem:[%s241 + $0xa8] sm:$0xf]
      %v271 = vld [vmem:[%s241 + $0xac] sm:$0xf]
      %v272 = vld [vmem:[%s241 + $0xb4] sm:$0xf]
      %v273 = vld [vmem:[%s241 + $0xb8] sm:$0xf]
      %v274 = vld [vmem:[%s241 + $0x8] sm:$0x1]
      %v275 = vld [vmem:[%s241 + $0x14] sm:$0x1]
      %v276 = vld [vmem:[%s241 + $0x20] sm:$0x1]
      %v277 = vld [vmem:[%s241 + $0x2c] sm:$0x1]
      %v278 = vld [vmem:[%s241 + $0x38] sm:$0x1]
      %v279 = vld [vmem:[%s241 + $0x44] sm:$0x1]
      %v280 = vld [vmem:[%s241 + $0x50] sm:$0x1]
      %v281 = vld [vmem:[%s241 + $0x5c] sm:$0x1]
      %v282 = vld [vmem:[%s241 + $0x68] sm:$0x1]
      %v283 = vld [vmem:[%s241 + $0x74] sm:$0x1]
      %v284 = vld [vmem:[%s241 + $0x80] sm:$0x1]
      %v285 = vld [vmem:[%s241 + $0x8c] sm:$0x1]
      %v286 = vld [vmem:[%s241 + $0x98] sm:$0x1]
      %v287 = vld [vmem:[%s241 + $0xa4] sm:$0x1]
      %v288 = vld [vmem:[%s241 + $0xb0] sm:$0x1]
      %v289 = vld [vmem:[%s241 + $0xbc] sm:$0x1]
      %v290 = vld [vmem:[%s241] sm:$0xe]
      %v291 = vld [vmem:[%s241 + $0xc] sm:$0xe]
      %v292 = vld [vmem:[%s241 + $0x18] sm:$0xe]
      %v293 = vld [vmem:[%s241 + $0x24] sm:$0xe]
      %v294 = vld [vmem:[%s241 + $0x30] sm:$0xe]
      %v295 = vld [vmem:[%s241 + $0x3c] sm:$0xe]
      %v296 = vld [vmem:[%s241 + $0x48] sm:$0xe]
      %v297 = vld [vmem:[%s241 + $0x54] sm:$0xe]
      %v298 = vld [vmem:[%s241 + $0x60] sm:$0xe]
      %v299 = vld [vmem:[%s241 + $0x6c] sm:$0xe]
      %v300 = vld [vmem:[%s241 + $0x78] sm:$0xe]
      %v301 = vld [vmem:[%s241 + $0x84] sm:$0xe]
      %v302 = vld [vmem:[%s241 + $0x90] sm:$0xe]
      %v303 = vld [vmem:[%s241 + $0x9c] sm:$0xe]
      %v304 = vld [vmem:[%s241 + $0xa8] sm:$0xe]
      %v305 = vld [vmem:[%s241 + $0xb4] sm:$0xe]
      %s306 = scalar_lea.vmem %s169, 24
      %v307 = vld [vmem:[%s306] sm:$0xf]
      %v308 = vld [vmem:[%s306 + $0x4] sm:$0xf]
      %v309 = vld [vmem:[%s306 + $0xc] sm:$0xf]
      %v310 = vld [vmem:[%s306 + $0x10] sm:$0xf]
      %v311 = vld [vmem:[%s306 + $0x18] sm:$0xf]
      %v312 = vld [vmem:[%s306 + $0x1c] sm:$0xf]
      %v313 = vld [vmem:[%s306 + $0x24] sm:$0xf]
      %v314 = vld [vmem:[%s306 + $0x28] sm:$0xf]
      %v315 = vld [vmem:[%s306 + $0x30] sm:$0xf]
      %v316 = vld [vmem:[%s306 + $0x34] sm:$0xf]
      %v317 = vld [vmem:[%s306 + $0x3c] sm:$0xf]
      %v318 = vld [vmem:[%s306 + $0x40] sm:$0xf]
      %v319 = vld [vmem:[%s306 + $0x48] sm:$0xf]
      %v320 = vld [vmem:[%s306 + $0x4c] sm:$0xf]
      %v321 = vld [vmem:[%s306 + $0x54] sm:$0xf]
      %v322 = vld [vmem:[%s306 + $0x58] sm:$0xf]
      %v323 = vld [vmem:[%s306 + $0x60] sm:$0xf]
      %v324 = vld [vmem:[%s306 + $0x64] sm:$0xf]
      %v325 = vld [vmem:[%s306 + $0x6c] sm:$0xf]
      %v326 = vld [vmem:[%s306 + $0x70] sm:$0xf]
      %v327 = vld [vmem:[%s306 + $0x78] sm:$0xf]
      %v328 = vld [vmem:[%s306 + $0x7c] sm:$0xf]
      %v329 = vld [vmem:[%s306 + $0x84] sm:$0xf]
      %v330 = vld [vmem:[%s306 + $0x88] sm:$0xf]
      %v331 = vld [vmem:[%s306 + $0x90] sm:$0xf]
      %v332 = vld [vmem:[%s306 + $0x94] sm:$0xf]
      %v333 = vld [vmem:[%s306 + $0x9c] sm:$0xf]
      %v334 = vld [vmem:[%s306 + $0xa0] sm:$0xf]
      %v335 = vld [vmem:[%s306 + $0xa8] sm:$0xf]
      %v336 = vld [vmem:[%s306 + $0xac] sm:$0xf]
      %v337 = vld [vmem:[%s306 + $0xb4] sm:$0xf]
      %v338 = vld [vmem:[%s306 + $0xb8] sm:$0xf]
      %v339 = vld [vmem:[%s306 + $0x8] sm:$0x1]
      %v340 = vld [vmem:[%s306 + $0x14] sm:$0x1]
      %v341 = vld [vmem:[%s306 + $0x20] sm:$0x1]
      %v342 = vld [vmem:[%s306 + $0x2c] sm:$0x1]
      %v343 = vld [vmem:[%s306 + $0x38] sm:$0x1]
      %v344 = vld [vmem:[%s306 + $0x44] sm:$0x1]
      %v345 = vld [vmem:[%s306 + $0x50] sm:$0x1]
      %v346 = vld [vmem:[%s306 + $0x5c] sm:$0x1]
      %v347 = vld [vmem:[%s306 + $0x68] sm:$0x1]
      %v348 = vld [vmem:[%s306 + $0x74] sm:$0x1]
      %v349 = vld [vmem:[%s306 + $0x80] sm:$0x1]
      %v350 = vld [vmem:[%s306 + $0x8c] sm:$0x1]
      %v351 = vld [vmem:[%s306 + $0x98] sm:$0x1]
      %v352 = vld [vmem:[%s306 + $0xa4] sm:$0x1]
      %v353 = vld [vmem:[%s306 + $0xb0] sm:$0x1]
      %v354 = vld [vmem:[%s306 + $0xbc] sm:$0x1]
      %v355 = vld [vmem:[%s306] sm:$0xe]
      %v356 = vld [vmem:[%s306 + $0xc] sm:$0xe]
      %v357 = vld [vmem:[%s306 + $0x18] sm:$0xe]
      %v358 = vld [vmem:[%s306 + $0x24] sm:$0xe]
      %v359 = vld [vmem:[%s306 + $0x30] sm:$0xe]
      %v360 = vld [vmem:[%s306 + $0x3c] sm:$0xe]
      %v361 = vld [vmem:[%s306 + $0x48] sm:$0xe]
      %v362 = vld [vmem:[%s306 + $0x54] sm:$0xe]
      %v363 = vld [vmem:[%s306 + $0x60] sm:$0xe]
      %v364 = vld [vmem:[%s306 + $0x6c] sm:$0xe]
      %v365 = vld [vmem:[%s306 + $0x78] sm:$0xe]
      %v366 = vld [vmem:[%s306 + $0x84] sm:$0xe]
      %v367 = vld [vmem:[%s306 + $0x90] sm:$0xe]
      %v368 = vld [vmem:[%s306 + $0x9c] sm:$0xe]
      %v369 = vld [vmem:[%s306 + $0xa8] sm:$0xe]
      %v370 = vld [vmem:[%s306 + $0xb4] sm:$0xe]
      %v403 = vunpack.c.l.b16 %v177
      %v404 = vunpack.c.l.b16 %v178
      %v405 = vunpack.c.l.b16 %v179
      %v406 = vunpack.c.l.b16 %v180
      %v407 = vunpack.c.l.b16 %v181
      %v408 = vunpack.c.l.b16 %v182
      %v409 = vunpack.c.l.b16 %v183
      %v410 = vunpack.c.l.b16 %v184
      %v411 = vunpack.c.l.b16 %v185
      %v412 = vunpack.c.l.b16 %v186
      %v413 = vunpack.c.l.b16 %v187
      %v414 = vunpack.c.l.b16 %v188
      %v415 = vunpack.c.l.b16 %v189
      %v416 = vunpack.c.l.b16 %v190
      %v417 = vunpack.c.l.b16 %v191
      %v418 = vunpack.c.l.b16 %v192
      %v419 = vunpack.c.l.b16 %v193
      %v420 = vunpack.c.l.b16 %v194
      %v421 = vunpack.c.l.b16 %v195
      %v422 = vunpack.c.l.b16 %v196
      %v423 = vunpack.c.l.b16 %v197
      %v424 = vunpack.c.l.b16 %v198
      %v425 = vunpack.c.l.b16 %v199
      %v426 = vunpack.c.l.b16 %v200
      %v427 = vunpack.c.l.b16 %v201
      %v428 = vunpack.c.l.b16 %v202
      %v429 = vunpack.c.l.b16 %v203
      %v430 = vunpack.c.l.b16 %v204
      %v431 = vunpack.c.l.b16 %v205
      %v432 = vunpack.c.l.b16 %v206
      %v433 = vunpack.c.l.b16 %v207
      %v434 = vunpack.c.l.b16 %v208
      %v435 = vpack.c.b16 %v404, %v403
      %v436 = vpack.c.b16 %v406, %v405
      %v437 = vpack.c.b16 %v408, %v407
      %v438 = vpack.c.b16 %v410, %v409
      %v439 = vpack.c.b16 %v412, %v411
      %v440 = vpack.c.b16 %v414, %v413
      %v441 = vpack.c.b16 %v416, %v415
      %v442 = vpack.c.b16 %v418, %v417
      %v443 = vpack.c.b16 %v420, %v419
      %v444 = vpack.c.b16 %v422, %v421
      %v445 = vpack.c.b16 %v424, %v423
      %v446 = vpack.c.b16 %v426, %v425
      %v447 = vpack.c.b16 %v428, %v427
      %v448 = vpack.c.b16 %v430, %v429
      %v449 = vpack.c.b16 %v432, %v431
      %v450 = vpack.c.b16 %v434, %v433
      %v467 = vunpack.c.l.b16 %v209
      %v468 = vunpack.c.l.b16 %v210
      %v469 = vunpack.c.l.b16 %v211
      %v470 = vunpack.c.l.b16 %v212
      %v471 = vunpack.c.l.b16 %v213
      %v472 = vunpack.c.l.b16 %v214
      %v473 = vunpack.c.l.b16 %v215
      %v474 = vunpack.c.l.b16 %v216
      %v475 = vunpack.c.l.b16 %v217
      %v476 = vunpack.c.l.b16 %v218
      %v477 = vunpack.c.l.b16 %v219
      %v478 = vunpack.c.l.b16 %v220
      %v479 = vunpack.c.l.b16 %v221
      %v480 = vunpack.c.l.b16 %v222
      %v481 = vunpack.c.l.b16 %v223
      %v482 = vunpack.c.l.b16 %v224
      %v483 = vpack.c.b16 %v467, %v467
      %v484 = vpack.c.b16 %v468, %v468
      %v485 = vpack.c.b16 %v469, %v469
      %v486 = vpack.c.b16 %v470, %v470
      %v487 = vpack.c.b16 %v471, %v471
      %v488 = vpack.c.b16 %v472, %v472
      %v489 = vpack.c.b16 %v473, %v473
      %v490 = vpack.c.b16 %v474, %v474
      %v491 = vpack.c.b16 %v475, %v475
      %v492 = vpack.c.b16 %v476, %v476
      %v493 = vpack.c.b16 %v477, %v477
      %v494 = vpack.c.b16 %v478, %v478
      %v495 = vpack.c.b16 %v479, %v479
      %v496 = vpack.c.b16 %v480, %v480
      %v497 = vpack.c.b16 %v481, %v481
      %v498 = vpack.c.b16 %v482, %v482
      %vm499 = vsmask.f32 7424
      %v501 = vshrl.u32 %v435, 16
      %v503 = vshll.u32 %v435, 16
      %v505 = vrot.slane %v503, 1
      %v506 = vor.u32 %v501, %v505
      %v508 = vshll.u32 %v483, 16
      %v510 = vrot.slane %v508, 1
      %v511 = vsel %vm499, %v506, %v510
      %v513 = vshrl.u32 %v436, 16
      %v515 = vshll.u32 %v436, 16
      %v517 = vrot.slane %v515, 1
      %v518 = vor.u32 %v513, %v517
      %v520 = vshll.u32 %v484, 16
      %v522 = vrot.slane %v520, 1
      %v523 = vsel %vm499, %v518, %v522
      %v525 = vshrl.u32 %v437, 16
      %v527 = vshll.u32 %v437, 16
      %v529 = vrot.slane %v527, 1
      %v530 = vor.u32 %v525, %v529
      %v532 = vshll.u32 %v485, 16
      %v534 = vrot.slane %v532, 1
      %v535 = vsel %vm499, %v530, %v534
      %v537 = vshrl.u32 %v438, 16
      %v539 = vshll.u32 %v438, 16
      %v541 = vrot.slane %v539, 1
      %v542 = vor.u32 %v537, %v541
      %v544 = vshll.u32 %v486, 16
      %v546 = vrot.slane %v544, 1
      %v547 = vsel %vm499, %v542, %v546
      %v549 = vshrl.u32 %v439, 16
      %v551 = vshll.u32 %v439, 16
      %v553 = vrot.slane %v551, 1
      %v554 = vor.u32 %v549, %v553
      %v556 = vshll.u32 %v487, 16
      %v558 = vrot.slane %v556, 1
      %v559 = vsel %vm499, %v554, %v558
      %v561 = vshrl.u32 %v440, 16
      %v563 = vshll.u32 %v440, 16
      %v565 = vrot.slane %v563, 1
      %v566 = vor.u32 %v561, %v565
      %v568 = vshll.u32 %v488, 16
      %v570 = vrot.slane %v568, 1
      %v571 = vsel %vm499, %v566, %v570
      %v573 = vshrl.u32 %v441, 16
      %v575 = vshll.u32 %v441, 16
      %v577 = vrot.slane %v575, 1
      %v578 = vor.u32 %v573, %v577
      %v580 = vshll.u32 %v489, 16
      %v582 = vrot.slane %v580, 1
      %v583 = vsel %vm499, %v578, %v582
      %v585 = vshrl.u32 %v442, 16
      %v587 = vshll.u32 %v442, 16
      %v589 = vrot.slane %v587, 1
      %v590 = vor.u32 %v585, %v589
      %v592 = vshll.u32 %v490, 16
      %v594 = vrot.slane %v592, 1
      %v595 = vsel %vm499, %v590, %v594
      %v597 = vshrl.u32 %v443, 16
      %v599 = vshll.u32 %v443, 16
      %v601 = vrot.slane %v599, 1
      %v602 = vor.u32 %v597, %v601
      %v604 = vshll.u32 %v491, 16
      %v606 = vrot.slane %v604, 1
      %v607 = vsel %vm499, %v602, %v606
      %v609 = vshrl.u32 %v444, 16
      %v611 = vshll.u32 %v444, 16
      %v613 = vrot.slane %v611, 1
      %v614 = vor.u32 %v609, %v613
      %v616 = vshll.u32 %v492, 16
      %v618 = vrot.slane %v616, 1
      %v619 = vsel %vm499, %v614, %v618
      %v621 = vshrl.u32 %v445, 16
      %v623 = vshll.u32 %v445, 16
      %v625 = vrot.slane %v623, 1
      %v626 = vor.u32 %v621, %v625
      %v628 = vshll.u32 %v493, 16
      %v630 = vrot.slane %v628, 1
      %v631 = vsel %vm499, %v626, %v630
      %v633 = vshrl.u32 %v446, 16
      %v635 = vshll.u32 %v446, 16
      %v637 = vrot.slane %v635, 1
      %v638 = vor.u32 %v633, %v637
      %v640 = vshll.u32 %v494, 16
      %v642 = vrot.slane %v640, 1
      %v643 = vsel %vm499, %v638, %v642
      %v645 = vshrl.u32 %v447, 16
      %v647 = vshll.u32 %v447, 16
      %v649 = vrot.slane %v647, 1
      %v650 = vor.u32 %v645, %v649
      %v652 = vshll.u32 %v495, 16
      %v654 = vrot.slane %v652, 1
      %v655 = vsel %vm499, %v650, %v654
      %v657 = vshrl.u32 %v448, 16
      %v659 = vshll.u32 %v448, 16
      %v661 = vrot.slane %v659, 1
      %v662 = vor.u32 %v657, %v661
      %v664 = vshll.u32 %v496, 16
      %v666 = vrot.slane %v664, 1
      %v667 = vsel %vm499, %v662, %v666
      %v669 = vshrl.u32 %v449, 16
      %v671 = vshll.u32 %v449, 16
      %v673 = vrot.slane %v671, 1
      %v674 = vor.u32 %v669, %v673
      %v676 = vshll.u32 %v497, 16
      %v678 = vrot.slane %v676, 1
      %v679 = vsel %vm499, %v674, %v678
      %v681 = vshrl.u32 %v450, 16
      %v683 = vshll.u32 %v450, 16
      %v685 = vrot.slane %v683, 1
      %v686 = vor.u32 %v681, %v685
      %v688 = vshll.u32 %v498, 16
      %v690 = vrot.slane %v688, 1
      %v691 = vsel %vm499, %v686, %v690
      %692 = vrot.lane.b32.xlu0 %v511, 4
      %v693 = vpop.permute.xlu0 %692
      %694 = vrot.lane.b32.xlu0 %v523, 4
      %v695 = vpop.permute.xlu0 %694
      %696 = vrot.lane.b32.xlu0 %v535, 4
      %v697 = vpop.permute.xlu0 %696
      %698 = vrot.lane.b32.xlu0 %v547, 4
      %v699 = vpop.permute.xlu0 %698
      %700 = vrot.lane.b32.xlu0 %v559, 4
      %v701 = vpop.permute.xlu0 %700
      %702 = vrot.lane.b32.xlu0 %v571, 4
      %v703 = vpop.permute.xlu0 %702
      %704 = vrot.lane.b32.xlu0 %v583, 4
      %v705 = vpop.permute.xlu0 %704
      %706 = vrot.lane.b32.xlu0 %v595, 4
      %v707 = vpop.permute.xlu0 %706
      %708 = vrot.lane.b32.xlu0 %v607, 4
      %v709 = vpop.permute.xlu0 %708
      %710 = vrot.lane.b32.xlu0 %v619, 4
      %v711 = vpop.permute.xlu0 %710
      %712 = vrot.lane.b32.xlu0 %v631, 4
      %v713 = vpop.permute.xlu0 %712
      %714 = vrot.lane.b32.xlu0 %v643, 4
      %v715 = vpop.permute.xlu0 %714
      %716 = vrot.lane.b32.xlu0 %v655, 4
      %v717 = vpop.permute.xlu0 %716
      %718 = vrot.lane.b32.xlu0 %v667, 4
      %v719 = vpop.permute.xlu0 %718
      %720 = vrot.lane.b32.xlu0 %v679, 4
      %v721 = vpop.permute.xlu0 %720
      %722 = vrot.lane.b32.xlu0 %v691, 4
      %v723 = vpop.permute.xlu0 %722
      %v740 = vunpack.c.l.b16 %v225
      %v741 = vunpack.c.l.b16 %v226
      %v742 = vunpack.c.l.b16 %v227
      %v743 = vunpack.c.l.b16 %v228
      %v744 = vunpack.c.l.b16 %v229
      %v745 = vunpack.c.l.b16 %v230
      %v746 = vunpack.c.l.b16 %v231
      %v747 = vunpack.c.l.b16 %v232
      %v748 = vunpack.c.l.b16 %v233
      %v749 = vunpack.c.l.b16 %v234
      %v750 = vunpack.c.l.b16 %v235
      %v751 = vunpack.c.l.b16 %v236
      %v752 = vunpack.c.l.b16 %v237
      %v753 = vunpack.c.l.b16 %v238
      %v754 = vunpack.c.l.b16 %v239
      %v755 = vunpack.c.l.b16 %v240
      %v756 = vpack.c.b16 %v404, %v740
      %v757 = vpack.c.b16 %v406, %v741
      %v758 = vpack.c.b16 %v408, %v742
      %v759 = vpack.c.b16 %v410, %v743
      %v760 = vpack.c.b16 %v412, %v744
      %v761 = vpack.c.b16 %v414, %v745
      %v762 = vpack.c.b16 %v416, %v746
      %v763 = vpack.c.b16 %v418, %v747
      %v764 = vpack.c.b16 %v420, %v748
      %v765 = vpack.c.b16 %v422, %v749
      %v766 = vpack.c.b16 %v424, %v750
      %v767 = vpack.c.b16 %v426, %v751
      %v768 = vpack.c.b16 %v428, %v752
      %v769 = vpack.c.b16 %v430, %v753
      %v770 = vpack.c.b16 %v432, %v754
      %v771 = vpack.c.b16 %v434, %v755
      %vm772 = vcmask 1046528
      %v773 = vrot.slane %v756, 1
      %v774 = vrot.slane %v483, 1
      %v775 = vsel %vm772, %v773, %v774
      %v776 = vrot.slane %v757, 1
      %v777 = vrot.slane %v484, 1
      %v778 = vsel %vm772, %v776, %v777
      %v779 = vrot.slane %v758, 1
      %v780 = vrot.slane %v485, 1
      %v781 = vsel %vm772, %v779, %v780
      %v782 = vrot.slane %v759, 1
      %v783 = vrot.slane %v486, 1
      %v784 = vsel %vm772, %v782, %v783
      %v785 = vrot.slane %v760, 1
      %v786 = vrot.slane %v487, 1
      %v787 = vsel %vm772, %v785, %v786
      %v788 = vrot.slane %v761, 1
      %v789 = vrot.slane %v488, 1
      %v790 = vsel %vm772, %v788, %v789
      %v791 = vrot.slane %v762, 1
      %v792 = vrot.slane %v489, 1
      %v793 = vsel %vm772, %v791, %v792
      %v794 = vrot.slane %v763, 1
      %v795 = vrot.slane %v490, 1
      %v796 = vsel %vm772, %v794, %v795
      %v797 = vrot.slane %v764, 1
      %v798 = vrot.slane %v491, 1
      %v799 = vsel %vm772, %v797, %v798
      %v800 = vrot.slane %v765, 1
      %v801 = vrot.slane %v492, 1
      %v802 = vsel %vm772, %v800, %v801
      %v803 = vrot.slane %v766, 1
      %v804 = vrot.slane %v493, 1
      %v805 = vsel %vm772, %v803, %v804
      %v806 = vrot.slane %v767, 1
      %v807 = vrot.slane %v494, 1
      %v808 = vsel %vm772, %v806, %v807
      %v809 = vrot.slane %v768, 1
      %v810 = vrot.slane %v495, 1
      %v811 = vsel %vm772, %v809, %v810
      %v812 = vrot.slane %v769, 1
      %v813 = vrot.slane %v496, 1
      %v814 = vsel %vm772, %v812, %v813
      %v815 = vrot.slane %v770, 1
      %v816 = vrot.slane %v497, 1
      %v817 = vsel %vm772, %v815, %v816
      %v818 = vrot.slane %v771, 1
      %v819 = vrot.slane %v498, 1
      %v820 = vsel %vm772, %v818, %v819
      %821 = vrot.lane.b32.xlu0 %v775, 8
      %v822 = vpop.permute.xlu0 %821
      %823 = vrot.lane.b32.xlu0 %v778, 8
      %v824 = vpop.permute.xlu0 %823
      %825 = vrot.lane.b32.xlu0 %v781, 8
      %v826 = vpop.permute.xlu0 %825
      %827 = vrot.lane.b32.xlu0 %v784, 8
      %v828 = vpop.permute.xlu0 %827
      %829 = vrot.lane.b32.xlu0 %v787, 8
      %v830 = vpop.permute.xlu0 %829
      %831 = vrot.lane.b32.xlu0 %v790, 8
      %v832 = vpop.permute.xlu0 %831
      %833 = vrot.lane.b32.xlu0 %v793, 8
      %v834 = vpop.permute.xlu0 %833
      %835 = vrot.lane.b32.xlu0 %v796, 8
      %v836 = vpop.permute.xlu0 %835
      %837 = vrot.lane.b32.xlu0 %v799, 8
      %v838 = vpop.permute.xlu0 %837
      %839 = vrot.lane.b32.xlu0 %v802, 8
      %v840 = vpop.permute.xlu0 %839
      %841 = vrot.lane.b32.xlu0 %v805, 8
      %v842 = vpop.permute.xlu0 %841
      %843 = vrot.lane.b32.xlu0 %v808, 8
      %v844 = vpop.permute.xlu0 %843
      %845 = vrot.lane.b32.xlu0 %v811, 8
      %v846 = vpop.permute.xlu0 %845
      %847 = vrot.lane.b32.xlu0 %v814, 8
      %v848 = vpop.permute.xlu0 %847
      %849 = vrot.lane.b32.xlu0 %v817, 8
      %v850 = vpop.permute.xlu0 %849
      %851 = vrot.lane.b32.xlu0 %v820, 8
      %v852 = vpop.permute.xlu0 %851
      %v885 = vunpack.c.l.b16 %v242
      %v886 = vunpack.c.l.b16 %v243
      %v887 = vunpack.c.l.b16 %v244
      %v888 = vunpack.c.l.b16 %v245
      %v889 = vunpack.c.l.b16 %v246
      %v890 = vunpack.c.l.b16 %v247
      %v891 = vunpack.c.l.b16 %v248
      %v892 = vunpack.c.l.b16 %v249
      %v893 = vunpack.c.l.b16 %v250
      %v894 = vunpack.c.l.b16 %v251
      %v895 = vunpack.c.l.b16 %v252
      %v896 = vunpack.c.l.b16 %v253
      %v897 = vunpack.c.l.b16 %v254
      %v898 = vunpack.c.l.b16 %v255
      %v899 = vunpack.c.l.b16 %v256
      %v900 = vunpack.c.l.b16 %v257
      %v901 = vunpack.c.l.b16 %v258
      %v902 = vunpack.c.l.b16 %v259
      %v903 = vunpack.c.l.b16 %v260
      %v904 = vunpack.c.l.b16 %v261
      %v905 = vunpack.c.l.b16 %v262
      %v906 = vunpack.c.l.b16 %v263
      %v907 = vunpack.c.l.b16 %v264
      %v908 = vunpack.c.l.b16 %v265
      %v909 = vunpack.c.l.b16 %v266
      %v910 = vunpack.c.l.b16 %v267
      %v911 = vunpack.c.l.b16 %v268
      %v912 = vunpack.c.l.b16 %v269
      %v913 = vunpack.c.l.b16 %v270
      %v914 = vunpack.c.l.b16 %v271
      %v915 = vunpack.c.l.b16 %v272
      %v916 = vunpack.c.l.b16 %v273
      %v917 = vpack.c.b16 %v886, %v885
      %v918 = vpack.c.b16 %v888, %v887
      %v919 = vpack.c.b16 %v890, %v889
      %v920 = vpack.c.b16 %v892, %v891
      %v921 = vpack.c.b16 %v894, %v893
      %v922 = vpack.c.b16 %v896, %v895
      %v923 = vpack.c.b16 %v898, %v897
      %v924 = vpack.c.b16 %v900, %v899
      %v925 = vpack.c.b16 %v902, %v901
      %v926 = vpack.c.b16 %v904, %v903
      %v927 = vpack.c.b16 %v906, %v905
      %v928 = vpack.c.b16 %v908, %v907
      %v929 = vpack.c.b16 %v910, %v909
      %v930 = vpack.c.b16 %v912, %v911
      %v931 = vpack.c.b16 %v914, %v913
      %v932 = vpack.c.b16 %v916, %v915
      %933 = vrot.lane.b32.xlu0 %v917, 12
      %v934 = vpop.permute.xlu0 %933
      %935 = vrot.lane.b32.xlu0 %v918, 12
      %v936 = vpop.permute.xlu0 %935
      %937 = vrot.lane.b32.xlu0 %v919, 12
      %v938 = vpop.permute.xlu0 %937
      %939 = vrot.lane.b32.xlu0 %v920, 12
      %v940 = vpop.permute.xlu0 %939
      %941 = vrot.lane.b32.xlu0 %v921, 12
      %v942 = vpop.permute.xlu0 %941
      %943 = vrot.lane.b32.xlu0 %v922, 12
      %v944 = vpop.permute.xlu0 %943
      %945 = vrot.lane.b32.xlu0 %v923, 12
      %v946 = vpop.permute.xlu0 %945
      %947 = vrot.lane.b32.xlu0 %v924, 12
      %v948 = vpop.permute.xlu0 %947
      %949 = vrot.lane.b32.xlu0 %v925, 12
      %v950 = vpop.permute.xlu0 %949
      %951 = vrot.lane.b32.xlu0 %v926, 12
      %v952 = vpop.permute.xlu0 %951
      %953 = vrot.lane.b32.xlu0 %v927, 12
      %v954 = vpop.permute.xlu0 %953
      %955 = vrot.lane.b32.xlu0 %v928, 12
      %v956 = vpop.permute.xlu0 %955
      %957 = vrot.lane.b32.xlu0 %v929, 12
      %v958 = vpop.permute.xlu0 %957
      %959 = vrot.lane.b32.xlu0 %v930, 12
      %v960 = vpop.permute.xlu0 %959
      %961 = vrot.lane.b32.xlu0 %v931, 12
      %v962 = vpop.permute.xlu0 %961
      %963 = vrot.lane.b32.xlu0 %v932, 12
      %v964 = vpop.permute.xlu0 %963
      %v981 = vunpack.c.l.b16 %v274
      %v982 = vunpack.c.l.b16 %v275
      %v983 = vunpack.c.l.b16 %v276
      %v984 = vunpack.c.l.b16 %v277
      %v985 = vunpack.c.l.b16 %v278
      %v986 = vunpack.c.l.b16 %v279
      %v987 = vunpack.c.l.b16 %v280
      %v988 = vunpack.c.l.b16 %v281
      %v989 = vunpack.c.l.b16 %v282
      %v990 = vunpack.c.l.b16 %v283
      %v991 = vunpack.c.l.b16 %v284
      %v992 = vunpack.c.l.b16 %v285
      %v993 = vunpack.c.l.b16 %v286
      %v994 = vunpack.c.l.b16 %v287
      %v995 = vunpack.c.l.b16 %v288
      %v996 = vunpack.c.l.b16 %v289
      %v997 = vpack.c.b16 %v981, %v981
      %v998 = vpack.c.b16 %v982, %v982
      %v999 = vpack.c.b16 %v983, %v983
      %v1000 = vpack.c.b16 %v984, %v984
      %v1001 = vpack.c.b16 %v985, %v985
      %v1002 = vpack.c.b16 %v986, %v986
      %v1003 = vpack.c.b16 %v987, %v987
      %v1004 = vpack.c.b16 %v988, %v988
      %v1005 = vpack.c.b16 %v989, %v989
      %v1006 = vpack.c.b16 %v990, %v990
      %v1007 = vpack.c.b16 %v991, %v991
      %v1008 = vpack.c.b16 %v992, %v992
      %v1009 = vpack.c.b16 %v993, %v993
      %v1010 = vpack.c.b16 %v994, %v994
      %v1011 = vpack.c.b16 %v995, %v995
      %v1012 = vpack.c.b16 %v996, %v996
      %v1014 = vshrl.u32 %v917, 16
      %v1016 = vshll.u32 %v917, 16
      %v1018 = vrot.slane %v1016, 1
      %v1019 = vor.u32 %v1014, %v1018
      %v1021 = vshll.u32 %v997, 16
      %v1023 = vrot.slane %v1021, 1
      %v1024 = vsel %vm499, %v1019, %v1023
      %v1026 = vshrl.u32 %v918, 16
      %v1028 = vshll.u32 %v918, 16
      %v1030 = vrot.slane %v1028, 1
      %v1031 = vor.u32 %v1026, %v1030
      %v1033 = vshll.u32 %v998, 16
      %v1035 = vrot.slane %v1033, 1
      %v1036 = vsel %vm499, %v1031, %v1035
      %v1038 = vshrl.u32 %v919, 16
      %v1040 = vshll.u32 %v919, 16
      %v1042 = vrot.slane %v1040, 1
      %v1043 = vor.u32 %v1038, %v1042
      %v1045 = vshll.u32 %v999, 16
      %v1047 = vrot.slane %v1045, 1
      %v1048 = vsel %vm499, %v1043, %v1047
      %v1050 = vshrl.u32 %v920, 16
      %v1052 = vshll.u32 %v920, 16
      %v1054 = vrot.slane %v1052, 1
      %v1055 = vor.u32 %v1050, %v1054
      %v1057 = vshll.u32 %v1000, 16
      %v1059 = vrot.slane %v1057, 1
      %v1060 = vsel %vm499, %v1055, %v1059
      %v1062 = vshrl.u32 %v921, 16
      %v1064 = vshll.u32 %v921, 16
      %v1066 = vrot.slane %v1064, 1
      %v1067 = vor.u32 %v1062, %v1066
      %v1069 = vshll.u32 %v1001, 16
      %v1071 = vrot.slane %v1069, 1
      %v1072 = vsel %vm499, %v1067, %v1071
      %v1074 = vshrl.u32 %v922, 16
      %v1076 = vshll.u32 %v922, 16
      %v1078 = vrot.slane %v1076, 1
      %v1079 = vor.u32 %v1074, %v1078
      %v1081 = vshll.u32 %v1002, 16
      %v1083 = vrot.slane %v1081, 1
      %v1084 = vsel %vm499, %v1079, %v1083
      %v1086 = vshrl.u32 %v923, 16
      %v1088 = vshll.u32 %v923, 16
      %v1090 = vrot.slane %v1088, 1
      %v1091 = vor.u32 %v1086, %v1090
      %v1093 = vshll.u32 %v1003, 16
      %v1095 = vrot.slane %v1093, 1
      %v1096 = vsel %vm499, %v1091, %v1095
      %v1098 = vshrl.u32 %v924, 16
      %v1100 = vshll.u32 %v924, 16
      %v1102 = vrot.slane %v1100, 1
      %v1103 = vor.u32 %v1098, %v1102
      %v1105 = vshll.u32 %v1004, 16
      %v1107 = vrot.slane %v1105, 1
      %v1108 = vsel %vm499, %v1103, %v1107
      %v1110 = vshrl.u32 %v925, 16
      %v1112 = vshll.u32 %v925, 16
      %v1114 = vrot.slane %v1112, 1
      %v1115 = vor.u32 %v1110, %v1114
      %v1117 = vshll.u32 %v1005, 16
      %v1119 = vrot.slane %v1117, 1
      %v1120 = vsel %vm499, %v1115, %v1119
      %v1122 = vshrl.u32 %v926, 16
      %v1124 = vshll.u32 %v926, 16
      %v1126 = vrot.slane %v1124, 1
      %v1127 = vor.u32 %v1122, %v1126
      %v1129 = vshll.u32 %v1006, 16
      %v1131 = vrot.slane %v1129, 1
      %v1132 = vsel %vm499, %v1127, %v1131
      %v1134 = vshrl.u32 %v927, 16
      %v1136 = vshll.u32 %v927, 16
      %v1138 = vrot.slane %v1136, 1
      %v1139 = vor.u32 %v1134, %v1138
      %v1141 = vshll.u32 %v1007, 16
      %v1143 = vrot.slane %v1141, 1
      %v1144 = vsel %vm499, %v1139, %v1143
      %v1146 = vshrl.u32 %v928, 16
      %v1148 = vshll.u32 %v928, 16
      %v1150 = vrot.slane %v1148, 1
      %v1151 = vor.u32 %v1146, %v1150
      %v1153 = vshll.u32 %v1008, 16
      %v1155 = vrot.slane %v1153, 1
      %v1156 = vsel %vm499, %v1151, %v1155
      %v1158 = vshrl.u32 %v929, 16
      %v1160 = vshll.u32 %v929, 16
      %v1162 = vrot.slane %v1160, 1
      %v1163 = vor.u32 %v1158, %v1162
      %v1165 = vshll.u32 %v1009, 16
      %v1167 = vrot.slane %v1165, 1
      %v1168 = vsel %vm499, %v1163, %v1167
      %v1170 = vshrl.u32 %v930, 16
      %v1172 = vshll.u32 %v930, 16
      %v1174 = vrot.slane %v1172, 1
      %v1175 = vor.u32 %v1170, %v1174
      %v1177 = vshll.u32 %v1010, 16
      %v1179 = vrot.slane %v1177, 1
      %v1180 = vsel %vm499, %v1175, %v1179
      %v1182 = vshrl.u32 %v931, 16
      %v1184 = vshll.u32 %v931, 16
      %v1186 = vrot.slane %v1184, 1
      %v1187 = vor.u32 %v1182, %v1186
      %v1189 = vshll.u32 %v1011, 16
      %v1191 = vrot.slane %v1189, 1
      %v1192 = vsel %vm499, %v1187, %v1191
      %v1194 = vshrl.u32 %v932, 16
      %v1196 = vshll.u32 %v932, 16
      %v1198 = vrot.slane %v1196, 1
      %v1199 = vor.u32 %v1194, %v1198
      %v1201 = vshll.u32 %v1012, 16
      %v1203 = vrot.slane %v1201, 1
      %v1204 = vsel %vm499, %v1199, %v1203
      %1205 = vrot.lane.b32.xlu0 %v1024, 16
      %v1206 = vpop.permute.xlu0 %1205
      %1207 = vrot.lane.b32.xlu0 %v1036, 16
      %v1208 = vpop.permute.xlu0 %1207
      %1209 = vrot.lane.b32.xlu0 %v1048, 16
      %v1210 = vpop.permute.xlu0 %1209
      %1211 = vrot.lane.b32.xlu0 %v1060, 16
      %v1212 = vpop.permute.xlu0 %1211
      %1213 = vrot.lane.b32.xlu0 %v1072, 16
      %v1214 = vpop.permute.xlu0 %1213
      %1215 = vrot.lane.b32.xlu0 %v1084, 16
      %v1216 = vpop.permute.xlu0 %1215
      %1217 = vrot.lane.b32.xlu0 %v1096, 16
      %v1218 = vpop.permute.xlu0 %1217
      %1219 = vrot.lane.b32.xlu0 %v1108, 16
      %v1220 = vpop.permute.xlu0 %1219
      %1221 = vrot.lane.b32.xlu0 %v1120, 16
      %v1222 = vpop.permute.xlu0 %1221
      %1223 = vrot.lane.b32.xlu0 %v1132, 16
      %v1224 = vpop.permute.xlu0 %1223
      %1225 = vrot.lane.b32.xlu0 %v1144, 16
      %v1226 = vpop.permute.xlu0 %1225
      %1227 = vrot.lane.b32.xlu0 %v1156, 16
      %v1228 = vpop.permute.xlu0 %1227
      %1229 = vrot.lane.b32.xlu0 %v1168, 16
      %v1230 = vpop.permute.xlu0 %1229
      %1231 = vrot.lane.b32.xlu0 %v1180, 16
      %v1232 = vpop.permute.xlu0 %1231
      %1233 = vrot.lane.b32.xlu0 %v1192, 16
      %v1234 = vpop.permute.xlu0 %1233
      %1235 = vrot.lane.b32.xlu0 %v1204, 16
      %v1236 = vpop.permute.xlu0 %1235
      %v1253 = vunpack.c.l.b16 %v290
      %v1254 = vunpack.c.l.b16 %v291
      %v1255 = vunpack.c.l.b16 %v292
      %v1256 = vunpack.c.l.b16 %v293
      %v1257 = vunpack.c.l.b16 %v294
      %v1258 = vunpack.c.l.b16 %v295
      %v1259 = vunpack.c.l.b16 %v296
      %v1260 = vunpack.c.l.b16 %v297
      %v1261 = vunpack.c.l.b16 %v298
      %v1262 = vunpack.c.l.b16 %v299
      %v1263 = vunpack.c.l.b16 %v300
      %v1264 = vunpack.c.l.b16 %v301
      %v1265 = vunpack.c.l.b16 %v302
      %v1266 = vunpack.c.l.b16 %v303
      %v1267 = vunpack.c.l.b16 %v304
      %v1268 = vunpack.c.l.b16 %v305
      %v1269 = vpack.c.b16 %v886, %v1253
      %v1270 = vpack.c.b16 %v888, %v1254
      %v1271 = vpack.c.b16 %v890, %v1255
      %v1272 = vpack.c.b16 %v892, %v1256
      %v1273 = vpack.c.b16 %v894, %v1257
      %v1274 = vpack.c.b16 %v896, %v1258
      %v1275 = vpack.c.b16 %v898, %v1259
      %v1276 = vpack.c.b16 %v900, %v1260
      %v1277 = vpack.c.b16 %v902, %v1261
      %v1278 = vpack.c.b16 %v904, %v1262
      %v1279 = vpack.c.b16 %v906, %v1263
      %v1280 = vpack.c.b16 %v908, %v1264
      %v1281 = vpack.c.b16 %v910, %v1265
      %v1282 = vpack.c.b16 %v912, %v1266
      %v1283 = vpack.c.b16 %v914, %v1267
      %v1284 = vpack.c.b16 %v916, %v1268
      %v1285 = vrot.slane %v1269, 1
      %v1286 = vrot.slane %v997, 1
      %v1287 = vsel %vm772, %v1285, %v1286
      %v1288 = vrot.slane %v1270, 1
      %v1289 = vrot.slane %v998, 1
      %v1290 = vsel %vm772, %v1288, %v1289
      %v1291 = vrot.slane %v1271, 1
      %v1292 = vrot.slane %v999, 1
      %v1293 = vsel %vm772, %v1291, %v1292
      %v1294 = vrot.slane %v1272, 1
      %v1295 = vrot.slane %v1000, 1
      %v1296 = vsel %vm772, %v1294, %v1295
      %v1297 = vrot.slane %v1273, 1
      %v1298 = vrot.slane %v1001, 1
      %v1299 = vsel %vm772, %v1297, %v1298
      %v1300 = vrot.slane %v1274, 1
      %v1301 = vrot.slane %v1002, 1
      %v1302 = vsel %vm772, %v1300, %v1301
      %v1303 = vrot.slane %v1275, 1
      %v1304 = vrot.slane %v1003, 1
      %v1305 = vsel %vm772, %v1303, %v1304
      %v1306 = vrot.slane %v1276, 1
      %v1307 = vrot.slane %v1004, 1
      %v1308 = vsel %vm772, %v1306, %v1307
      %v1309 = vrot.slane %v1277, 1
      %v1310 = vrot.slane %v1005, 1
      %v1311 = vsel %vm772, %v1309, %v1310
      %v1312 = vrot.slane %v1278, 1
      %v1313 = vrot.slane %v1006, 1
      %v1314 = vsel %vm772, %v1312, %v1313
      %v1315 = vrot.slane %v1279, 1
      %v1316 = vrot.slane %v1007, 1
      %v1317 = vsel %vm772, %v1315, %v1316
      %v1318 = vrot.slane %v1280, 1
      %v1319 = vrot.slane %v1008, 1
      %v1320 = vsel %vm772, %v1318, %v1319
      %v1321 = vrot.slane %v1281, 1
      %v1322 = vrot.slane %v1009, 1
      %v1323 = vsel %vm772, %v1321, %v1322
      %v1324 = vrot.slane %v1282, 1
      %v1325 = vrot.slane %v1010, 1
      %v1326 = vsel %vm772, %v1324, %v1325
      %v1327 = vrot.slane %v1283, 1
      %v1328 = vrot.slane %v1011, 1
      %v1329 = vsel %vm772, %v1327, %v1328
      %v1330 = vrot.slane %v1284, 1
      %v1331 = vrot.slane %v1012, 1
      %v1332 = vsel %vm772, %v1330, %v1331
      %1333 = vrot.lane.b32.xlu0 %v1287, 20
      %v1334 = vpop.permute.xlu0 %1333
      %1335 = vrot.lane.b32.xlu0 %v1290, 20
      %v1336 = vpop.permute.xlu0 %1335
      %1337 = vrot.lane.b32.xlu0 %v1293, 20
      %v1338 = vpop.permute.xlu0 %1337
      %1339 = vrot.lane.b32.xlu0 %v1296, 20
      %v1340 = vpop.permute.xlu0 %1339
      %1341 = vrot.lane.b32.xlu0 %v1299, 20
      %v1342 = vpop.permute.xlu0 %1341
      %1343 = vrot.lane.b32.xlu0 %v1302, 20
      %v1344 = vpop.permute.xlu0 %1343
      %1345 = vrot.lane.b32.xlu0 %v1305, 20
      %v1346 = vpop.permute.xlu0 %1345
      %1347 = vrot.lane.b32.xlu0 %v1308, 20
      %v1348 = vpop.permute.xlu0 %1347
      %1349 = vrot.lane.b32.xlu0 %v1311, 20
      %v1350 = vpop.permute.xlu0 %1349
      %1351 = vrot.lane.b32.xlu0 %v1314, 20
      %v1352 = vpop.permute.xlu0 %1351
      %1353 = vrot.lane.b32.xlu0 %v1317, 20
      %v1354 = vpop.permute.xlu0 %1353
      %1355 = vrot.lane.b32.xlu0 %v1320, 20
      %v1356 = vpop.permute.xlu0 %1355
      %1357 = vrot.lane.b32.xlu0 %v1323, 20
      %v1358 = vpop.permute.xlu0 %1357
      %1359 = vrot.lane.b32.xlu0 %v1326, 20
      %v1360 = vpop.permute.xlu0 %1359
      %1361 = vrot.lane.b32.xlu0 %v1329, 20
      %v1362 = vpop.permute.xlu0 %1361
      %1363 = vrot.lane.b32.xlu0 %v1332, 20
      %v1364 = vpop.permute.xlu0 %1363
      %v1397 = vunpack.c.l.b16 %v307
      %v1398 = vunpack.c.l.b16 %v308
      %v1399 = vunpack.c.l.b16 %v309
      %v1400 = vunpack.c.l.b16 %v310
      %v1401 = vunpack.c.l.b16 %v311
      %v1402 = vunpack.c.l.b16 %v312
      %v1403 = vunpack.c.l.b16 %v313
      %v1404 = vunpack.c.l.b16 %v314
      %v1405 = vunpack.c.l.b16 %v315
      %v1406 = vunpack.c.l.b16 %v316
      %v1407 = vunpack.c.l.b16 %v317
      %v1408 = vunpack.c.l.b16 %v318
      %v1409 = vunpack.c.l.b16 %v319
      %v1410 = vunpack.c.l.b16 %v320
      %v1411 = vunpack.c.l.b16 %v321
      %v1412 = vunpack.c.l.b16 %v322
      %v1413 = vunpack.c.l.b16 %v323
      %v1414 = vunpack.c.l.b16 %v324
      %v1415 = vunpack.c.l.b16 %v325
      %v1416 = vunpack.c.l.b16 %v326
      %v1417 = vunpack.c.l.b16 %v327
      %v1418 = vunpack.c.l.b16 %v328
      %v1419 = vunpack.c.l.b16 %v329
      %v1420 = vunpack.c.l.b16 %v330
      %v1421 = vunpack.c.l.b16 %v331
      %v1422 = vunpack.c.l.b16 %v332
      %v1423 = vunpack.c.l.b16 %v333
      %v1424 = vunpack.c.l.b16 %v334
      %v1425 = vunpack.c.l.b16 %v335
      %v1426 = vunpack.c.l.b16 %v336
      %v1427 = vunpack.c.l.b16 %v337
      %v1428 = vunpack.c.l.b16 %v338
      %v1429 = vpack.c.b16 %v1398, %v1397
      %v1430 = vpack.c.b16 %v1400, %v1399
      %v1431 = vpack.c.b16 %v1402, %v1401
      %v1432 = vpack.c.b16 %v1404, %v1403
      %v1433 = vpack.c.b16 %v1406, %v1405
      %v1434 = vpack.c.b16 %v1408, %v1407
      %v1435 = vpack.c.b16 %v1410, %v1409
      %v1436 = vpack.c.b16 %v1412, %v1411
      %v1437 = vpack.c.b16 %v1414, %v1413
      %v1438 = vpack.c.b16 %v1416, %v1415
      %v1439 = vpack.c.b16 %v1418, %v1417
      %v1440 = vpack.c.b16 %v1420, %v1419
      %v1441 = vpack.c.b16 %v1422, %v1421
      %v1442 = vpack.c.b16 %v1424, %v1423
      %v1443 = vpack.c.b16 %v1426, %v1425
      %v1444 = vpack.c.b16 %v1428, %v1427
      %1445 = vrot.lane.b32.xlu0 %v1429, 24
      %v1446 = vpop.permute.xlu0 %1445
      %1447 = vrot.lane.b32.xlu0 %v1430, 24
      %v1448 = vpop.permute.xlu0 %1447
      %1449 = vrot.lane.b32.xlu0 %v1431, 24
      %v1450 = vpop.permute.xlu0 %1449
      %1451 = vrot.lane.b32.xlu0 %v1432, 24
      %v1452 = vpop.permute.xlu0 %1451
      %1453 = vrot.lane.b32.xlu0 %v1433, 24
      %v1454 = vpop.permute.xlu0 %1453
      %1455 = vrot.lane.b32.xlu0 %v1434, 24
      %v1456 = vpop.permute.xlu0 %1455
      %1457 = vrot.lane.b32.xlu0 %v1435, 24
      %v1458 = vpop.permute.xlu0 %1457
      %1459 = vrot.lane.b32.xlu0 %v1436, 24
      %v1460 = vpop.permute.xlu0 %1459
      %1461 = vrot.lane.b32.xlu0 %v1437, 24
      %v1462 = vpop.permute.xlu0 %1461
      %1463 = vrot.lane.b32.xlu0 %v1438, 24
      %v1464 = vpop.permute.xlu0 %1463
      %1465 = vrot.lane.b32.xlu0 %v1439, 24
      %v1466 = vpop.permute.xlu0 %1465
      %1467 = vrot.lane.b32.xlu0 %v1440, 24
      %v1468 = vpop.permute.xlu0 %1467
      %1469 = vrot.lane.b32.xlu0 %v1441, 24
      %v1470 = vpop.permute.xlu0 %1469
      %1471 = vrot.lane.b32.xlu0 %v1442, 24
      %v1472 = vpop.permute.xlu0 %1471
      %1473 = vrot.lane.b32.xlu0 %v1443, 24
      %v1474 = vpop.permute.xlu0 %1473
      %1475 = vrot.lane.b32.xlu0 %v1444, 24
      %v1476 = vpop.permute.xlu0 %1475
      %v1493 = vunpack.c.l.b16 %v339
      %v1494 = vunpack.c.l.b16 %v340
      %v1495 = vunpack.c.l.b16 %v341
      %v1496 = vunpack.c.l.b16 %v342
      %v1497 = vunpack.c.l.b16 %v343
      %v1498 = vunpack.c.l.b16 %v344
      %v1499 = vunpack.c.l.b16 %v345
      %v1500 = vunpack.c.l.b16 %v346
      %v1501 = vunpack.c.l.b16 %v347
      %v1502 = vunpack.c.l.b16 %v348
      %v1503 = vunpack.c.l.b16 %v349
      %v1504 = vunpack.c.l.b16 %v350
      %v1505 = vunpack.c.l.b16 %v351
      %v1506 = vunpack.c.l.b16 %v352
      %v1507 = vunpack.c.l.b16 %v353
      %v1508 = vunpack.c.l.b16 %v354
      %v1509 = vpack.c.b16 %v1493, %v1493
      %v1510 = vpack.c.b16 %v1494, %v1494
      %v1511 = vpack.c.b16 %v1495, %v1495
      %v1512 = vpack.c.b16 %v1496, %v1496
      %v1513 = vpack.c.b16 %v1497, %v1497
      %v1514 = vpack.c.b16 %v1498, %v1498
      %v1515 = vpack.c.b16 %v1499, %v1499
      %v1516 = vpack.c.b16 %v1500, %v1500
      %v1517 = vpack.c.b16 %v1501, %v1501
      %v1518 = vpack.c.b16 %v1502, %v1502
      %v1519 = vpack.c.b16 %v1503, %v1503
      %v1520 = vpack.c.b16 %v1504, %v1504
      %v1521 = vpack.c.b16 %v1505, %v1505
      %v1522 = vpack.c.b16 %v1506, %v1506
      %v1523 = vpack.c.b16 %v1507, %v1507
      %v1524 = vpack.c.b16 %v1508, %v1508
      %v1526 = vshrl.u32 %v1429, 16
      %v1528 = vshll.u32 %v1429, 16
      %v1530 = vrot.slane %v1528, 1
      %v1531 = vor.u32 %v1526, %v1530
      %v1533 = vshll.u32 %v1509, 16
      %v1535 = vrot.slane %v1533, 1
      %v1536 = vsel %vm499, %v1531, %v1535
      %v1538 = vshrl.u32 %v1430, 16
      %v1540 = vshll.u32 %v1430, 16
      %v1542 = vrot.slane %v1540, 1
      %v1543 = vor.u32 %v1538, %v1542
      %v1545 = vshll.u32 %v1510, 16
      %v1547 = vrot.slane %v1545, 1
      %v1548 = vsel %vm499, %v1543, %v1547
      %v1550 = vshrl.u32 %v1431, 16
      %v1552 = vshll.u32 %v1431, 16
      %v1554 = vrot.slane %v1552, 1
      %v1555 = vor.u32 %v1550, %v1554
      %v1557 = vshll.u32 %v1511, 16
      %v1559 = vrot.slane %v1557, 1
      %v1560 = vsel %vm499, %v1555, %v1559
      %v1562 = vshrl.u32 %v1432, 16
      %v1564 = vshll.u32 %v1432, 16
      %v1566 = vrot.slane %v1564, 1
      %v1567 = vor.u32 %v1562, %v1566
      %v1569 = vshll.u32 %v1512, 16
      %v1571 = vrot.slane %v1569, 1
      %v1572 = vsel %vm499, %v1567, %v1571
      %v1574 = vshrl.u32 %v1433, 16
      %v1576 = vshll.u32 %v1433, 16
      %v1578 = vrot.slane %v1576, 1
      %v1579 = vor.u32 %v1574, %v1578
      %v1581 = vshll.u32 %v1513, 16
      %v1583 = vrot.slane %v1581, 1
      %v1584 = vsel %vm499, %v1579, %v1583
      %v1586 = vshrl.u32 %v1434, 16
      %v1588 = vshll.u32 %v1434, 16
      %v1590 = vrot.slane %v1588, 1
      %v1591 = vor.u32 %v1586, %v1590
      %v1593 = vshll.u32 %v1514, 16
      %v1595 = vrot.slane %v1593, 1
      %v1596 = vsel %vm499, %v1591, %v1595
      %v1598 = vshrl.u32 %v1435, 16
      %v1600 = vshll.u32 %v1435, 16
      %v1602 = vrot.slane %v1600, 1
      %v1603 = vor.u32 %v1598, %v1602
      %v1605 = vshll.u32 %v1515, 16
      %v1607 = vrot.slane %v1605, 1
      %v1608 = vsel %vm499, %v1603, %v1607
      %v1610 = vshrl.u32 %v1436, 16
      %v1612 = vshll.u32 %v1436, 16
      %v1614 = vrot.slane %v1612, 1
      %v1615 = vor.u32 %v1610, %v1614
      %v1617 = vshll.u32 %v1516, 16
      %v1619 = vrot.slane %v1617, 1
      %v1620 = vsel %vm499, %v1615, %v1619
      %v1622 = vshrl.u32 %v1437, 16
      %v1624 = vshll.u32 %v1437, 16
      %v1626 = vrot.slane %v1624, 1
      %v1627 = vor.u32 %v1622, %v1626
      %v1629 = vshll.u32 %v1517, 16
      %v1631 = vrot.slane %v1629, 1
      %v1632 = vsel %vm499, %v1627, %v1631
      %v1634 = vshrl.u32 %v1438, 16
      %v1636 = vshll.u32 %v1438, 16
      %v1638 = vrot.slane %v1636, 1
      %v1639 = vor.u32 %v1634, %v1638
      %v1641 = vshll.u32 %v1518, 16
      %v1643 = vrot.slane %v1641, 1
      %v1644 = vsel %vm499, %v1639, %v1643
      %v1646 = vshrl.u32 %v1439, 16
      %v1648 = vshll.u32 %v1439, 16
      %v1650 = vrot.slane %v1648, 1
      %v1651 = vor.u32 %v1646, %v1650
      %v1653 = vshll.u32 %v1519, 16
      %v1655 = vrot.slane %v1653, 1
      %v1656 = vsel %vm499, %v1651, %v1655
      %v1658 = vshrl.u32 %v1440, 16
      %v1660 = vshll.u32 %v1440, 16
      %v1662 = vrot.slane %v1660, 1
      %v1663 = vor.u32 %v1658, %v1662
      %v1665 = vshll.u32 %v1520, 16
      %v1667 = vrot.slane %v1665, 1
      %v1668 = vsel %vm499, %v1663, %v1667
      %v1670 = vshrl.u32 %v1441, 16
      %v1672 = vshll.u32 %v1441, 16
      %v1674 = vrot.slane %v1672, 1
      %v1675 = vor.u32 %v1670, %v1674
      %v1677 = vshll.u32 %v1521, 16
      %v1679 = vrot.slane %v1677, 1
      %v1680 = vsel %vm499, %v1675, %v1679
      %v1682 = vshrl.u32 %v1442, 16
      %v1684 = vshll.u32 %v1442, 16
      %v1686 = vrot.slane %v1684, 1
      %v1687 = vor.u32 %v1682, %v1686
      %v1689 = vshll.u32 %v1522, 16
      %v1691 = vrot.slane %v1689, 1
      %v1692 = vsel %vm499, %v1687, %v1691
      %v1694 = vshrl.u32 %v1443, 16
      %v1696 = vshll.u32 %v1443, 16
      %v1698 = vrot.slane %v1696, 1
      %v1699 = vor.u32 %v1694, %v1698
      %v1701 = vshll.u32 %v1523, 16
      %v1703 = vrot.slane %v1701, 1
      %v1704 = vsel %vm499, %v1699, %v1703
      %v1706 = vshrl.u32 %v1444, 16
      %v1708 = vshll.u32 %v1444, 16
      %v1710 = vrot.slane %v1708, 1
      %v1711 = vor.u32 %v1706, %v1710
      %v1713 = vshll.u32 %v1524, 16
      %v1715 = vrot.slane %v1713, 1
      %v1716 = vsel %vm499, %v1711, %v1715
      %1717 = vrot.lane.b32.xlu0 %v1536, 28
      %v1718 = vpop.permute.xlu0 %1717
      %1719 = vrot.lane.b32.xlu0 %v1548, 28
      %v1720 = vpop.permute.xlu0 %1719
      %1721 = vrot.lane.b32.xlu0 %v1560, 28
      %v1722 = vpop.permute.xlu0 %1721
      %1723 = vrot.lane.b32.xlu0 %v1572, 28
      %v1724 = vpop.permute.xlu0 %1723
      %1725 = vrot.lane.b32.xlu0 %v1584, 28
      %v1726 = vpop.permute.xlu0 %1725
      %1727 = vrot.lane.b32.xlu0 %v1596, 28
      %v1728 = vpop.permute.xlu0 %1727
      %1729 = vrot.lane.b32.xlu0 %v1608, 28
      %v1730 = vpop.permute.xlu0 %1729
      %1731 = vrot.lane.b32.xlu0 %v1620, 28
      %v1732 = vpop.permute.xlu0 %1731
      %1733 = vrot.lane.b32.xlu0 %v1632, 28
      %v1734 = vpop.permute.xlu0 %1733
      %1735 = vrot.lane.b32.xlu0 %v1644, 28
      %v1736 = vpop.permute.xlu0 %1735
      %1737 = vrot.lane.b32.xlu0 %v1656, 28
      %v1738 = vpop.permute.xlu0 %1737
      %1739 = vrot.lane.b32.xlu0 %v1668, 28
      %v1740 = vpop.permute.xlu0 %1739
      %1741 = vrot.lane.b32.xlu0 %v1680, 28
      %v1742 = vpop.permute.xlu0 %1741
      %1743 = vrot.lane.b32.xlu0 %v1692, 28
      %v1744 = vpop.permute.xlu0 %1743
      %1745 = vrot.lane.b32.xlu0 %v1704, 28
      %v1746 = vpop.permute.xlu0 %1745
      %1747 = vrot.lane.b32.xlu0 %v1716, 28
      %v1748 = vpop.permute.xlu0 %1747
      %v1765 = vunpack.c.l.b16 %v355
      %v1766 = vunpack.c.l.b16 %v356
      %v1767 = vunpack.c.l.b16 %v357
      %v1768 = vunpack.c.l.b16 %v358
      %v1769 = vunpack.c.l.b16 %v359
      %v1770 = vunpack.c.l.b16 %v360
      %v1771 = vunpack.c.l.b16 %v361
      %v1772 = vunpack.c.l.b16 %v362
      %v1773 = vunpack.c.l.b16 %v363
      %v1774 = vunpack.c.l.b16 %v364
      %v1775 = vunpack.c.l.b16 %v365
      %v1776 = vunpack.c.l.b16 %v366
      %v1777 = vunpack.c.l.b16 %v367
      %v1778 = vunpack.c.l.b16 %v368
      %v1779 = vunpack.c.l.b16 %v369
      %v1780 = vunpack.c.l.b16 %v370
      %v1781 = vpack.c.b16 %v1398, %v1765
      %v1782 = vpack.c.b16 %v1400, %v1766
      %v1783 = vpack.c.b16 %v1402, %v1767
      %v1784 = vpack.c.b16 %v1404, %v1768
      %v1785 = vpack.c.b16 %v1406, %v1769
      %v1786 = vpack.c.b16 %v1408, %v1770
      %v1787 = vpack.c.b16 %v1410, %v1771
      %v1788 = vpack.c.b16 %v1412, %v1772
      %v1789 = vpack.c.b16 %v1414, %v1773
      %v1790 = vpack.c.b16 %v1416, %v1774
      %v1791 = vpack.c.b16 %v1418, %v1775
      %v1792 = vpack.c.b16 %v1420, %v1776
      %v1793 = vpack.c.b16 %v1422, %v1777
      %v1794 = vpack.c.b16 %v1424, %v1778
      %v1795 = vpack.c.b16 %v1426, %v1779
      %v1796 = vpack.c.b16 %v1428, %v1780
      %v1797 = vrot.slane %v1781, 1
      %v1798 = vrot.slane %v1509, 1
      %v1799 = vsel %vm772, %v1797, %v1798
      %v1800 = vrot.slane %v1782, 1
      %v1801 = vrot.slane %v1510, 1
      %v1802 = vsel %vm772, %v1800, %v1801
      %v1803 = vrot.slane %v1783, 1
      %v1804 = vrot.slane %v1511, 1
      %v1805 = vsel %vm772, %v1803, %v1804
      %v1806 = vrot.slane %v1784, 1
      %v1807 = vrot.slane %v1512, 1
      %v1808 = vsel %vm772, %v1806, %v1807
      %v1809 = vrot.slane %v1785, 1
      %v1810 = vrot.slane %v1513, 1
      %v1811 = vsel %vm772, %v1809, %v1810
      %v1812 = vrot.slane %v1786, 1
      %v1813 = vrot.slane %v1514, 1
      %v1814 = vsel %vm772, %v1812, %v1813
      %v1815 = vrot.slane %v1787, 1
      %v1816 = vrot.slane %v1515, 1
      %v1817 = vsel %vm772, %v1815, %v1816
      %v1818 = vrot.slane %v1788, 1
      %v1819 = vrot.slane %v1516, 1
      %v1820 = vsel %vm772, %v1818, %v1819
      %v1821 = vrot.slane %v1789, 1
      %v1822 = vrot.slane %v1517, 1
      %v1823 = vsel %vm772, %v1821, %v1822
      %v1824 = vrot.slane %v1790, 1
      %v1825 = vrot.slane %v1518, 1
      %v1826 = vsel %vm772, %v1824, %v1825
      %v1827 = vrot.slane %v1791, 1
      %v1828 = vrot.slane %v1519, 1
      %v1829 = vsel %vm772, %v1827, %v1828
      %v1830 = vrot.slane %v1792, 1
      %v1831 = vrot.slane %v1520, 1
      %v1832 = vsel %vm772, %v1830, %v1831
      %v1833 = vrot.slane %v1793, 1
      %v1834 = vrot.slane %v1521, 1
      %v1835 = vsel %vm772, %v1833, %v1834
      %v1836 = vrot.slane %v1794, 1
      %v1837 = vrot.slane %v1522, 1
      %v1838 = vsel %vm772, %v1836, %v1837
      %v1839 = vrot.slane %v1795, 1
      %v1840 = vrot.slane %v1523, 1
      %v1841 = vsel %vm772, %v1839, %v1840
      %v1842 = vrot.slane %v1796, 1
      %v1843 = vrot.slane %v1524, 1
      %v1844 = vsel %vm772, %v1842, %v1843
      %1845 = vrot.lane.b32.xlu0 %v1799, 32
      %v1846 = vpop.permute.xlu0 %1845
      %1847 = vrot.lane.b32.xlu0 %v1802, 32
      %v1848 = vpop.permute.xlu0 %1847
      %1849 = vrot.lane.b32.xlu0 %v1805, 32
      %v1850 = vpop.permute.xlu0 %1849
      %1851 = vrot.lane.b32.xlu0 %v1808, 32
      %v1852 = vpop.permute.xlu0 %1851
      %1853 = vrot.lane.b32.xlu0 %v1811, 32
      %v1854 = vpop.permute.xlu0 %1853
      %1855 = vrot.lane.b32.xlu0 %v1814, 32
      %v1856 = vpop.permute.xlu0 %1855
      %1857 = vrot.lane.b32.xlu0 %v1817, 32
      %v1858 = vpop.permute.xlu0 %1857
      %1859 = vrot.lane.b32.xlu0 %v1820, 32
      %v1860 = vpop.permute.xlu0 %1859
      %1861 = vrot.lane.b32.xlu0 %v1823, 32
      %v1862 = vpop.permute.xlu0 %1861
      %1863 = vrot.lane.b32.xlu0 %v1826, 32
      %v1864 = vpop.permute.xlu0 %1863
      %1865 = vrot.lane.b32.xlu0 %v1829, 32
      %v1866 = vpop.permute.xlu0 %1865
      %1867 = vrot.lane.b32.xlu0 %v1832, 32
      %v1868 = vpop.permute.xlu0 %1867
      %1869 = vrot.lane.b32.xlu0 %v1835, 32
      %v1870 = vpop.permute.xlu0 %1869
      %1871 = vrot.lane.b32.xlu0 %v1838, 32
      %v1872 = vpop.permute.xlu0 %1871
      %1873 = vrot.lane.b32.xlu0 %v1841, 32
      %v1874 = vpop.permute.xlu0 %1873
      %1875 = vrot.lane.b32.xlu0 %v1844, 32
      %v1876 = vpop.permute.xlu0 %1875
      %vm1877 = vcmask 31744
      %v1879 = vsel %vm1877, %v435, %v693
      %v1881 = vsel %vm1877, %v436, %v695
      %v1883 = vsel %vm1877, %v437, %v697
      %v1885 = vsel %vm1877, %v438, %v699
      %v1887 = vsel %vm1877, %v439, %v701
      %v1889 = vsel %vm1877, %v440, %v703
      %v1891 = vsel %vm1877, %v441, %v705
      %v1893 = vsel %vm1877, %v442, %v707
      %v1895 = vsel %vm1877, %v443, %v709
      %v1897 = vsel %vm1877, %v444, %v711
      %v1899 = vsel %vm1877, %v445, %v713
      %v1901 = vsel %vm1877, %v446, %v715
      %v1903 = vsel %vm1877, %v447, %v717
      %v1905 = vsel %vm1877, %v448, %v719
      %v1907 = vsel %vm1877, %v449, %v721
      %v1909 = vsel %vm1877, %v450, %v723
      %vm1910 = vcmask 64512
      %v1912 = vsel %vm1910, %v1879, %v822
      %v1914 = vsel %vm1910, %v1881, %v824
      %v1916 = vsel %vm1910, %v1883, %v826
      %v1918 = vsel %vm1910, %v1885, %v828
      %v1920 = vsel %vm1910, %v1887, %v830
      %v1922 = vsel %vm1910, %v1889, %v832
      %v1924 = vsel %vm1910, %v1891, %v834
      %v1926 = vsel %vm1910, %v1893, %v836
      %v1928 = vsel %vm1910, %v1895, %v838
      %v1930 = vsel %vm1910, %v1897, %v840
      %v1932 = vsel %vm1910, %v1899, %v842
      %v1934 = vsel %vm1910, %v1901, %v844
      %v1936 = vsel %vm1910, %v1903, %v846
      %v1938 = vsel %vm1910, %v1905, %v848
      %v1940 = vsel %vm1910, %v1907, %v850
      %v1942 = vsel %vm1910, %v1909, %v852
      %vm1943 = vcmask 97280
      %v1945 = vsel %vm1943, %v1912, %v934
      %v1947 = vsel %vm1943, %v1914, %v936
      %v1949 = vsel %vm1943, %v1916, %v938
      %v1951 = vsel %vm1943, %v1918, %v940
      %v1953 = vsel %vm1943, %v1920, %v942
      %v1955 = vsel %vm1943, %v1922, %v944
      %v1957 = vsel %vm1943, %v1924, %v946
      %v1959 = vsel %vm1943, %v1926, %v948
      %v1961 = vsel %vm1943, %v1928, %v950
      %v1963 = vsel %vm1943, %v1930, %v952
      %v1965 = vsel %vm1943, %v1932, %v954
      %v1967 = vsel %vm1943, %v1934, %v956
      %v1969 = vsel %vm1943, %v1936, %v958
      %v1971 = vsel %vm1943, %v1938, %v960
      %v1973 = vsel %vm1943, %v1940, %v962
      %v1975 = vsel %vm1943, %v1942, %v964
      %vm1976 = vcmask 130048
      %v1978 = vsel %vm1976, %v1945, %v1206
      %v1980 = vsel %vm1976, %v1947, %v1208
      %v1982 = vsel %vm1976, %v1949, %v1210
      %v1984 = vsel %vm1976, %v1951, %v1212
      %v1986 = vsel %vm1976, %v1953, %v1214
      %v1988 = vsel %vm1976, %v1955, %v1216
      %v1990 = vsel %vm1976, %v1957, %v1218
      %v1992 = vsel %vm1976, %v1959, %v1220
      %v1994 = vsel %vm1976, %v1961, %v1222
      %v1996 = vsel %vm1976, %v1963, %v1224
      %v1998 = vsel %vm1976, %v1965, %v1226
      %v2000 = vsel %vm1976, %v1967, %v1228
      %v2002 = vsel %vm1976, %v1969, %v1230
      %v2004 = vsel %vm1976, %v1971, %v1232
      %v2006 = vsel %vm1976, %v1973, %v1234
      %v2008 = vsel %vm1976, %v1975, %v1236
      %vm2009 = vcmask 162816
      %v2011 = vsel %vm2009, %v1978, %v1334
      %v2013 = vsel %vm2009, %v1980, %v1336
      %v2015 = vsel %vm2009, %v1982, %v1338
      %v2017 = vsel %vm2009, %v1984, %v1340
      %v2019 = vsel %vm2009, %v1986, %v1342
      %v2021 = vsel %vm2009, %v1988, %v1344
      %v2023 = vsel %vm2009, %v1990, %v1346
      %v2025 = vsel %vm2009, %v1992, %v1348
      %v2027 = vsel %vm2009, %v1994, %v1350
      %v2029 = vsel %vm2009, %v1996, %v1352
      %v2031 = vsel %vm2009, %v1998, %v1354
      %v2033 = vsel %vm2009, %v2000, %v1356
      %v2035 = vsel %vm2009, %v2002, %v1358
      %v2037 = vsel %vm2009, %v2004, %v1360
      %v2039 = vsel %vm2009, %v2006, %v1362
      %v2041 = vsel %vm2009, %v2008, %v1364
      %vm2042 = vcmask 195584
      %v2044 = vsel %vm2042, %v2011, %v1446
      %v2046 = vsel %vm2042, %v2013, %v1448
      %v2048 = vsel %vm2042, %v2015, %v1450
      %v2050 = vsel %vm2042, %v2017, %v1452
      %v2052 = vsel %vm2042, %v2019, %v1454
      %v2054 = vsel %vm2042, %v2021, %v1456
      %v2056 = vsel %vm2042, %v2023, %v1458
      %v2058 = vsel %vm2042, %v2025, %v1460
      %v2060 = vsel %vm2042, %v2027, %v1462
      %v2062 = vsel %vm2042, %v2029, %v1464
      %v2064 = vsel %vm2042, %v2031, %v1466
      %v2066 = vsel %vm2042, %v2033, %v1468
      %v2068 = vsel %vm2042, %v2035, %v1470
      %v2070 = vsel %vm2042, %v2037, %v1472
      %v2072 = vsel %vm2042, %v2039, %v1474
      %v2074 = vsel %vm2042, %v2041, %v1476
      %vm2075 = vcmask 228352
      %v2077 = vsel %vm2075, %v2044, %v1718
      %v2079 = vsel %vm2075, %v2046, %v1720
      %v2081 = vsel %vm2075, %v2048, %v1722
      %v2083 = vsel %vm2075, %v2050, %v1724
      %v2085 = vsel %vm2075, %v2052, %v1726
      %v2087 = vsel %vm2075, %v2054, %v1728
      %v2089 = vsel %vm2075, %v2056, %v1730
      %v2091 = vsel %vm2075, %v2058, %v1732
      %v2093 = vsel %vm2075, %v2060, %v1734
      %v2095 = vsel %vm2075, %v2062, %v1736
      %v2097 = vsel %vm2075, %v2064, %v1738
      %v2099 = vsel %vm2075, %v2066, %v1740
      %v2101 = vsel %vm2075, %v2068, %v1742
      %v2103 = vsel %vm2075, %v2070, %v1744
      %v2105 = vsel %vm2075, %v2072, %v1746
      %v2107 = vsel %vm2075, %v2074, %v1748
      %vm2108 = vcmask 261120
      %v2110 = vsel %vm2108, %v2077, %v1846
      %v2112 = vsel %vm2108, %v2079, %v1848
      %v2114 = vsel %vm2108, %v2081, %v1850
      %v2116 = vsel %vm2108, %v2083, %v1852
      %v2118 = vsel %vm2108, %v2085, %v1854
      %v2120 = vsel %vm2108, %v2087, %v1856
      %v2122 = vsel %vm2108, %v2089, %v1858
      %v2124 = vsel %vm2108, %v2091, %v1860
      %v2126 = vsel %vm2108, %v2093, %v1862
      %v2128 = vsel %vm2108, %v2095, %v1864
      %v2130 = vsel %vm2108, %v2097, %v1866
      %v2132 = vsel %vm2108, %v2099, %v1868
      %v2134 = vsel %vm2108, %v2101, %v1870
      %v2136 = vsel %vm2108, %v2103, %v1872
      %v2138 = vsel %vm2108, %v2105, %v1874
      %v2140 = vsel %vm2108, %v2107, %v1876
      %v2141 = vld [vmem:[%s1] sm:$0xf]
      %v2142 = vld [vmem:[%s1 + $0x4] sm:$0xf]
      %v2143 = vld [vmem:[%s1 + $0x8] sm:$0xf]
      %v2144 = vld [vmem:[%s1 + $0xc] sm:$0xf]
      %v2145 = vld [vmem:[%s1 + $0x10] sm:$0x3]
      %v2151 = vunpack.c.l.b16 %v2141
      %v2152 = vunpack.c.l.b16 %v2142
      %v2153 = vunpack.c.l.b16 %v2143
      %v2154 = vunpack.c.l.b16 %v2144
      %v2155 = vunpack.c.l.b16 %v2145
      %v2156 = vpack.c.b16 %v2152, %v2151
      %v2157 = vpack.c.b16 %v2154, %v2153
      %v2158 = vpack.c.b16 %v2155, %v2155
      %vm2161 = vcmask 293888
      %v2162 = vsel %vm2161, %v2110, 0
      %v2164 = vsel %vm2161, %v2112, 0
      %v2166 = vsel %vm2161, %v2114, 0
      %v2168 = vsel %vm2161, %v2116, 0
      %v2170 = vsel %vm2161, %v2118, 0
      %v2172 = vsel %vm2161, %v2120, 0
      %v2174 = vsel %vm2161, %v2122, 0
      %v2176 = vsel %vm2161, %v2124, 0
      %v2178 = vsel %vm2161, %v2126, 0
      %v2180 = vsel %vm2161, %v2128, 0
      %v2182 = vsel %vm2161, %v2130, 0
      %v2184 = vsel %vm2161, %v2132, 0
      %v2186 = vsel %vm2161, %v2134, 0
      %v2188 = vsel %vm2161, %v2136, 0
      %v2190 = vsel %vm2161, %v2138, 0
      %v2192 = vsel %vm2161, %v2140, 0
      %vm2194 = vcmask 1041408
      %v2196 = vsel %vm2194, %v2158, 0
      %2198 = vmatprep.subr.bf16.mxu0 0
      %2199 = vmatpush1.bf16.msra.mxu0 0
      %2200 = vmatprep.subr.bf16.mxu0 0
      %2201 = vmatpush1.bf16.msra.mxu0 0
      %2202 = vmatprep.subr.bf16.mxu0 0
      %2203 = vmatpush1.bf16.msra.mxu0 0
      %2204 = vmatprep.subr.bf16.mxu0 0
      %2205 = vmatpush1.bf16.msra.mxu0 0
      %2206 = vmatprep.subr.bf16.mxu0 0
      %2207 = vmatpush1.bf16.msra.mxu0 0
      %2208 = vmatprep.subr.bf16.mxu0 0
      %2209 = vmatpush1.bf16.msra.mxu0 %v2196
      %2210 = vmatprep.subr.bf16.mxu0 0
      %2211 = vmatpush1.bf16.msra.mxu0 %v2157
      %2212 = vmatprep.subr.bf16.mxu0 0
      %2213 = vmatpush1.bf16.msra.mxu0 %v2156
      %2214 = vmatprep.subr.bf16.mxu0 0
      %2215 = vmatpush2.bf16.msra.mxu0 0
      %2216 = vmatprep.subr.bf16.mxu0 0
      %2217 = vmatpush2.bf16.msra.mxu0 0
      %2218 = vmatprep.subr.bf16.mxu0 0
      %2219 = vmatpush2.bf16.msra.mxu0 0
      %2220 = vmatprep.subr.bf16.mxu0 0
      %2221 = vmatpush2.bf16.msra.mxu0 0
      %2222 = vmatprep.subr.bf16.mxu0 0
      %2223 = vmatpush2.bf16.msra.mxu0 0
      %2224 = vmatprep.subr.bf16.mxu0 0
      %2225 = vmatpush2.bf16.msra.mxu0 0
      %2226 = vmatprep.subr.bf16.mxu0 0
      %2227 = vmatpush2.bf16.msra.mxu0 0
      %2228 = vmatprep.subr.bf16.mxu0 0
      %2229 = vmatpush2.bf16.msra.mxu0 0
      %2230 = vmatprep.mubr.bf16.mxu0 0
      %2231 = vmatmul.mubr.bf16.gmra.mxu0 %v2162
      %v2232 = vpop.f32.mrf.mxu0
      %v2233 = vadd.f32 0.0, %v2232
      %v2234 = vpop.f32.mrf.mxu0
      %v2235 = vpop.f32.mrf.mxu0
      %v2236 = vadd.f32 0.0, %v2235
      %v2237 = vpop.f32.mrf.mxu0
      %2238 = vmatprep.mubr.bf16.mxu0 0
      %2239 = vmatmul.mubr.bf16.gmra.mxu0 %v2164
      %v2240 = vpop.f32.mrf.mxu0
      %v2241 = vadd.f32 0.0, %v2240
      %v2242 = vpop.f32.mrf.mxu0
      %v2243 = vpop.f32.mrf.mxu0
      %v2244 = vadd.f32 0.0, %v2243
      %v2245 = vpop.f32.mrf.mxu0
      %2246 = vmatprep.mubr.bf16.mxu0 0
      %2247 = vmatmul.mubr.bf16.gmra.mxu0 %v2166
      %v2248 = vpop.f32.mrf.mxu0
      %v2249 = vadd.f32 0.0, %v2248
      %v2250 = vpop.f32.mrf.mxu0
      %v2251 = vpop.f32.mrf.mxu0
      %v2252 = vadd.f32 0.0, %v2251
      %v2253 = vpop.f32.mrf.mxu0
      %2254 = vmatprep.mubr.bf16.mxu0 0
      %2255 = vmatmul.mubr.bf16.gmra.mxu0 %v2168
      %v2256 = vpop.f32.mrf.mxu0
      %v2257 = vadd.f32 0.0, %v2256
      %v2258 = vpop.f32.mrf.mxu0
      %v2259 = vpop.f32.mrf.mxu0
      %v2260 = vadd.f32 0.0, %v2259
      %v2261 = vpop.f32.mrf.mxu0
      %2262 = vmatprep.mubr.bf16.mxu0 0
      %2263 = vmatmul.mubr.bf16.gmra.mxu0 %v2170
      %v2264 = vpop.f32.mrf.mxu0
      %v2265 = vadd.f32 0.0, %v2264
      %v2266 = vpop.f32.mrf.mxu0
      %v2267 = vpop.f32.mrf.mxu0
      %v2268 = vadd.f32 0.0, %v2267
      %v2269 = vpop.f32.mrf.mxu0
      %2270 = vmatprep.mubr.bf16.mxu0 0
      %2271 = vmatmul.mubr.bf16.gmra.mxu0 %v2172
      %v2272 = vpop.f32.mrf.mxu0
      %v2273 = vadd.f32 0.0, %v2272
      %v2274 = vpop.f32.mrf.mxu0
      %v2275 = vpop.f32.mrf.mxu0
      %v2276 = vadd.f32 0.0, %v2275
      %v2277 = vpop.f32.mrf.mxu0
      %2278 = vmatprep.mubr.bf16.mxu0 0
      %2279 = vmatmul.mubr.bf16.gmra.mxu0 %v2174
      %v2280 = vpop.f32.mrf.mxu0
      %v2281 = vadd.f32 0.0, %v2280
      %v2282 = vpop.f32.mrf.mxu0
      %v2283 = vpop.f32.mrf.mxu0
      %v2284 = vadd.f32 0.0, %v2283
      %v2285 = vpop.f32.mrf.mxu0
      %2286 = vmatprep.mubr.bf16.mxu0 0
      %2287 = vmatmul.mubr.bf16.gmra.mxu0 %v2176
      %v2288 = vpop.f32.mrf.mxu0
      %v2289 = vadd.f32 0.0, %v2288
      %v2290 = vpop.f32.mrf.mxu0
      %v2291 = vpop.f32.mrf.mxu0
      %v2292 = vadd.f32 0.0, %v2291
      %v2293 = vpop.f32.mrf.mxu0
      %2294 = vmatprep.mubr.bf16.mxu0 0
      %2295 = vmatmul.mubr.bf16.gmra.mxu0 %v2178
      %v2296 = vpop.f32.mrf.mxu0
      %v2297 = vadd.f32 0.0, %v2296
      %v2298 = vpop.f32.mrf.mxu0
      %v2299 = vpop.f32.mrf.mxu0
      %v2300 = vadd.f32 0.0, %v2299
      %v2301 = vpop.f32.mrf.mxu0
      %2302 = vmatprep.mubr.bf16.mxu0 0
      %2303 = vmatmul.mubr.bf16.gmra.mxu0 %v2180
      %v2304 = vpop.f32.mrf.mxu0
      %v2305 = vadd.f32 0.0, %v2304
      %v2306 = vpop.f32.mrf.mxu0
      %v2307 = vpop.f32.mrf.mxu0
      %v2308 = vadd.f32 0.0, %v2307
      %v2309 = vpop.f32.mrf.mxu0
      %2310 = vmatprep.mubr.bf16.mxu0 0
      %2311 = vmatmul.mubr.bf16.gmra.mxu0 %v2182
      %v2312 = vpop.f32.mrf.mxu0
      %v2313 = vadd.f32 0.0, %v2312
      %v2314 = vpop.f32.mrf.mxu0
      %v2315 = vpop.f32.mrf.mxu0
      %v2316 = vadd.f32 0.0, %v2315
      %v2317 = vpop.f32.mrf.mxu0
      %2318 = vmatprep.mubr.bf16.mxu0 0
      %2319 = vmatmul.mubr.bf16.gmra.mxu0 %v2184
      %v2320 = vpop.f32.mrf.mxu0
      %v2321 = vadd.f32 0.0, %v2320
      %v2322 = vpop.f32.mrf.mxu0
      %v2323 = vpop.f32.mrf.mxu0
      %v2324 = vadd.f32 0.0, %v2323
      %v2325 = vpop.f32.mrf.mxu0
      %2326 = vmatprep.mubr.bf16.mxu0 0
      %2327 = vmatmul.mubr.bf16.gmra.mxu0 %v2186
      %v2328 = vpop.f32.mrf.mxu0
      %v2329 = vadd.f32 0.0, %v2328
      %v2330 = vpop.f32.mrf.mxu0
      %v2331 = vpop.f32.mrf.mxu0
      %v2332 = vadd.f32 0.0, %v2331
      %v2333 = vpop.f32.mrf.mxu0
      %2334 = vmatprep.mubr.bf16.mxu0 0
      %2335 = vmatmul.mubr.bf16.gmra.mxu0 %v2188
      %v2336 = vpop.f32.mrf.mxu0
      %v2337 = vadd.f32 0.0, %v2336
      %v2338 = vpop.f32.mrf.mxu0
      %v2339 = vpop.f32.mrf.mxu0
      %v2340 = vadd.f32 0.0, %v2339
      %v2341 = vpop.f32.mrf.mxu0
      %2342 = vmatprep.mubr.bf16.mxu0 0
      %2343 = vmatmul.mubr.bf16.gmra.mxu0 %v2190
      %v2344 = vpop.f32.mrf.mxu0
      %v2345 = vadd.f32 0.0, %v2344
      %v2346 = vpop.f32.mrf.mxu0
      %v2347 = vpop.f32.mrf.mxu0
      %v2348 = vadd.f32 0.0, %v2347
      %v2349 = vpop.f32.mrf.mxu0
      %2350 = vmatprep.mubr.bf16.mxu0 0
      %2351 = vmatmul.mubr.bf16.gmra.mxu0 %v2192
      %v2352 = vpop.f32.mrf.mxu0
      %v2353 = vadd.f32 0.0, %v2352
      %v2354 = vpop.f32.mrf.mxu0
      %v2355 = vpop.f32.mrf.mxu0
      %v2356 = vadd.f32 0.0, %v2355
      %v2357 = vpop.f32.mrf.mxu0
      %2358 = vdwg.mxu0
      %v2359 = vsel %vm2108, %v2233, 0.0
      %v2360 = vsel %vm2108, %v2236, 0.0
      %v2361 = vadd.f32 %v2359, %v2360
      %v2362 = vsel %vm2108, %v2241, 0.0
      %v2363 = vadd.f32 %v2361, %v2362
      %v2364 = vsel %vm2108, %v2244, 0.0
      %v2365 = vadd.f32 %v2363, %v2364
      %v2366 = vsel %vm2108, %v2249, 0.0
      %v2367 = vadd.f32 %v2365, %v2366
      %v2368 = vsel %vm2108, %v2252, 0.0
      %v2369 = vadd.f32 %v2367, %v2368
      %v2370 = vsel %vm2108, %v2257, 0.0
      %v2371 = vadd.f32 %v2369, %v2370
      %v2372 = vsel %vm2108, %v2260, 0.0
      %v2373 = vadd.f32 %v2371, %v2372
      %v2374 = vsel %vm2108, %v2265, 0.0
      %v2375 = vadd.f32 %v2373, %v2374
      %v2376 = vsel %vm2108, %v2268, 0.0
      %v2377 = vadd.f32 %v2375, %v2376
      %v2378 = vsel %vm2108, %v2273, 0.0
      %v2379 = vadd.f32 %v2377, %v2378
      %v2380 = vsel %vm2108, %v2276, 0.0
      %v2381 = vadd.f32 %v2379, %v2380
      %v2382 = vsel %vm2108, %v2281, 0.0
      %v2383 = vadd.f32 %v2381, %v2382
      %v2384 = vsel %vm2108, %v2284, 0.0
      %v2385 = vadd.f32 %v2383, %v2384
      %v2386 = vsel %vm2108, %v2289, 0.0
      %v2387 = vadd.f32 %v2385, %v2386
      %v2388 = vsel %vm2108, %v2292, 0.0
      %v2389 = vadd.f32 %v2387, %v2388
      %v2390 = vsel %vm2108, %v2297, 0.0
      %v2391 = vadd.f32 %v2389, %v2390
      %v2392 = vsel %vm2108, %v2300, 0.0
      %v2393 = vadd.f32 %v2391, %v2392
      %v2394 = vsel %vm2108, %v2305, 0.0
      %v2395 = vadd.f32 %v2393, %v2394
      %v2396 = vsel %vm2108, %v2308, 0.0
      %v2397 = vadd.f32 %v2395, %v2396
      %v2398 = vsel %vm2108, %v2313, 0.0
      %v2399 = vadd.f32 %v2397, %v2398
      %v2400 = vsel %vm2108, %v2316, 0.0
      %v2401 = vadd.f32 %v2399, %v2400
      %v2402 = vsel %vm2108, %v2321, 0.0
      %v2403 = vadd.f32 %v2401, %v2402
      %v2404 = vsel %vm2108, %v2324, 0.0
      %v2405 = vadd.f32 %v2403, %v2404
      %v2406 = vsel %vm2108, %v2329, 0.0
      %v2407 = vadd.f32 %v2405, %v2406
      %v2408 = vsel %vm2108, %v2332, 0.0
      %v2409 = vadd.f32 %v2407, %v2408
      %v2410 = vsel %vm2108, %v2337, 0.0
      %v2411 = vadd.f32 %v2409, %v2410
      %v2412 = vsel %vm2108, %v2340, 0.0
      %v2413 = vadd.f32 %v2411, %v2412
      %v2414 = vsel %vm2108, %v2345, 0.0
      %v2415 = vadd.f32 %v2413, %v2414
      %v2416 = vsel %vm2108, %v2348, 0.0
      %v2417 = vadd.f32 %v2415, %v2416
      %v2418 = vsel %vm2108, %v2353, 0.0
      %v2419 = vadd.f32 %v2417, %v2418
      %v2420 = vsel %vm2108, %v2356, 0.0
      %v2421 = vadd.f32 %v2419, %v2420
      %v2422 = vrot.slane %v2421, 4
      %v2423 = vadd.f32 %v2421, %v2422
      %v2424 = vrot.slane %v2423, 2
      %v2425 = vadd.f32 %v2423, %v2424
      %v2426 = vrot.slane %v2425, 1
      %v2427 = vadd.f32 %v2425, %v2426
      %v2428 = vmul.f32 %v2427, 0.00390625
      %v2429 = vsub.f32 %v2233, %v2428
      %v2430 = vsub.f32 %v2236, %v2428
      %v2431 = vsub.f32 %v2241, %v2428
      %v2432 = vsub.f32 %v2244, %v2428
      %v2433 = vsub.f32 %v2249, %v2428
      %v2434 = vsub.f32 %v2252, %v2428
      %v2435 = vsub.f32 %v2257, %v2428
      %v2436 = vsub.f32 %v2260, %v2428
      %v2437 = vsub.f32 %v2265, %v2428
      %v2438 = vsub.f32 %v2268, %v2428
      %v2439 = vsub.f32 %v2273, %v2428
      %v2440 = vsub.f32 %v2276, %v2428
      %v2441 = vsub.f32 %v2281, %v2428
      %v2442 = vsub.f32 %v2284, %v2428
      %v2443 = vsub.f32 %v2289, %v2428
      %v2444 = vsub.f32 %v2292, %v2428
      %v2445 = vsub.f32 %v2297, %v2428
      %v2446 = vsub.f32 %v2300, %v2428
      %v2447 = vsub.f32 %v2305, %v2428
      %v2448 = vsub.f32 %v2308, %v2428
      %v2449 = vsub.f32 %v2313, %v2428
      %v2450 = vsub.f32 %v2316, %v2428
      %v2451 = vsub.f32 %v2321, %v2428
      %v2452 = vsub.f32 %v2324, %v2428
      %v2453 = vsub.f32 %v2329, %v2428
      %v2454 = vsub.f32 %v2332, %v2428
      %v2455 = vsub.f32 %v2337, %v2428
      %v2456 = vsub.f32 %v2340, %v2428
      %v2457 = vsub.f32 %v2345, %v2428
      %v2458 = vsub.f32 %v2348, %v2428
      %v2459 = vsub.f32 %v2353, %v2428
      %v2460 = vsub.f32 %v2356, %v2428
      %v2461 = vmul.f32 %v2429, %v2429
      %v2462 = vmul.f32 %v2430, %v2430
      %v2463 = vmul.f32 %v2431, %v2431
      %v2464 = vmul.f32 %v2432, %v2432
      %v2465 = vmul.f32 %v2433, %v2433
      %v2466 = vmul.f32 %v2434, %v2434
      %v2467 = vmul.f32 %v2435, %v2435
      %v2468 = vmul.f32 %v2436, %v2436
      %v2469 = vmul.f32 %v2437, %v2437
      %v2470 = vmul.f32 %v2438, %v2438
      %v2471 = vmul.f32 %v2439, %v2439
      %v2472 = vmul.f32 %v2440, %v2440
      %v2473 = vmul.f32 %v2441, %v2441
      %v2474 = vmul.f32 %v2442, %v2442
      %v2475 = vmul.f32 %v2443, %v2443
      %v2476 = vmul.f32 %v2444, %v2444
      %v2477 = vmul.f32 %v2445, %v2445
      %v2478 = vmul.f32 %v2446, %v2446
      %v2479 = vmul.f32 %v2447, %v2447
      %v2480 = vmul.f32 %v2448, %v2448
      %v2481 = vmul.f32 %v2449, %v2449
      %v2482 = vmul.f32 %v2450, %v2450
      %v2483 = vmul.f32 %v2451, %v2451
      %v2484 = vmul.f32 %v2452, %v2452
      %v2485 = vmul.f32 %v2453, %v2453
      %v2486 = vmul.f32 %v2454, %v2454
      %v2487 = vmul.f32 %v2455, %v2455
      %v2488 = vmul.f32 %v2456, %v2456
      %v2489 = vmul.f32 %v2457, %v2457
      %v2490 = vmul.f32 %v2458, %v2458
      %v2491 = vmul.f32 %v2459, %v2459
      %v2492 = vmul.f32 %v2460, %v2460
      %v2493 = vsel %vm2108, %v2461, 0.0
      %v2494 = vsel %vm2108, %v2462, 0.0
      %v2495 = vadd.f32 %v2493, %v2494
      %v2496 = vsel %vm2108, %v2463, 0.0
      %v2497 = vadd.f32 %v2495, %v2496
      %v2498 = vsel %vm2108, %v2464, 0.0
      %v2499 = vadd.f32 %v2497, %v2498
      %v2500 = vsel %vm2108, %v2465, 0.0
      %v2501 = vadd.f32 %v2499, %v2500
      %v2502 = vsel %vm2108, %v2466, 0.0
      %v2503 = vadd.f32 %v2501, %v2502
      %v2504 = vsel %vm2108, %v2467, 0.0
      %v2505 = vadd.f32 %v2503, %v2504
      %v2506 = vsel %vm2108, %v2468, 0.0
      %v2507 = vadd.f32 %v2505, %v2506
      %v2508 = vsel %vm2108, %v2469, 0.0
      %v2509 = vadd.f32 %v2507, %v2508
      %v2510 = vsel %vm2108, %v2470, 0.0
      %v2511 = vadd.f32 %v2509, %v2510
      %v2512 = vsel %vm2108, %v2471, 0.0
      %v2513 = vadd.f32 %v2511, %v2512
      %v2514 = vsel %vm2108, %v2472, 0.0
      %v2515 = vadd.f32 %v2513, %v2514
      %v2516 = vsel %vm2108, %v2473, 0.0
      %v2517 = vadd.f32 %v2515, %v2516
      %v2518 = vsel %vm2108, %v2474, 0.0
      %v2519 = vadd.f32 %v2517, %v2518
      %v2520 = vsel %vm2108, %v2475, 0.0
      %v2521 = vadd.f32 %v2519, %v2520
      %v2522 = vsel %vm2108, %v2476, 0.0
      %v2523 = vadd.f32 %v2521, %v2522
      %v2524 = vsel %vm2108, %v2477, 0.0
      %v2525 = vadd.f32 %v2523, %v2524
      %v2526 = vsel %vm2108, %v2478, 0.0
      %v2527 = vadd.f32 %v2525, %v2526
      %v2528 = vsel %vm2108, %v2479, 0.0
      %v2529 = vadd.f32 %v2527, %v2528
      %v2530 = vsel %vm2108, %v2480, 0.0
      %v2531 = vadd.f32 %v2529, %v2530
      %v2532 = vsel %vm2108, %v2481, 0.0
      %v2533 = vadd.f32 %v2531, %v2532
      %v2534 = vsel %vm2108, %v2482, 0.0
      %v2535 = vadd.f32 %v2533, %v2534
      %v2536 = vsel %vm2108, %v2483, 0.0
      %v2537 = vadd.f32 %v2535, %v2536
      %v2538 = vsel %vm2108, %v2484, 0.0
      %v2539 = vadd.f32 %v2537, %v2538
      %v2540 = vsel %vm2108, %v2485, 0.0
      %v2541 = vadd.f32 %v2539, %v2540
      %v2542 = vsel %vm2108, %v2486, 0.0
      %v2543 = vadd.f32 %v2541, %v2542
      %v2544 = vsel %vm2108, %v2487, 0.0
      %v2545 = vadd.f32 %v2543, %v2544
      %v2546 = vsel %vm2108, %v2488, 0.0
      %v2547 = vadd.f32 %v2545, %v2546
      %v2548 = vsel %vm2108, %v2489, 0.0
      %v2549 = vadd.f32 %v2547, %v2548
      %v2550 = vsel %vm2108, %v2490, 0.0
      %v2551 = vadd.f32 %v2549, %v2550
      %v2552 = vsel %vm2108, %v2491, 0.0
      %v2553 = vadd.f32 %v2551, %v2552
      %v2554 = vsel %vm2108, %v2492, 0.0
      %v2555 = vadd.f32 %v2553, %v2554
      %v2556 = vrot.slane %v2555, 4
      %v2557 = vadd.f32 %v2555, %v2556
      %v2558 = vrot.slane %v2557, 2
      %v2559 = vadd.f32 %v2557, %v2558
      %v2560 = vrot.slane %v2559, 1
      %v2561 = vadd.f32 %v2559, %v2560
      %vm2562 = vcmask 253952
      %2563 = vst.msk [vmem:[%s172] sm:$0x1] %vm2562, %v2427
      %2564 = vst.msk [vmem:[%s175] sm:$0x1] %vm2562, %v2561
      %p2565 = scmp.lt.s32.totalorder %s15, 1
      %s2566 = scalar_select %p2565, %s15, 1
      %s2567 = scalar_lea.vmem %s2, %s2566
      %p2568 = scmp.lt.s32.totalorder %s15, 1
      %s2569 = scalar_select %p2568, %s15, 1
      %s2570 = scalar_lea.vmem %s3, %s2569
      // Predicated region
      $region29: #{unet_up_conv.2} parent=27 // pred_check
        %p2571 = pneg %p80
      $region30: #{unet_up_conv.2} parent=27 // pred_check_branch
        %2573 = sbr.rel (%p2571) target = $region32
      $region31: #{unet_up_conv.2} parent=27 // pred_region
        _
      $region32: #{unet_up_conv.2} parent=27 // pred_fallthru
        _
      // Predicated region
      $region33: #{unet_up_conv.2} parent=27 // pred_check
        %p2574 = pneg %p106
      $region34: #{unet_up_conv.2} parent=27 // pred_check_branch
        %2576 = sbr.rel (%p2574) target = $region36
      $region35: #{unet_up_conv.2} parent=27 // pred_region
        _
      $region36: #{unet_up_conv.2} parent=27 // pred_fallthru
        _
    $region28: #{unet_up_conv.2} parent=5 // pred_fallthru
      _
    %p2577 = scmp.le.s32.totalorder 2, %s10
    // Predicated region
    $region37: #{unet_up_conv.2} parent=5 // pred_check
      %p2578 = pneg %p2577
    $region38: #{unet_up_conv.2} parent=5 // pred_check_branch
      %2580 = sbr.rel (%p2578) target = $region40
    $region39: #{unet_up_conv.2} parent=5 // pred_region
      %s2581 = ssub.s32 %s10, 2
      // Predicated region
      $region41: #{unet_up_conv.2} parent=39 // pred_check
        %p2582 = pneg %p86
      $region42: #{unet_up_conv.2} parent=39 // pred_check_branch
        %2584 = sbr.rel (%p2582) target = $region44
      $region43: #{unet_up_conv.2} parent=39 // pred_region
        %p2585 = scmp.lt.s32.totalorder %s16, 1
        %s2586 = scalar_select %p2585, %s16, 1
        %s2587 = scalar_lea.vmem %s2, %s2586
      $region44: #{unet_up_conv.2} parent=39 // pred_fallthru
        _
      // Predicated region
      $region45: #{unet_up_conv.2} parent=39 // pred_check
        %p2588 = pneg %p112
      $region46: #{unet_up_conv.2} parent=39 // pred_check_branch
        %2590 = sbr.rel (%p2588) target = $region48
      $region47: #{unet_up_conv.2} parent=39 // pred_region
        %p2591 = scmp.lt.s32.totalorder %s16, 1
        %s2592 = scalar_select %p2591, %s16, 1
        %s2593 = scalar_lea.vmem %s3, %s2592
      $region48: #{unet_up_conv.2} parent=39 // pred_fallthru
        _
    $region40: #{unet_up_conv.2} parent=5 // pred_fallthru
      _
  $region6: #{unet_up_conv.2} parent=0 // loop_footer
    %s14 = sadd.s32 1, %s10
  $region7: #{unet_up_conv.2} parent=0 // loop_footer_branch
    %9 = sbr.rel target = $region3
  $region8: #{unet_up_conv.2} parent=0 // loop_exit
    _

// kernel: unet_up_conv.3
$region0: #{unet_up_conv.3}
  #allocation0 [shape = 'u32[]', space=smem, size = 0x4, offset = 0x4, fixed_abs, tag = 'smem constant byte address 0x4 - core index']
  #allocation1 [shape = 'u32[144,128]{1,0:T(1,128)}', space=vmem, size = 0x12000, scoped, tag = 'internal scratch']
  %s0 = inlined_call_operand.vmem [shape: bf16[2,18,18,4], index: 0, kind: input, shape index: {}]
  %s1 = inlined_call_operand.vmem [shape: bf16[36,32], index: 1, kind: input, shape index: {}]
  %s2 = inlined_call_operand.vmem [shape: f32[1,32], index: 2, kind: input, shape index: {}]
  %s3 = inlined_call_operand.vmem [shape: f32[1,32], index: 3, kind: input, shape index: {}]
  %s4 = inlined_call_operand.vmem [shape: f32[2,256,32], index: 4, kind: output, shape index: {}]
  %s5 = sld [smem:[#allocation0]]
  $region49: #{unet_up_conv.3} parent=0
    _
  %s7 = ssub.s32 1, %s5
  %s8 = scalar_select 0, %s7, %s5
  loop: start=0, step=1, limit=4
  $region2: #{unet_up_conv.3} parent=0 // loop_pre_header
    _
  $region3: #{unet_up_conv.3} parent=0 // loop_header
    %s10 = sphi 0, %s14
    %p11 = scmp.ge.s32.totalorder %s10, 4
    %s20 = sphi 0, %s22
    %s23 = sphi 0, %s20
    %s24 = sphi 0, %s23
    %s40 = sphi 0, %s24
    %s44 = sphi 0, %s44
    %s46 = sphi 0, %s44
    %s47 = sphi 0, %s46
    %s61 = sphi 0, %s47
    %s65 = sphi 0, %s65
    %s67 = sphi 0, %s65
    %s68 = sphi 0, %s67
    %s82 = sphi 0, %s68
    %s86 = sphi 0, %s86
    %s88 = sphi 0, %s86
    %s89 = sphi 0, %s88
    %s103 = sphi 0, %s89
    %s109 = sphi 0, %s111
    %s112 = sphi 0, %s109
    %s113 = sphi 0, %s112
    %s129 = sphi 0, %s113
  $region4: #{unet_up_conv.3} parent=0 // loop_header_branch
    %13 = sbr.rel (%p11) target = $region8
  $region5: #{unet_up_conv.3} parent=0 // loop_body
    %s15 = ssub.s32 %s10, 1
    %s16 = ssub.s32 %s10, 2
    %s17 = sadd.s32 %s10, 1
    %s18 = ssub.s32 %s10, %s17
    %p19 = scmp.eq.s32.totalorder %s18, 0
    %s21 = sadd.s32 %s20, 1
    %s22 = scalar_select %p19, %s20, %s21
    %p25 = pneg %p19
    %p26 = scmp.eq.s32.totalorder %s10, 1
    %p27 = por %p25, %p26
    %p28 = scmp.ne.s32.totalorder %s20, %s23
    %p29 = scmp.eq.s32.totalorder %s10, 0
    %p30 = por %p28, %p29
    %p31 = scmp.ne.s32.totalorder %s20, %s23
    %p32 = scmp.eq.s32.totalorder %s15, 1
    %p33 = por %p31, %p32
    %p34 = scmp.ne.s32.totalorder %s23, %s24
    %p35 = scmp.eq.s32.totalorder %s15, 0
    %p36 = por %p34, %p35
    %p37 = scmp.ne.s32.totalorder %s23, %s24
    %p38 = scmp.eq.s32.totalorder %s16, 1
    %p39 = por %p37, %p38
    %p41 = scmp.ne.s32.totalorder %s24, %s40
    %p42 = scmp.eq.s32.totalorder %s16, 0
    %p43 = por %p41, %p42
    %s45 = sadd.s32 %s44, 1
    %p48 = scmp.eq.s32.totalorder %s10, 1
    %p49 = scmp.ne.s32.totalorder %s44, %s46
    %p50 = scmp.eq.s32.totalorder %s10, 0
    %p51 = por %p49, %p50
    %p52 = scmp.ne.s32.totalorder %s44, %s46
    %p53 = scmp.eq.s32.totalorder %s15, 1
    %p54 = por %p52, %p53
    %p55 = scmp.ne.s32.totalorder %s46, %s47
    %p56 = scmp.eq.s32.totalorder %s15, 0
    %p57 = por %p55, %p56
    %p58 = scmp.ne.s32.totalorder %s46, %s47
    %p59 = scmp.eq.s32.totalorder %s16, 1
    %p60 = por %p58, %p59
    %p62 = scmp.ne.s32.totalorder %s47, %s61
    %p63 = scmp.eq.s32.totalorder %s16, 0
    %p64 = por %p62, %p63
    %s66 = sadd.s32 %s65, 1
    %p69 = scmp.eq.s32.totalorder %s10, 1
    %p70 = scmp.ne.s32.totalorder %s65, %s67
    %p71 = scmp.eq.s32.totalorder %s10, 0
    %p72 = por %p70, %p71
    %p73 = scmp.ne.s32.totalorder %s65, %s67
    %p74 = scmp.eq.s32.totalorder %s15, 1
    %p75 = por %p73, %p74
    %p76 = scmp.ne.s32.totalorder %s67, %s68
    %p77 = scmp.eq.s32.totalorder %s15, 0
    %p78 = por %p76, %p77
    %p79 = scmp.ne.s32.totalorder %s67, %s68
    %p80 = scmp.eq.s32.totalorder %s16, 1
    %p81 = por %p79, %p80
    %p83 = scmp.ne.s32.totalorder %s68, %s82
    %p84 = scmp.eq.s32.totalorder %s16, 0
    %p85 = por %p83, %p84
    %s87 = sadd.s32 %s86, 1
    %p90 = scmp.eq.s32.totalorder %s10, 1
    %p91 = scmp.ne.s32.totalorder %s86, %s88
    %p92 = scmp.eq.s32.totalorder %s10, 0
    %p93 = por %p91, %p92
    %p94 = scmp.ne.s32.totalorder %s86, %s88
    %p95 = scmp.eq.s32.totalorder %s15, 1
    %p96 = por %p94, %p95
    %p97 = scmp.ne.s32.totalorder %s88, %s89
    %p98 = scmp.eq.s32.totalorder %s15, 0
    %p99 = por %p97, %p98
    %p100 = scmp.ne.s32.totalorder %s88, %s89
    %p101 = scmp.eq.s32.totalorder %s16, 1
    %p102 = por %p100, %p101
    %p104 = scmp.ne.s32.totalorder %s89, %s103
    %p105 = scmp.eq.s32.totalorder %s16, 0
    %p106 = por %p104, %p105
    %s107 = ssub.s32 %s10, %s17
    %p108 = scmp.eq.s32.totalorder %s107, 0
    %s110 = sadd.s32 %s109, 1
    %s111 = scalar_select %p108, %s109, %s110
    %p114 = pneg %p108
    %p115 = scmp.eq.s32.totalorder %s10, 1
    %p116 = por %p114, %p115
    %p117 = scmp.ne.s32.totalorder %s109, %s112
    %p118 = scmp.eq.s32.totalorder %s10, 0
    %p119 = por %p117, %p118
    %p120 = scmp.ne.s32.totalorder %s109, %s112
    %p121 = scmp.eq.s32.totalorder %s15, 1
    %p122 = por %p120, %p121
    %p123 = scmp.ne.s32.totalorder %s112, %s113
    %p124 = scmp.eq.s32.totalorder %s15, 0
    %p125 = por %p123, %p124
    %p126 = scmp.ne.s32.totalorder %s112, %s113
    %p127 = scmp.eq.s32.totalorder %s16, 1
    %p128 = por %p126, %p127
    %p130 = scmp.ne.s32.totalorder %s113, %s129
    %p131 = scmp.eq.s32.totalorder %s16, 0
    %p132 = por %p130, %p131
    %p133 = scmp.le.s32.totalorder 1, %s10
    %p134 = scmp.lt.s32.totalorder %s10, 3
    %p135 = pnand %p133, %p134
    %p136 = pneg %p135
    // Predicated region
    $region9: #{unet_up_conv.3} parent=5 // pred_check
      _
    $region10: #{unet_up_conv.3} parent=5 // pred_check_branch
      %138 = sbr.rel (%p135) target = $region12
    $region11: #{unet_up_conv.3} parent=5 // pred_region
      %s139 = ssub.s32 %s10, 1
      // Predicated region
      $region13: #{unet_up_conv.3} parent=11 // pred_check
        %p140 = pneg %p57
      $region14: #{unet_up_conv.3} parent=11 // pred_check_branch
        %142 = sbr.rel (%p140) target = $region16
      $region15: #{unet_up_conv.3} parent=11 // pred_region
        _
      $region16: #{unet_up_conv.3} parent=11 // pred_fallthru
        _
      // Predicated region
      $region17: #{unet_up_conv.3} parent=11 // pred_check
        %p143 = pneg %p78
      $region18: #{unet_up_conv.3} parent=11 // pred_check_branch
        %145 = sbr.rel (%p143) target = $region20
      $region19: #{unet_up_conv.3} parent=11 // pred_region
        _
      $region20: #{unet_up_conv.3} parent=11 // pred_fallthru
        _
      // Predicated region
      $region21: #{unet_up_conv.3} parent=11 // pred_check
        %p146 = pneg %p99
      $region22: #{unet_up_conv.3} parent=11 // pred_check_branch
        %148 = sbr.rel (%p146) target = $region24
      $region23: #{unet_up_conv.3} parent=11 // pred_region
        _
      $region24: #{unet_up_conv.3} parent=11 // pred_fallthru
        _
    $region12: #{unet_up_conv.3} parent=5 // pred_fallthru
      _
    %p149 = scmp.lt.s32.totalorder %s10, 2
    // Predicated region
    $region25: #{unet_up_conv.3} parent=5 // pred_check
      %p150 = pneg %p149
    $region26: #{unet_up_conv.3} parent=5 // pred_check_branch
      %152 = sbr.rel (%p150) target = $region28
    $region27: #{unet_up_conv.3} parent=5 // pred_region
      // Predicated region
      $region29: #{unet_up_conv.3} parent=27 // pred_check
        %p153 = pneg %p30
      $region30: #{unet_up_conv.3} parent=27 // pred_check_branch
        %155 = sbr.rel (%p153) target = $region32
      $region31: #{unet_up_conv.3} parent=27 // pred_region
        %p156 = scmp.lt.s32.totalorder %s10, 1
        %s157 = scalar_select %p156, %s10, 1
        %s158 = smul.addr %s157, 54
        %s159 = smul.addr %s158, 4
        %s160 = scalar_lea.vmem %s0, %s159
      $region32: #{unet_up_conv.3} parent=27 // pred_fallthru
        _
    $region28: #{unet_up_conv.3} parent=5 // pred_fallthru
      _
    %p161 = scmp.le.s32.totalorder 1, %s10
    %p162 = scmp.lt.s32.totalorder %s10, 3
    %p163 = pnand %p161, %p162
    %p164 = pneg %p163
    // Predicated region
    $region33: #{unet_up_conv.3} parent=5 // pred_check
      _
    $region34: #{unet_up_conv.3} parent=5 // pred_check_branch
      %166 = sbr.rel (%p163) target = $region36
    $region35: #{unet_up_conv.3} parent=5 // pred_region
      %s167 = ssub.s32 %s10, 1
      %p168 = scmp.lt.s32.totalorder %s15, 1
      %s169 = scalar_select %p168, %s15, 1
      %s170 = smul.addr %s169, 54
      %s171 = smul.addr %s170, 4
      %s172 = scalar_lea.vmem %s0, %s171
      %p173 = pneg %p36
      %p174 = pneg %p33
      %p175 = pneg %p57
      %p176 = pneg %p54
      %p177 = pneg %p78
      %p178 = pneg %p75
      %p179 = pneg %p99
      %p180 = pneg %p96
      %p181 = pneg %p125
      %p182 = pneg %p122
      %p183 = scmp.lt.s32.totalorder %s15, 1
      %s184 = scalar_select %p183, %s15, 1
      %s185 = smul.addr %s184, 32
      %s186 = smul.addr %s185, 8
      %s187 = scalar_lea.vmem %s4, %s186
      %p188 = scmp.lt.s32.totalorder %s15, 1
      %s189 = scalar_select %p188, %s15, 1
      %s190 = smul.addr %s189, 54
      %s191 = smul.addr %s190, 4
      %s192 = scalar_lea.vmem %s0, %s191
      %p193 = scmp.lt.s32.totalorder %s15, 1
      %s194 = scalar_select %p193, %s15, 1
      %s195 = smul.addr %s194, 32
      %s196 = smul.addr %s195, 8
      %s197 = scalar_lea.vmem %s4, %s196
      %v199 = vld [vmem:[%s192] sm:$0xf]
      %v200 = vld [vmem:[%s192 + $0x4] sm:$0xf]
      %v201 = vld [vmem:[%s192 + $0xc] sm:$0xf]
      %v202 = vld [vmem:[%s192 + $0x10] sm:$0xf]
      %v203 = vld [vmem:[%s192 + $0x18] sm:$0xf]
      %v204 = vld [vmem:[%s192 + $0x1c] sm:$0xf]
      %v205 = vld [vmem:[%s192 + $0x24] sm:$0xf]
      %v206 = vld [vmem:[%s192 + $0x28] sm:$0xf]
      %v207 = vld [vmem:[%s192 + $0x30] sm:$0xf]
      %v208 = vld [vmem:[%s192 + $0x34] sm:$0xf]
      %v209 = vld [vmem:[%s192 + $0x3c] sm:$0xf]
      %v210 = vld [vmem:[%s192 + $0x40] sm:$0xf]
      %v211 = vld [vmem:[%s192 + $0x48] sm:$0xf]
      %v212 = vld [vmem:[%s192 + $0x4c] sm:$0xf]
      %v213 = vld [vmem:[%s192 + $0x54] sm:$0xf]
      %v214 = vld [vmem:[%s192 + $0x58] sm:$0xf]
      %v215 = vld [vmem:[%s192 + $0x60] sm:$0xf]
      %v216 = vld [vmem:[%s192 + $0x64] sm:$0xf]
      %v217 = vld [vmem:[%s192 + $0x6c] sm:$0xf]
      %v218 = vld [vmem:[%s192 + $0x70] sm:$0xf]
      %v219 = vld [vmem:[%s192 + $0x78] sm:$0xf]
      %v220 = vld [vmem:[%s192 + $0x7c] sm:$0xf]
      %v221 = vld [vmem:[%s192 + $0x84] sm:$0xf]
      %v222 = vld [vmem:[%s192 + $0x88] sm:$0xf]
      %v223 = vld [vmem:[%s192 + $0x90] sm:$0xf]
      %v224 = vld [vmem:[%s192 + $0x94] sm:$0xf]
      %v225 = vld [vmem:[%s192 + $0x9c] sm:$0xf]
      %v226 = vld [vmem:[%s192 + $0xa0] sm:$0xf]
      %v227 = vld [vmem:[%s192 + $0xa8] sm:$0xf]
      %v228 = vld [vmem:[%s192 + $0xac] sm:$0xf]
      %v229 = vld [vmem:[%s192 + $0xb4] sm:$0xf]
      %v230 = vld [vmem:[%s192 + $0xb8] sm:$0xf]
      %v231 = vld [vmem:[%s192 + $0x8] sm:$0x1]
      %v232 = vld [vmem:[%s192 + $0x14] sm:$0x1]
      %v233 = vld [vmem:[%s192 + $0x20] sm:$0x1]
      %v234 = vld [vmem:[%s192 + $0x2c] sm:$0x1]
      %v235 = vld [vmem:[%s192 + $0x38] sm:$0x1]
      %v236 = vld [vmem:[%s192 + $0x44] sm:$0x1]
      %v237 = vld [vmem:[%s192 + $0x50] sm:$0x1]
      %v238 = vld [vmem:[%s192 + $0x5c] sm:$0x1]
      %v239 = vld [vmem:[%s192 + $0x68] sm:$0x1]
      %v240 = vld [vmem:[%s192 + $0x74] sm:$0x1]
      %v241 = vld [vmem:[%s192 + $0x80] sm:$0x1]
      %v242 = vld [vmem:[%s192 + $0x8c] sm:$0x1]
      %v243 = vld [vmem:[%s192 + $0x98] sm:$0x1]
      %v244 = vld [vmem:[%s192 + $0xa4] sm:$0x1]
      %v245 = vld [vmem:[%s192 + $0xb0] sm:$0x1]
      %v246 = vld [vmem:[%s192 + $0xbc] sm:$0x1]
      %v247 = vld [vmem:[%s192] sm:$0xe]
      %v248 = vld [vmem:[%s192 + $0xc] sm:$0xe]
      %v249 = vld [vmem:[%s192 + $0x18] sm:$0xe]
      %v250 = vld [vmem:[%s192 + $0x24] sm:$0xe]
      %v251 = vld [vmem:[%s192 + $0x30] sm:$0xe]
      %v252 = vld [vmem:[%s192 + $0x3c] sm:$0xe]
      %v253 = vld [vmem:[%s192 + $0x48] sm:$0xe]
      %v254 = vld [vmem:[%s192 + $0x54] sm:$0xe]
      %v255 = vld [vmem:[%s192 + $0x60] sm:$0xe]
      %v256 = vld [vmem:[%s192 + $0x6c] sm:$0xe]
      %v257 = vld [vmem:[%s192 + $0x78] sm:$0xe]
      %v258 = vld [vmem:[%s192 + $0x84] sm:$0xe]
      %v259 = vld [vmem:[%s192 + $0x90] sm:$0xe]
      %v260 = vld [vmem:[%s192 + $0x9c] sm:$0xe]
      %v261 = vld [vmem:[%s192 + $0xa8] sm:$0xe]
      %v262 = vld [vmem:[%s192 + $0xb4] sm:$0xe]
      %s263 = scalar_lea.vmem %s192, 12
      %v264 = vld [vmem:[%s263] sm:$0xf]
      %v265 = vld [vmem:[%s263 + $0x4] sm:$0xf]
      %v266 = vld [vmem:[%s263 + $0xc] sm:$0xf]
      %v267 = vld [vmem:[%s263 + $0x10] sm:$0xf]
      %v268 = vld [vmem:[%s263 + $0x18] sm:$0xf]
      %v269 = vld [vmem:[%s263 + $0x1c] sm:$0xf]
      %v270 = vld [vmem:[%s263 + $0x24] sm:$0xf]
      %v271 = vld [vmem:[%s263 + $0x28] sm:$0xf]
      %v272 = vld [vmem:[%s263 + $0x30] sm:$0xf]
      %v273 = vld [vmem:[%s263 + $0x34] sm:$0xf]
      %v274 = vld [vmem:[%s263 + $0x3c] sm:$0xf]
      %v275 = vld [vmem:[%s263 + $0x40] sm:$0xf]
      %v276 = vld [vmem:[%s263 + $0x48] sm:$0xf]
      %v277 = vld [vmem:[%s263 + $0x4c] sm:$0xf]
      %v278 = vld [vmem:[%s263 + $0x54] sm:$0xf]
      %v279 = vld [vmem:[%s263 + $0x58] sm:$0xf]
      %v280 = vld [vmem:[%s263 + $0x60] sm:$0xf]
      %v281 = vld [vmem:[%s263 + $0x64] sm:$0xf]
      %v282 = vld [vmem:[%s263 + $0x6c] sm:$0xf]
      %v283 = vld [vmem:[%s263 + $0x70] sm:$0xf]
      %v284 = vld [vmem:[%s263 + $0x78] sm:$0xf]
      %v285 = vld [vmem:[%s263 + $0x7c] sm:$0xf]
      %v286 = vld [vmem:[%s263 + $0x84] sm:$0xf]
      %v287 = vld [vmem:[%s263 + $0x88] sm:$0xf]
      %v288 = vld [vmem:[%s263 + $0x90] sm:$0xf]
      %v289 = vld [vmem:[%s263 + $0x94] sm:$0xf]
      %v290 = vld [vmem:[%s263 + $0x9c] sm:$0xf]
      %v291 = vld [vmem:[%s263 + $0xa0] sm:$0xf]
      %v292 = vld [vmem:[%s263 + $0xa8] sm:$0xf]
      %v293 = vld [vmem:[%s263 + $0xac] sm:$0xf]
      %v294 = vld [vmem:[%s263 + $0xb4] sm:$0xf]
      %v295 = vld [vmem:[%s263 + $0xb8] sm:$0xf]
      %v296 = vld [vmem:[%s263 + $0x8] sm:$0x1]
      %v297 = vld [vmem:[%s263 + $0x14] sm:$0x1]
      %v298 = vld [vmem:[%s263 + $0x20] sm:$0x1]
      %v299 = vld [vmem:[%s263 + $0x2c] sm:$0x1]
      %v300 = vld [vmem:[%s263 + $0x38] sm:$0x1]
      %v301 = vld [vmem:[%s263 + $0x44] sm:$0x1]
      %v302 = vld [vmem:[%s263 + $0x50] sm:$0x1]
      %v303 = vld [vmem:[%s263 + $0x5c] sm:$0x1]
      %v304 = vld [vmem:[%s263 + $0x68] sm:$0x1]
      %v305 = vld [vmem:[%s263 + $0x74] sm:$0x1]
      %v306 = vld [vmem:[%s263 + $0x80] sm:$0x1]
      %v307 = vld [vmem:[%s263 + $0x8c] sm:$0x1]
      %v308 = vld [vmem:[%s263 + $0x98] sm:$0x1]
      %v309 = vld [vmem:[%s263 + $0xa4] sm:$0x1]
      %v310 = vld [vmem:[%s263 + $0xb0] sm:$0x1]
      %v311 = vld [vmem:[%s263 + $0xbc] sm:$0x1]
      %v312 = vld [vmem:[%s263] sm:$0xe]
      %v313 = vld [vmem:[%s263 + $0xc] sm:$0xe]
      %v314 = vld [vmem:[%s263 + $0x18] sm:$0xe]
      %v315 = vld [vmem:[%s263 + $0x24] sm:$0xe]
      %v316 = vld [vmem:[%s263 + $0x30] sm:$0xe]
      %v317 = vld [vmem:[%s263 + $0x3c] sm:$0xe]
      %v318 = vld [vmem:[%s263 + $0x48] sm:$0xe]
      %v319 = vld [vmem:[%s263 + $0x54] sm:$0xe]
      %v320 = vld [vmem:[%s263 + $0x60] sm:$0xe]
      %v321 = vld [vmem:[%s263 + $0x6c] sm:$0xe]
      %v322 = vld [vmem:[%s263 + $0x78] sm:$0xe]
      %v323 = vld [vmem:[%s263 + $0x84] sm:$0xe]
      %v324 = vld [vmem:[%s263 + $0x90] sm:$0xe]
      %v325 = vld [vmem:[%s263 + $0x9c] sm:$0xe]
      %v326 = vld [vmem:[%s263 + $0xa8] sm:$0xe]
      %v327 = vld [vmem:[%s263 + $0xb4] sm:$0xe]
      %s328 = scalar_lea.vmem %s192, 24
      %v329 = vld [vmem:[%s328] sm:$0xf]
      %v330 = vld [vmem:[%s328 + $0x4] sm:$0xf]
      %v331 = vld [vmem:[%s328 + $0xc] sm:$0xf]
      %v332 = vld [vmem:[%s328 + $0x10] sm:$0xf]
      %v333 = vld [vmem:[%s328 + $0x18] sm:$0xf]
      %v334 = vld [vmem:[%s328 + $0x1c] sm:$0xf]
      %v335 = vld [vmem:[%s328 + $0x24] sm:$0xf]
      %v336 = vld [vmem:[%s328 + $0x28] sm:$0xf]
      %v337 = vld [vmem:[%s328 + $0x30] sm:$0xf]
      %v338 = vld [vmem:[%s328 + $0x34] sm:$0xf]
      %v339 = vld [vmem:[%s328 + $0x3c] sm:$0xf]
      %v340 = vld [vmem:[%s328 + $0x40] sm:$0xf]
      %v341 = vld [vmem:[%s328 + $0x48] sm:$0xf]
      %v342 = vld [vmem:[%s328 + $0x4c] sm:$0xf]
      %v343 = vld [vmem:[%s328 + $0x54] sm:$0xf]
      %v344 = vld [vmem:[%s328 + $0x58] sm:$0xf]
      %v345 = vld [vmem:[%s328 + $0x60] sm:$0xf]
      %v346 = vld [vmem:[%s328 + $0x64] sm:$0xf]
      %v347 = vld [vmem:[%s328 + $0x6c] sm:$0xf]
      %v348 = vld [vmem:[%s328 + $0x70] sm:$0xf]
      %v349 = vld [vmem:[%s328 + $0x78] sm:$0xf]
      %v350 = vld [vmem:[%s328 + $0x7c] sm:$0xf]
      %v351 = vld [vmem:[%s328 + $0x84] sm:$0xf]
      %v352 = vld [vmem:[%s328 + $0x88] sm:$0xf]
      %v353 = vld [vmem:[%s328 + $0x90] sm:$0xf]
      %v354 = vld [vmem:[%s328 + $0x94] sm:$0xf]
      %v355 = vld [vmem:[%s328 + $0x9c] sm:$0xf]
      %v356 = vld [vmem:[%s328 + $0xa0] sm:$0xf]
      %v357 = vld [vmem:[%s328 + $0xa8] sm:$0xf]
      %v358 = vld [vmem:[%s328 + $0xac] sm:$0xf]
      %v359 = vld [vmem:[%s328 + $0xb4] sm:$0xf]
      %v360 = vld [vmem:[%s328 + $0xb8] sm:$0xf]
      %v361 = vld [vmem:[%s328 + $0x8] sm:$0x1]
      %v362 = vld [vmem:[%s328 + $0x14] sm:$0x1]
      %v363 = vld [vmem:[%s328 + $0x20] sm:$0x1]
      %v364 = vld [vmem:[%s328 + $0x2c] sm:$0x1]
      %v365 = vld [vmem:[%s328 + $0x38] sm:$0x1]
      %v366 = vld [vmem:[%s328 + $0x44] sm:$0x1]
      %v367 = vld [vmem:[%s328 + $0x50] sm:$0x1]
      %v368 = vld [vmem:[%s328 + $0x5c] sm:$0x1]
      %v369 = vld [vmem:[%s328 + $0x68] sm:$0x1]
      %v370 = vld [vmem:[%s328 + $0x74] sm:$0x1]
      %v371 = vld [vmem:[%s328 + $0x80] sm:$0x1]
      %v372 = vld [vmem:[%s328 + $0x8c] sm:$0x1]
      %v373 = vld [vmem:[%s328 + $0x98] sm:$0x1]
      %v374 = vld [vmem:[%s328 + $0xa4] sm:$0x1]
      %v375 = vld [vmem:[%s328 + $0xb0] sm:$0x1]
      %v376 = vld [vmem:[%s328 + $0xbc] sm:$0x1]
      %v377 = vld [vmem:[%s328] sm:$0xe]
      %v378 = vld [vmem:[%s328 + $0xc] sm:$0xe]
      %v379 = vld [vmem:[%s328 + $0x18] sm:$0xe]
      %v380 = vld [vmem:[%s328 + $0x24] sm:$0xe]
      %v381 = vld [vmem:[%s328 + $0x30] sm:$0xe]
      %v382 = vld [vmem:[%s328 + $0x3c] sm:$0xe]
      %v383 = vld [vmem:[%s328 + $0x48] sm:$0xe]
      %v384 = vld [vmem:[%s328 + $0x54] sm:$0xe]
      %v385 = vld [vmem:[%s328 + $0x60] sm:$0xe]
      %v386 = vld [vmem:[%s328 + $0x6c] sm:$0xe]
      %v387 = vld [vmem:[%s328 + $0x78] sm:$0xe]
      %v388 = vld [vmem:[%s328 + $0x84] sm:$0xe]
      %v389 = vld [vmem:[%s328 + $0x90] sm:$0xe]
      %v390 = vld [vmem:[%s328 + $0x9c] sm:$0xe]
      %v391 = vld [vmem:[%s328 + $0xa8] sm:$0xe]
      %v392 = vld [vmem:[%s328 + $0xb4] sm:$0xe]
      %v425 = vunpack.c.l.b16 %v199
      %v426 = vunpack.c.l.b16 %v200
      %v427 = vunpack.c.l.b16 %v201
      %v428 = vunpack.c.l.b16 %v202
      %v429 = vunpack.c.l.b16 %v203
      %v430 = vunpack.c.l.b16 %v204
      %v431 = vunpack.c.l.b16 %v205
      %v432 = vunpack.c.l.b16 %v206
      %v433 = vunpack.c.l.b16 %v207
      %v434 = vunpack.c.l.b16 %v208
      %v435 = vunpack.c.l.b16 %v209
      %v436 = vunpack.c.l.b16 %v210
      %v437 = vunpack.c.l.b16 %v211
      %v438 = vunpack.c.l.b16 %v212
      %v439 = vunpack.c.l.b16 %v213
      %v440 = vunpack.c.l.b16 %v214
      %v441 = vunpack.c.l.b16 %v215
      %v442 = vunpack.c.l.b16 %v216
      %v443 = vunpack.c.l.b16 %v217
      %v444 = vunpack.c.l.b16 %v218
      %v445 = vunpack.c.l.b16 %v219
      %v446 = vunpack.c.l.b16 %v220
      %v447 = vunpack.c.l.b16 %v221
      %v448 = vunpack.c.l.b16 %v222
      %v449 = vunpack.c.l.b16 %v223
      %v450 = vunpack.c.l.b16 %v224
      %v451 = vunpack.c.l.b16 %v225
      %v452 = vunpack.c.l.b16 %v226
      %v453 = vunpack.c.l.b16 %v227
      %v454 = vunpack.c.l.b16 %v228
      %v455 = vunpack.c.l.b16 %v229
      %v456 = vunpack.c.l.b16 %v230
      %v457 = vpack.c.b16 %v426, %v425
      %v458 = vpack.c.b16 %v428, %v427
      %v459 = vpack.c.b16 %v430, %v429
      %v460 = vpack.c.b16 %v432, %v431
      %v461 = vpack.c.b16 %v434, %v433
      %v462 = vpack.c.b16 %v436, %v435
      %v463 = vpack.c.b16 %v438, %v437
      %v464 = vpack.c.b16 %v440, %v439
      %v465 = vpack.c.b16 %v442, %v441
      %v466 = vpack.c.b16 %v444, %v443
      %v467 = vpack.c.b16 %v446, %v445
      %v468 = vpack.c.b16 %v448, %v447
      %v469 = vpack.c.b16 %v450, %v449
      %v470 = vpack.c.b16 %v452, %v451
      %v471 = vpack.c.b16 %v454, %v453
      %v472 = vpack.c.b16 %v456, %v455
      %v489 = vunpack.c.l.b16 %v231
      %v490 = vunpack.c.l.b16 %v232
      %v491 = vunpack.c.l.b16 %v233
      %v492 = vunpack.c.l.b16 %v234
      %v493 = vunpack.c.l.b16 %v235
      %v494 = vunpack.c.l.b16 %v236
      %v495 = vunpack.c.l.b16 %v237
      %v496 = vunpack.c.l.b16 %v238
      %v497 = vunpack.c.l.b16 %v239
      %v498 = vunpack.c.l.b16 %v240
      %v499 = vunpack.c.l.b16 %v241
      %v500 = vunpack.c.l.b16 %v242
      %v501 = vunpack.c.l.b16 %v243
      %v502 = vunpack.c.l.b16 %v244
      %v503 = vunpack.c.l.b16 %v245
      %v504 = vunpack.c.l.b16 %v246
      %v505 = vpack.c.b16 %v489, %v489
      %v506 = vpack.c.b16 %v490, %v490
      %v507 = vpack.c.b16 %v491, %v491
      %v508 = vpack.c.b16 %v492, %v492
      %v509 = vpack.c.b16 %v493, %v493
      %v510 = vpack.c.b16 %v494, %v494
      %v511 = vpack.c.b16 %v495, %v495
      %v512 = vpack.c.b16 %v496, %v496
      %v513 = vpack.c.b16 %v497, %v497
      %v514 = vpack.c.b16 %v498, %v498
      %v515 = vpack.c.b16 %v499, %v499
      %v516 = vpack.c.b16 %v500, %v500
      %v517 = vpack.c.b16 %v501, %v501
      %v518 = vpack.c.b16 %v502, %v502
      %v519 = vpack.c.b16 %v503, %v503
      %v520 = vpack.c.b16 %v504, %v504
      %vm521 = vsmask.f32 7424
      %v523 = vshrl.u32 %v457, 16
      %v525 = vshll.u32 %v457, 16
      %v527 = vrot.slane %v525, 1
      %v528 = vor.u32 %v523, %v527
      %v530 = vshll.u32 %v505, 16
      %v532 = vrot.slane %v530, 1
      %v533 = vsel %vm521, %v528, %v532
      %v535 = vshrl.u32 %v458, 16
      %v537 = vshll.u32 %v458, 16
      %v539 = vrot.slane %v537, 1
      %v540 = vor.u32 %v535, %v539
      %v542 = vshll.u32 %v506, 16
      %v544 = vrot.slane %v542, 1
      %v545 = vsel %vm521, %v540, %v544
      %v547 = vshrl.u32 %v459, 16
      %v549 = vshll.u32 %v459, 16
      %v551 = vrot.slane %v549, 1
      %v552 = vor.u32 %v547, %v551
      %v554 = vshll.u32 %v507, 16
      %v556 = vrot.slane %v554, 1
      %v557 = vsel %vm521, %v552, %v556
      %v559 = vshrl.u32 %v460, 16
      %v561 = vshll.u32 %v460, 16
      %v563 = vrot.slane %v561, 1
      %v564 = vor.u32 %v559, %v563
      %v566 = vshll.u32 %v508, 16
      %v568 = vrot.slane %v566, 1
      %v569 = vsel %vm521, %v564, %v568
      %v571 = vshrl.u32 %v461, 16
      %v573 = vshll.u32 %v461, 16
      %v575 = vrot.slane %v573, 1
      %v576 = vor.u32 %v571, %v575
      %v578 = vshll.u32 %v509, 16
      %v580 = vrot.slane %v578, 1
      %v581 = vsel %vm521, %v576, %v580
      %v583 = vshrl.u32 %v462, 16
      %v585 = vshll.u32 %v462, 16
      %v587 = vrot.slane %v585, 1
      %v588 = vor.u32 %v583, %v587
      %v590 = vshll.u32 %v510, 16
      %v592 = vrot.slane %v590, 1
      %v593 = vsel %vm521, %v588, %v592
      %v595 = vshrl.u32 %v463, 16
      %v597 = vshll.u32 %v463, 16
      %v599 = vrot.slane %v597, 1
      %v600 = vor.u32 %v595, %v599
      %v602 = vshll.u32 %v511, 16
      %v604 = vrot.slane %v602, 1
      %v605 = vsel %vm521, %v600, %v604
      %v607 = vshrl.u32 %v464, 16
      %v609 = vshll.u32 %v464, 16
      %v611 = vrot.slane %v609, 1
      %v612 = vor.u32 %v607, %v611
      %v614 = vshll.u32 %v512, 16
      %v616 = vrot.slane %v614, 1
      %v617 = vsel %vm521, %v612, %v616
      %v619 = vshrl.u32 %v465, 16
      %v621 = vshll.u32 %v465, 16
      %v623 = vrot.slane %v621, 1
      %v624 = vor.u32 %v619, %v623
      %v626 = vshll.u32 %v513, 16
      %v628 = vrot.slane %v626, 1
      %v629 = vsel %vm521, %v624, %v628
      %v631 = vshrl.u32 %v466, 16
      %v633 = vshll.u32 %v466, 16
      %v635 = vrot.slane %v633, 1
      %v636 = vor.u32 %v631, %v635
      %v638 = vshll.u32 %v514, 16
      %v640 = vrot.slane %v638, 1
      %v641 = vsel %vm521, %v636, %v640
      %v643 = vshrl.u32 %v467, 16
      %v645 = vshll.u32 %v467, 16
      %v647 = vrot.slane %v645, 1
      %v648 = vor.u32 %v643, %v647
      %v650 = vshll.u32 %v515, 16
      %v652 = vrot.slane %v650, 1
      %v653 = vsel %vm521, %v648, %v652
      %v655 = vshrl.u32 %v468, 16
      %v657 = vshll.u32 %v468, 16
      %v659 = vrot.slane %v657, 1
      %v660 = vor.u32 %v655, %v659
      %v662 = vshll.u32 %v516, 16
      %v664 = vrot.slane %v662, 1
      %v665 = vsel %vm521, %v660, %v664
      %v667 = vshrl.u32 %v469, 16
      %v669 = vshll.u32 %v469, 16
      %v671 = vrot.slane %v669, 1
      %v672 = vor.u32 %v667, %v671
      %v674 = vshll.u32 %v517, 16
      %v676 = vrot.slane %v674, 1
      %v677 = vsel %vm521, %v672, %v676
      %v679 = vshrl.u32 %v470, 16
      %v681 = vshll.u32 %v470, 16
      %v683 = vrot.slane %v681, 1
      %v684 = vor.u32 %v679, %v683
      %v686 = vshll.u32 %v518, 16
      %v688 = vrot.slane %v686, 1
      %v689 = vsel %vm521, %v684, %v688
      %v691 = vshrl.u32 %v471, 16
      %v693 = vshll.u32 %v471, 16
      %v695 = vrot.slane %v693, 1
      %v696 = vor.u32 %v691, %v695
      %v698 = vshll.u32 %v519, 16
      %v700 = vrot.slane %v698, 1
      %v701 = vsel %vm521, %v696, %v700
      %v703 = vshrl.u32 %v472, 16
      %v705 = vshll.u32 %v472, 16
      %v707 = vrot.slane %v705, 1
      %v708 = vor.u32 %v703, %v707
      %v710 = vshll.u32 %v520, 16
      %v712 = vrot.slane %v710, 1
      %v713 = vsel %vm521, %v708, %v712
      %714 = vrot.lane.b32.xlu0 %v533, 4
      %v715 = vpop.permute.xlu0 %714
      %716 = vrot.lane.b32.xlu0 %v545, 4
      %v717 = vpop.permute.xlu0 %716
      %718 = vrot.lane.b32.xlu0 %v557, 4
      %v719 = vpop.permute.xlu0 %718
      %720 = vrot.lane.b32.xlu0 %v569, 4
      %v721 = vpop.permute.xlu0 %720
      %722 = vrot.lane.b32.xlu0 %v581, 4
      %v723 = vpop.permute.xlu0 %722
      %724 = vrot.lane.b32.xlu0 %v593, 4
      %v725 = vpop.permute.xlu0 %724
      %726 = vrot.lane.b32.xlu0 %v605, 4
      %v727 = vpop.permute.xlu0 %726
      %728 = vrot.lane.b32.xlu0 %v617, 4
      %v729 = vpop.permute.xlu0 %728
      %730 = vrot.lane.b32.xlu0 %v629, 4
      %v731 = vpop.permute.xlu0 %730
      %732 = vrot.lane.b32.xlu0 %v641, 4
      %v733 = vpop.permute.xlu0 %732
      %734 = vrot.lane.b32.xlu0 %v653, 4
      %v735 = vpop.permute.xlu0 %734
      %736 = vrot.lane.b32.xlu0 %v665, 4
      %v737 = vpop.permute.xlu0 %736
      %738 = vrot.lane.b32.xlu0 %v677, 4
      %v739 = vpop.permute.xlu0 %738
      %740 = vrot.lane.b32.xlu0 %v689, 4
      %v741 = vpop.permute.xlu0 %740
      %742 = vrot.lane.b32.xlu0 %v701, 4
      %v743 = vpop.permute.xlu0 %742
      %744 = vrot.lane.b32.xlu0 %v713, 4
      %v745 = vpop.permute.xlu0 %744
      %v762 = vunpack.c.l.b16 %v247
      %v763 = vunpack.c.l.b16 %v248
      %v764 = vunpack.c.l.b16 %v249
      %v765 = vunpack.c.l.b16 %v250
      %v766 = vunpack.c.l.b16 %v251
      %v767 = vunpack.c.l.b16 %v252
      %v768 = vunpack.c.l.b16 %v253
      %v769 = vunpack.c.l.b16 %v254
      %v770 = vunpack.c.l.b16 %v255
      %v771 = vunpack.c.l.b16 %v256
      %v772 = vunpack.c.l.b16 %v257
      %v773 = vunpack.c.l.b16 %v258
      %v774 = vunpack.c.l.b16 %v259
      %v775 = vunpack.c.l.b16 %v260
      %v776 = vunpack.c.l.b16 %v261
      %v777 = vunpack.c.l.b16 %v262
      %v778 = vpack.c.b16 %v426, %v762
      %v779 = vpack.c.b16 %v428, %v763
      %v780 = vpack.c.b16 %v430, %v764
      %v781 = vpack.c.b16 %v432, %v765
      %v782 = vpack.c.b16 %v434, %v766
      %v783 = vpack.c.b16 %v436, %v767
      %v784 = vpack.c.b16 %v438, %v768
      %v785 = vpack.c.b16 %v440, %v769
      %v786 = vpack.c.b16 %v442, %v770
      %v787 = vpack.c.b16 %v444, %v771
      %v788 = vpack.c.b16 %v446, %v772
      %v789 = vpack.c.b16 %v448, %v773
      %v790 = vpack.c.b16 %v450, %v774
      %v791 = vpack.c.b16 %v452, %v775
      %v792 = vpack.c.b16 %v454, %v776
      %v793 = vpack.c.b16 %v456, %v777
      %vm794 = vcmask 1046528
      %v795 = vrot.slane %v778, 1
      %v796 = vrot.slane %v505, 1
      %v797 = vsel %vm794, %v795, %v796
      %v798 = vrot.slane %v779, 1
      %v799 = vrot.slane %v506, 1
      %v800 = vsel %vm794, %v798, %v799
      %v801 = vrot.slane %v780, 1
      %v802 = vrot.slane %v507, 1
      %v803 = vsel %vm794, %v801, %v802
      %v804 = vrot.slane %v781, 1
      %v805 = vrot.slane %v508, 1
      %v806 = vsel %vm794, %v804, %v805
      %v807 = vrot.slane %v782, 1
      %v808 = vrot.slane %v509, 1
      %v809 = vsel %vm794, %v807, %v808
      %v810 = vrot.slane %v783, 1
      %v811 = vrot.slane %v510, 1
      %v812 = vsel %vm794, %v810, %v811
      %v813 = vrot.slane %v784, 1
      %v814 = vrot.slane %v511, 1
      %v815 = vsel %vm794, %v813, %v814
      %v816 = vrot.slane %v785, 1
      %v817 = vrot.slane %v512, 1
      %v818 = vsel %vm794, %v816, %v817
      %v819 = vrot.slane %v786, 1
      %v820 = vrot.slane %v513, 1
      %v821 = vsel %vm794, %v819, %v820
      %v822 = vrot.slane %v787, 1
      %v823 = vrot.slane %v514, 1
      %v824 = vsel %vm794, %v822, %v823
      %v825 = vrot.slane %v788, 1
      %v826 = vrot.slane %v515, 1
      %v827 = vsel %vm794, %v825, %v826
      %v828 = vrot.slane %v789, 1
      %v829 = vrot.slane %v516, 1
      %v830 = vsel %vm794, %v828, %v829
      %v831 = vrot.slane %v790, 1
      %v832 = vrot.slane %v517, 1
      %v833 = vsel %vm794, %v831, %v832
      %v834 = vrot.slane %v791, 1
      %v835 = vrot.slane %v518, 1
      %v836 = vsel %vm794, %v834, %v835
      %v837 = vrot.slane %v792, 1
      %v838 = vrot.slane %v519, 1
      %v839 = vsel %vm794, %v837, %v838
      %v840 = vrot.slane %v793, 1
      %v841 = vrot.slane %v520, 1
      %v842 = vsel %vm794, %v840, %v841
      %843 = vrot.lane.b32.xlu0 %v797, 8
      %v844 = vpop.permute.xlu0 %843
      %845 = vrot.lane.b32.xlu0 %v800, 8
      %v846 = vpop.permute.xlu0 %845
      %847 = vrot.lane.b32.xlu0 %v803, 8
      %v848 = vpop.permute.xlu0 %847
      %849 = vrot.lane.b32.xlu0 %v806, 8
      %v850 = vpop.permute.xlu0 %849
      %851 = vrot.lane.b32.xlu0 %v809, 8
      %v852 = vpop.permute.xlu0 %851
      %853 = vrot.lane.b32.xlu0 %v812, 8
      %v854 = vpop.permute.xlu0 %853
      %855 = vrot.lane.b32.xlu0 %v815, 8
      %v856 = vpop.permute.xlu0 %855
      %857 = vrot.lane.b32.xlu0 %v818, 8
      %v858 = vpop.permute.xlu0 %857
      %859 = vrot.lane.b32.xlu0 %v821, 8
      %v860 = vpop.permute.xlu0 %859
      %861 = vrot.lane.b32.xlu0 %v824, 8
      %v862 = vpop.permute.xlu0 %861
      %863 = vrot.lane.b32.xlu0 %v827, 8
      %v864 = vpop.permute.xlu0 %863
      %865 = vrot.lane.b32.xlu0 %v830, 8
      %v866 = vpop.permute.xlu0 %865
      %867 = vrot.lane.b32.xlu0 %v833, 8
      %v868 = vpop.permute.xlu0 %867
      %869 = vrot.lane.b32.xlu0 %v836, 8
      %v870 = vpop.permute.xlu0 %869
      %871 = vrot.lane.b32.xlu0 %v839, 8
      %v872 = vpop.permute.xlu0 %871
      %873 = vrot.lane.b32.xlu0 %v842, 8
      %v874 = vpop.permute.xlu0 %873
      %v907 = vunpack.c.l.b16 %v264
      %v908 = vunpack.c.l.b16 %v265
      %v909 = vunpack.c.l.b16 %v266
      %v910 = vunpack.c.l.b16 %v267
      %v911 = vunpack.c.l.b16 %v268
      %v912 = vunpack.c.l.b16 %v269
      %v913 = vunpack.c.l.b16 %v270
      %v914 = vunpack.c.l.b16 %v271
      %v915 = vunpack.c.l.b16 %v272
      %v916 = vunpack.c.l.b16 %v273
      %v917 = vunpack.c.l.b16 %v274
      %v918 = vunpack.c.l.b16 %v275
      %v919 = vunpack.c.l.b16 %v276
      %v920 = vunpack.c.l.b16 %v277
      %v921 = vunpack.c.l.b16 %v278
      %v922 = vunpack.c.l.b16 %v279
      %v923 = vunpack.c.l.b16 %v280
      %v924 = vunpack.c.l.b16 %v281
      %v925 = vunpack.c.l.b16 %v282
      %v926 = vunpack.c.l.b16 %v283
      %v927 = vunpack.c.l.b16 %v284
      %v928 = vunpack.c.l.b16 %v285
      %v929 = vunpack.c.l.b16 %v286
      %v930 = vunpack.c.l.b16 %v287
      %v931 = vunpack.c.l.b16 %v288
      %v932 = vunpack.c.l.b16 %v289
      %v933 = vunpack.c.l.b16 %v290
      %v934 = vunpack.c.l.b16 %v291
      %v935 = vunpack.c.l.b16 %v292
      %v936 = vunpack.c.l.b16 %v293
      %v937 = vunpack.c.l.b16 %v294
      %v938 = vunpack.c.l.b16 %v295
      %v939 = vpack.c.b16 %v908, %v907
      %v940 = vpack.c.b16 %v910, %v909
      %v941 = vpack.c.b16 %v912, %v911
      %v942 = vpack.c.b16 %v914, %v913
      %v943 = vpack.c.b16 %v916, %v915
      %v944 = vpack.c.b16 %v918, %v917
      %v945 = vpack.c.b16 %v920, %v919
      %v946 = vpack.c.b16 %v922, %v921
      %v947 = vpack.c.b16 %v924, %v923
      %v948 = vpack.c.b16 %v926, %v925
      %v949 = vpack.c.b16 %v928, %v927
      %v950 = vpack.c.b16 %v930, %v929
      %v951 = vpack.c.b16 %v932, %v931
      %v952 = vpack.c.b16 %v934, %v933
      %v953 = vpack.c.b16 %v936, %v935
      %v954 = vpack.c.b16 %v938, %v937
      %955 = vrot.lane.b32.xlu0 %v939, 12
      %v956 = vpop.permute.xlu0 %955
      %957 = vrot.lane.b32.xlu0 %v940, 12
      %v958 = vpop.permute.xlu0 %957
      %959 = vrot.lane.b32.xlu0 %v941, 12
      %v960 = vpop.permute.xlu0 %959
      %961 = vrot.lane.b32.xlu0 %v942, 12
      %v962 = vpop.permute.xlu0 %961
      %963 = vrot.lane.b32.xlu0 %v943, 12
      %v964 = vpop.permute.xlu0 %963
      %965 = vrot.lane.b32.xlu0 %v944, 12
      %v966 = vpop.permute.xlu0 %965
      %967 = vrot.lane.b32.xlu0 %v945, 12
      %v968 = vpop.permute.xlu0 %967
      %969 = vrot.lane.b32.xlu0 %v946, 12
      %v970 = vpop.permute.xlu0 %969
      %971 = vrot.lane.b32.xlu0 %v947, 12
      %v972 = vpop.permute.xlu0 %971
      %973 = vrot.lane.b32.xlu0 %v948, 12
      %v974 = vpop.permute.xlu0 %973
      %975 = vrot.lane.b32.xlu0 %v949, 12
      %v976 = vpop.permute.xlu0 %975
      %977 = vrot.lane.b32.xlu0 %v950, 12
      %v978 = vpop.permute.xlu0 %977
      %979 = vrot.lane.b32.xlu0 %v951, 12
      %v980 = vpop.permute.xlu0 %979
      %981 = vrot.lane.b32.xlu0 %v952, 12
      %v982 = vpop.permute.xlu0 %981
      %983 = vrot.lane.b32.xlu0 %v953, 12
      %v984 = vpop.permute.xlu0 %983
      %985 = vrot.lane.b32.xlu0 %v954, 12
      %v986 = vpop.permute.xlu0 %985
      %v1003 = vunpack.c.l.b16 %v296
      %v1004 = vunpack.c.l.b16 %v297
      %v1005 = vunpack.c.l.b16 %v298
      %v1006 = vunpack.c.l.b16 %v299
      %v1007 = vunpack.c.l.b16 %v300
      %v1008 = vunpack.c.l.b16 %v301
      %v1009 = vunpack.c.l.b16 %v302
      %v1010 = vunpack.c.l.b16 %v303
      %v1011 = vunpack.c.l.b16 %v304
      %v1012 = vunpack.c.l.b16 %v305
      %v1013 = vunpack.c.l.b16 %v306
      %v1014 = vunpack.c.l.b16 %v307
      %v1015 = vunpack.c.l.b16 %v308
      %v1016 = vunpack.c.l.b16 %v309
      %v1017 = vunpack.c.l.b16 %v310
      %v1018 = vunpack.c.l.b16 %v311
      %v1019 = vpack.c.b16 %v1003, %v1003
      %v1020 = vpack.c.b16 %v1004, %v1004
      %v1021 = vpack.c.b16 %v1005, %v1005
      %v1022 = vpack.c.b16 %v1006, %v1006
      %v1023 = vpack.c.b16 %v1007, %v1007
      %v1024 = vpack.c.b16 %v1008, %v1008
      %v1025 = vpack.c.b16 %v1009, %v1009
      %v1026 = vpack.c.b16 %v1010, %v1010
      %v1027 = vpack.c.b16 %v1011, %v1011
      %v1028 = vpack.c.b16 %v1012, %v1012
      %v1029 = vpack.c.b16 %v1013, %v1013
      %v1030 = vpack.c.b16 %v1014, %v1014
      %v1031 = vpack.c.b16 %v1015, %v1015
      %v1032 = vpack.c.b16 %v1016, %v1016
      %v1033 = vpack.c.b16 %v1017, %v1017
      %v1034 = vpack.c.b16 %v1018, %v1018
      %v1036 = vshrl.u32 %v939, 16
      %v1038 = vshll.u32 %v939, 16
      %v1040 = vrot.slane %v1038, 1
      %v1041 = vor.u32 %v1036, %v1040
      %v1043 = vshll.u32 %v1019, 16
      %v1045 = vrot.slane %v1043, 1
      %v1046 = vsel %vm521, %v1041, %v1045
      %v1048 = vshrl.u32 %v940, 16
      %v1050 = vshll.u32 %v940, 16
      %v1052 = vrot.slane %v1050, 1
      %v1053 = vor.u32 %v1048, %v1052
      %v1055 = vshll.u32 %v1020, 16
      %v1057 = vrot.slane %v1055, 1
      %v1058 = vsel %vm521, %v1053, %v1057
      %v1060 = vshrl.u32 %v941, 16
      %v1062 = vshll.u32 %v941, 16
      %v1064 = vrot.slane %v1062, 1
      %v1065 = vor.u32 %v1060, %v1064
      %v1067 = vshll.u32 %v1021, 16
      %v1069 = vrot.slane %v1067, 1
      %v1070 = vsel %vm521, %v1065, %v1069
      %v1072 = vshrl.u32 %v942, 16
      %v1074 = vshll.u32 %v942, 16
      %v1076 = vrot.slane %v1074, 1
      %v1077 = vor.u32 %v1072, %v1076
      %v1079 = vshll.u32 %v1022, 16
      %v1081 = vrot.slane %v1079, 1
      %v1082 = vsel %vm521, %v1077, %v1081
      %v1084 = vshrl.u32 %v943, 16
      %v1086 = vshll.u32 %v943, 16
      %v1088 = vrot.slane %v1086, 1
      %v1089 = vor.u32 %v1084, %v1088
      %v1091 = vshll.u32 %v1023, 16
      %v1093 = vrot.slane %v1091, 1
      %v1094 = vsel %vm521, %v1089, %v1093
      %v1096 = vshrl.u32 %v944, 16
      %v1098 = vshll.u32 %v944, 16
      %v1100 = vrot.slane %v1098, 1
      %v1101 = vor.u32 %v1096, %v1100
      %v1103 = vshll.u32 %v1024, 16
      %v1105 = vrot.slane %v1103, 1
      %v1106 = vsel %vm521, %v1101, %v1105
      %v1108 = vshrl.u32 %v945, 16
      %v1110 = vshll.u32 %v945, 16
      %v1112 = vrot.slane %v1110, 1
      %v1113 = vor.u32 %v1108, %v1112
      %v1115 = vshll.u32 %v1025, 16
      %v1117 = vrot.slane %v1115, 1
      %v1118 = vsel %vm521, %v1113, %v1117
      %v1120 = vshrl.u32 %v946, 16
      %v1122 = vshll.u32 %v946, 16
      %v1124 = vrot.slane %v1122, 1
      %v1125 = vor.u32 %v1120, %v1124
      %v1127 = vshll.u32 %v1026, 16
      %v1129 = vrot.slane %v1127, 1
      %v1130 = vsel %vm521, %v1125, %v1129
      %v1132 = vshrl.u32 %v947, 16
      %v1134 = vshll.u32 %v947, 16
      %v1136 = vrot.slane %v1134, 1
      %v1137 = vor.u32 %v1132, %v1136
      %v1139 = vshll.u32 %v1027, 16
      %v1141 = vrot.slane %v1139, 1
      %v1142 = vsel %vm521, %v1137, %v1141
      %v1144 = vshrl.u32 %v948, 16
      %v1146 = vshll.u32 %v948, 16
      %v1148 = vrot.slane %v1146, 1
      %v1149 = vor.u32 %v1144, %v1148
      %v1151 = vshll.u32 %v1028, 16
      %v1153 = vrot.slane %v1151, 1
      %v1154 = vsel %vm521, %v1149, %v1153
      %v1156 = vshrl.u32 %v949, 16
      %v1158 = vshll.u32 %v949, 16
      %v1160 = vrot.slane %v1158, 1
      %v1161 = vor.u32 %v1156, %v1160
      %v1163 = vshll.u32 %v1029, 16
      %v1165 = vrot.slane %v1163, 1
      %v1166 = vsel %vm521, %v1161, %v1165
      %v1168 = vshrl.u32 %v950, 16
      %v1170 = vshll.u32 %v950, 16
      %v1172 = vrot.slane %v1170, 1
      %v1173 = vor.u32 %v1168, %v1172
      %v1175 = vshll.u32 %v1030, 16
      %v1177 = vrot.slane %v1175, 1
      %v1178 = vsel %vm521, %v1173, %v1177
      %v1180 = vshrl.u32 %v951, 16
      %v1182 = vshll.u32 %v951, 16
      %v1184 = vrot.slane %v1182, 1
      %v1185 = vor.u32 %v1180, %v1184
      %v1187 = vshll.u32 %v1031, 16
      %v1189 = vrot.slane %v1187, 1
      %v1190 = vsel %vm521, %v1185, %v1189
      %v1192 = vshrl.u32 %v952, 16
      %v1194 = vshll.u32 %v952, 16
      %v1196 = vrot.slane %v1194, 1
      %v1197 = vor.u32 %v1192, %v1196
      %v1199 = vshll.u32 %v1032, 16
      %v1201 = vrot.slane %v1199, 1
      %v1202 = vsel %vm521, %v1197, %v1201
      %v1204 = vshrl.u32 %v953, 16
      %v1206 = vshll.u32 %v953, 16
      %v1208 = vrot.slane %v1206, 1
      %v1209 = vor.u32 %v1204, %v1208
      %v1211 = vshll.u32 %v1033, 16
      %v1213 = vrot.slane %v1211, 1
      %v1214 = vsel %vm521, %v1209, %v1213
      %v1216 = vshrl.u32 %v954, 16
      %v1218 = vshll.u32 %v954, 16
      %v1220 = vrot.slane %v1218, 1
      %v1221 = vor.u32 %v1216, %v1220
      %v1223 = vshll.u32 %v1034, 16
      %v1225 = vrot.slane %v1223, 1
      %v1226 = vsel %vm521, %v1221, %v1225
      %1227 = vrot.lane.b32.xlu0 %v1046, 16
      %v1228 = vpop.permute.xlu0 %1227
      %1229 = vrot.lane.b32.xlu0 %v1058, 16
      %v1230 = vpop.permute.xlu0 %1229
      %1231 = vrot.lane.b32.xlu0 %v1070, 16
      %v1232 = vpop.permute.xlu0 %1231
      %1233 = vrot.lane.b32.xlu0 %v1082, 16
      %v1234 = vpop.permute.xlu0 %1233
      %1235 = vrot.lane.b32.xlu0 %v1094, 16
      %v1236 = vpop.permute.xlu0 %1235
      %1237 = vrot.lane.b32.xlu0 %v1106, 16
      %v1238 = vpop.permute.xlu0 %1237
      %1239 = vrot.lane.b32.xlu0 %v1118, 16
      %v1240 = vpop.permute.xlu0 %1239
      %1241 = vrot.lane.b32.xlu0 %v1130, 16
      %v1242 = vpop.permute.xlu0 %1241
      %1243 = vrot.lane.b32.xlu0 %v1142, 16
      %v1244 = vpop.permute.xlu0 %1243
      %1245 = vrot.lane.b32.xlu0 %v1154, 16
      %v1246 = vpop.permute.xlu0 %1245
      %1247 = vrot.lane.b32.xlu0 %v1166, 16
      %v1248 = vpop.permute.xlu0 %1247
      %1249 = vrot.lane.b32.xlu0 %v1178, 16
      %v1250 = vpop.permute.xlu0 %1249
      %1251 = vrot.lane.b32.xlu0 %v1190, 16
      %v1252 = vpop.permute.xlu0 %1251
      %1253 = vrot.lane.b32.xlu0 %v1202, 16
      %v1254 = vpop.permute.xlu0 %1253
      %1255 = vrot.lane.b32.xlu0 %v1214, 16
      %v1256 = vpop.permute.xlu0 %1255
      %1257 = vrot.lane.b32.xlu0 %v1226, 16
      %v1258 = vpop.permute.xlu0 %1257
      %v1275 = vunpack.c.l.b16 %v312
      %v1276 = vunpack.c.l.b16 %v313
      %v1277 = vunpack.c.l.b16 %v314
      %v1278 = vunpack.c.l.b16 %v315
      %v1279 = vunpack.c.l.b16 %v316
      %v1280 = vunpack.c.l.b16 %v317
      %v1281 = vunpack.c.l.b16 %v318
      %v1282 = vunpack.c.l.b16 %v319
      %v1283 = vunpack.c.l.b16 %v320
      %v1284 = vunpack.c.l.b16 %v321
      %v1285 = vunpack.c.l.b16 %v322
      %v1286 = vunpack.c.l.b16 %v323
      %v1287 = vunpack.c.l.b16 %v324
      %v1288 = vunpack.c.l.b16 %v325
      %v1289 = vunpack.c.l.b16 %v326
      %v1290 = vunpack.c.l.b16 %v327
      %v1291 = vpack.c.b16 %v908, %v1275
      %v1292 = vpack.c.b16 %v910, %v1276
      %v1293 = vpack.c.b16 %v912, %v1277
      %v1294 = vpack.c.b16 %v914, %v1278
      %v1295 = vpack.c.b16 %v916, %v1279
      %v1296 = vpack.c.b16 %v918, %v1280
      %v1297 = vpack.c.b16 %v920, %v1281
      %v1298 = vpack.c.b16 %v922, %v1282
      %v1299 = vpack.c.b16 %v924, %v1283
      %v1300 = vpack.c.b16 %v926, %v1284
      %v1301 = vpack.c.b16 %v928, %v1285
      %v1302 = vpack.c.b16 %v930, %v1286
      %v1303 = vpack.c.b16 %v932, %v1287
      %v1304 = vpack.c.b16 %v934, %v1288
      %v1305 = vpack.c.b16 %v936, %v1289
      %v1306 = vpack.c.b16 %v938, %v1290
      %v1307 = vrot.slane %v1291, 1
      %v1308 = vrot.slane %v1019, 1
      %v1309 = vsel %vm794, %v1307, %v1308
      %v1310 = vrot.slane %v1292, 1
      %v1311 = vrot.slane %v1020, 1
      %v1312 = vsel %vm794, %v1310, %v1311
      %v1313 = vrot.slane %v1293, 1
      %v1314 = vrot.slane %v1021, 1
      %v1315 = vsel %vm794, %v1313, %v1314
      %v1316 = vrot.slane %v1294, 1
      %v1317 = vrot.slane %v1022, 1
      %v1318 = vsel %vm794, %v1316, %v1317
      %v1319 = vrot.slane %v1295, 1
      %v1320 = vrot.slane %v1023, 1
      %v1321 = vsel %vm794, %v1319, %v1320
      %v1322 = vrot.slane %v1296, 1
      %v1323 = vrot.slane %v1024, 1
      %v1324 = vsel %vm794, %v1322, %v1323
      %v1325 = vrot.slane %v1297, 1
      %v1326 = vrot.slane %v1025, 1
      %v1327 = vsel %vm794, %v1325, %v1326
      %v1328 = vrot.slane %v1298, 1
      %v1329 = vrot.slane %v1026, 1
      %v1330 = vsel %vm794, %v1328, %v1329
      %v1331 = vrot.slane %v1299, 1
      %v1332 = vrot.slane %v1027, 1
      %v1333 = vsel %vm794, %v1331, %v1332
      %v1334 = vrot.slane %v1300, 1
      %v1335 = vrot.slane %v1028, 1
      %v1336 = vsel %vm794, %v1334, %v1335
      %v1337 = vrot.slane %v1301, 1
      %v1338 = vrot.slane %v1029, 1
      %v1339 = vsel %vm794, %v1337, %v1338
      %v1340 = vrot.slane %v1302, 1
      %v1341 = vrot.slane %v1030, 1
      %v1342 = vsel %vm794, %v1340, %v1341
      %v1343 = vrot.slane %v1303, 1
      %v1344 = vrot.slane %v1031, 1
      %v1345 = vsel %vm794, %v1343, %v1344
      %v1346 = vrot.slane %v1304, 1
      %v1347 = vrot.slane %v1032, 1
      %v1348 = vsel %vm794, %v1346, %v1347
      %v1349 = vrot.slane %v1305, 1
      %v1350 = vrot.slane %v1033, 1
      %v1351 = vsel %vm794, %v1349, %v1350
      %v1352 = vrot.slane %v1306, 1
      %v1353 = vrot.slane %v1034, 1
      %v1354 = vsel %vm794, %v1352, %v1353
      %1355 = vrot.lane.b32.xlu0 %v1309, 20
      %v1356 = vpop.permute.xlu0 %1355
      %1357 = vrot.lane.b32.xlu0 %v1312, 20
      %v1358 = vpop.permute.xlu0 %1357
      %1359 = vrot.lane.b32.xlu0 %v1315, 20
      %v1360 = vpop.permute.xlu0 %1359
      %1361 = vrot.lane.b32.xlu0 %v1318, 20
      %v1362 = vpop.permute.xlu0 %1361
      %1363 = vrot.lane.b32.xlu0 %v1321, 20
      %v1364 = vpop.permute.xlu0 %1363
      %1365 = vrot.lane.b32.xlu0 %v1324, 20
      %v1366 = vpop.permute.xlu0 %1365
      %1367 = vrot.lane.b32.xlu0 %v1327, 20
      %v1368 = vpop.permute.xlu0 %1367
      %1369 = vrot.lane.b32.xlu0 %v1330, 20
      %v1370 = vpop.permute.xlu0 %1369
      %1371 = vrot.lane.b32.xlu0 %v1333, 20
      %v1372 = vpop.permute.xlu0 %1371
      %1373 = vrot.lane.b32.xlu0 %v1336, 20
      %v1374 = vpop.permute.xlu0 %1373
      %1375 = vrot.lane.b32.xlu0 %v1339, 20
      %v1376 = vpop.permute.xlu0 %1375
      %1377 = vrot.lane.b32.xlu0 %v1342, 20
      %v1378 = vpop.permute.xlu0 %1377
      %1379 = vrot.lane.b32.xlu0 %v1345, 20
      %v1380 = vpop.permute.xlu0 %1379
      %1381 = vrot.lane.b32.xlu0 %v1348, 20
      %v1382 = vpop.permute.xlu0 %1381
      %1383 = vrot.lane.b32.xlu0 %v1351, 20
      %v1384 = vpop.permute.xlu0 %1383
      %1385 = vrot.lane.b32.xlu0 %v1354, 20
      %v1386 = vpop.permute.xlu0 %1385
      %v1419 = vunpack.c.l.b16 %v329
      %v1420 = vunpack.c.l.b16 %v330
      %v1421 = vunpack.c.l.b16 %v331
      %v1422 = vunpack.c.l.b16 %v332
      %v1423 = vunpack.c.l.b16 %v333
      %v1424 = vunpack.c.l.b16 %v334
      %v1425 = vunpack.c.l.b16 %v335
      %v1426 = vunpack.c.l.b16 %v336
      %v1427 = vunpack.c.l.b16 %v337
      %v1428 = vunpack.c.l.b16 %v338
      %v1429 = vunpack.c.l.b16 %v339
      %v1430 = vunpack.c.l.b16 %v340
      %v1431 = vunpack.c.l.b16 %v341
      %v1432 = vunpack.c.l.b16 %v342
      %v1433 = vunpack.c.l.b16 %v343
      %v1434 = vunpack.c.l.b16 %v344
      %v1435 = vunpack.c.l.b16 %v345
      %v1436 = vunpack.c.l.b16 %v346
      %v1437 = vunpack.c.l.b16 %v347
      %v1438 = vunpack.c.l.b16 %v348
      %v1439 = vunpack.c.l.b16 %v349
      %v1440 = vunpack.c.l.b16 %v350
      %v1441 = vunpack.c.l.b16 %v351
      %v1442 = vunpack.c.l.b16 %v352
      %v1443 = vunpack.c.l.b16 %v353
      %v1444 = vunpack.c.l.b16 %v354
      %v1445 = vunpack.c.l.b16 %v355
      %v1446 = vunpack.c.l.b16 %v356
      %v1447 = vunpack.c.l.b16 %v357
      %v1448 = vunpack.c.l.b16 %v358
      %v1449 = vunpack.c.l.b16 %v359
      %v1450 = vunpack.c.l.b16 %v360
      %v1451 = vpack.c.b16 %v1420, %v1419
      %v1452 = vpack.c.b16 %v1422, %v1421
      %v1453 = vpack.c.b16 %v1424, %v1423
      %v1454 = vpack.c.b16 %v1426, %v1425
      %v1455 = vpack.c.b16 %v1428, %v1427
      %v1456 = vpack.c.b16 %v1430, %v1429
      %v1457 = vpack.c.b16 %v1432, %v1431
      %v1458 = vpack.c.b16 %v1434, %v1433
      %v1459 = vpack.c.b16 %v1436, %v1435
      %v1460 = vpack.c.b16 %v1438, %v1437
      %v1461 = vpack.c.b16 %v1440, %v1439
      %v1462 = vpack.c.b16 %v1442, %v1441
      %v1463 = vpack.c.b16 %v1444, %v1443
      %v1464 = vpack.c.b16 %v1446, %v1445
      %v1465 = vpack.c.b16 %v1448, %v1447
      %v1466 = vpack.c.b16 %v1450, %v1449
      %1467 = vrot.lane.b32.xlu0 %v1451, 24
      %v1468 = vpop.permute.xlu0 %1467
      %1469 = vrot.lane.b32.xlu0 %v1452, 24
      %v1470 = vpop.permute.xlu0 %1469
      %1471 = vrot.lane.b32.xlu0 %v1453, 24
      %v1472 = vpop.permute.xlu0 %1471
      %1473 = vrot.lane.b32.xlu0 %v1454, 24
      %v1474 = vpop.permute.xlu0 %1473
      %1475 = vrot.lane.b32.xlu0 %v1455, 24
      %v1476 = vpop.permute.xlu0 %1475
      %1477 = vrot.lane.b32.xlu0 %v1456, 24
      %v1478 = vpop.permute.xlu0 %1477
      %1479 = vrot.lane.b32.xlu0 %v1457, 24
      %v1480 = vpop.permute.xlu0 %1479
      %1481 = vrot.lane.b32.xlu0 %v1458, 24
      %v1482 = vpop.permute.xlu0 %1481
      %1483 = vrot.lane.b32.xlu0 %v1459, 24
      %v1484 = vpop.permute.xlu0 %1483
      %1485 = vrot.lane.b32.xlu0 %v1460, 24
      %v1486 = vpop.permute.xlu0 %1485
      %1487 = vrot.lane.b32.xlu0 %v1461, 24
      %v1488 = vpop.permute.xlu0 %1487
      %1489 = vrot.lane.b32.xlu0 %v1462, 24
      %v1490 = vpop.permute.xlu0 %1489
      %1491 = vrot.lane.b32.xlu0 %v1463, 24
      %v1492 = vpop.permute.xlu0 %1491
      %1493 = vrot.lane.b32.xlu0 %v1464, 24
      %v1494 = vpop.permute.xlu0 %1493
      %1495 = vrot.lane.b32.xlu0 %v1465, 24
      %v1496 = vpop.permute.xlu0 %1495
      %1497 = vrot.lane.b32.xlu0 %v1466, 24
      %v1498 = vpop.permute.xlu0 %1497
      %v1515 = vunpack.c.l.b16 %v361
      %v1516 = vunpack.c.l.b16 %v362
      %v1517 = vunpack.c.l.b16 %v363
      %v1518 = vunpack.c.l.b16 %v364
      %v1519 = vunpack.c.l.b16 %v365
      %v1520 = vunpack.c.l.b16 %v366
      %v1521 = vunpack.c.l.b16 %v367
      %v1522 = vunpack.c.l.b16 %v368
      %v1523 = vunpack.c.l.b16 %v369
      %v1524 = vunpack.c.l.b16 %v370
      %v1525 = vunpack.c.l.b16 %v371
      %v1526 = vunpack.c.l.b16 %v372
      %v1527 = vunpack.c.l.b16 %v373
      %v1528 = vunpack.c.l.b16 %v374
      %v1529 = vunpack.c.l.b16 %v375
      %v1530 = vunpack.c.l.b16 %v376
      %v1531 = vpack.c.b16 %v1515, %v1515
      %v1532 = vpack.c.b16 %v1516, %v1516
      %v1533 = vpack.c.b16 %v1517, %v1517
      %v1534 = vpack.c.b16 %v1518, %v1518
      %v1535 = vpack.c.b16 %v1519, %v1519
      %v1536 = vpack.c.b16 %v1520, %v1520
      %v1537 = vpack.c.b16 %v1521, %v1521
      %v1538 = vpack.c.b16 %v1522, %v1522
      %v1539 = vpack.c.b16 %v1523, %v1523
      %v1540 = vpack.c.b16 %v1524, %v1524
      %v1541 = vpack.c.b16 %v1525, %v1525
      %v1542 = vpack.c.b16 %v1526, %v1526
      %v1543 = vpack.c.b16 %v1527, %v1527
      %v1544 = vpack.c.b16 %v1528, %v1528
      %v1545 = vpack.c.b16 %v1529, %v1529
      %v1546 = vpack.c.b16 %v1530, %v1530
      %v1548 = vshrl.u32 %v1451, 16
      %v1550 = vshll.u32 %v1451, 16
      %v1552 = vrot.slane %v1550, 1
      %v1553 = vor.u32 %v1548, %v1552
      %v1555 = vshll.u32 %v1531, 16
      %v1557 = vrot.slane %v1555, 1
      %v1558 = vsel %vm521, %v1553, %v1557
      %v1560 = vshrl.u32 %v1452, 16
      %v1562 = vshll.u32 %v1452, 16
      %v1564 = vrot.slane %v1562, 1
      %v1565 = vor.u32 %v1560, %v1564
      %v1567 = vshll.u32 %v1532, 16
      %v1569 = vrot.slane %v1567, 1
      %v1570 = vsel %vm521, %v1565, %v1569
      %v1572 = vshrl.u32 %v1453, 16
      %v1574 = vshll.u32 %v1453, 16
      %v1576 = vrot.slane %v1574, 1
      %v1577 = vor.u32 %v1572, %v1576
      %v1579 = vshll.u32 %v1533, 16
      %v1581 = vrot.slane %v1579, 1
      %v1582 = vsel %vm521, %v1577, %v1581
      %v1584 = vshrl.u32 %v1454, 16
      %v1586 = vshll.u32 %v1454, 16
      %v1588 = vrot.slane %v1586, 1
      %v1589 = vor.u32 %v1584, %v1588
      %v1591 = vshll.u32 %v1534, 16
      %v1593 = vrot.slane %v1591, 1
      %v1594 = vsel %vm521, %v1589, %v1593
      %v1596 = vshrl.u32 %v1455, 16
      %v1598 = vshll.u32 %v1455, 16
      %v1600 = vrot.slane %v1598, 1
      %v1601 = vor.u32 %v1596, %v1600
      %v1603 = vshll.u32 %v1535, 16
      %v1605 = vrot.slane %v1603, 1
      %v1606 = vsel %vm521, %v1601, %v1605
      %v1608 = vshrl.u32 %v1456, 16
      %v1610 = vshll.u32 %v1456, 16
      %v1612 = vrot.slane %v1610, 1
      %v1613 = vor.u32 %v1608, %v1612
      %v1615 = vshll.u32 %v1536, 16
      %v1617 = vrot.slane %v1615, 1
      %v1618 = vsel %vm521, %v1613, %v1617
      %v1620 = vshrl.u32 %v1457, 16
      %v1622 = vshll.u32 %v1457, 16
      %v1624 = vrot.slane %v1622, 1
      %v1625 = vor.u32 %v1620, %v1624
      %v1627 = vshll.u32 %v1537, 16
      %v1629 = vrot.slane %v1627, 1
      %v1630 = vsel %vm521, %v1625, %v1629
      %v1632 = vshrl.u32 %v1458, 16
      %v1634 = vshll.u32 %v1458, 16
      %v1636 = vrot.slane %v1634, 1
      %v1637 = vor.u32 %v1632, %v1636
      %v1639 = vshll.u32 %v1538, 16
      %v1641 = vrot.slane %v1639, 1
      %v1642 = vsel %vm521, %v1637, %v1641
      %v1644 = vshrl.u32 %v1459, 16
      %v1646 = vshll.u32 %v1459, 16
      %v1648 = vrot.slane %v1646, 1
      %v1649 = vor.u32 %v1644, %v1648
      %v1651 = vshll.u32 %v1539, 16
      %v1653 = vrot.slane %v1651, 1
      %v1654 = vsel %vm521, %v1649, %v1653
      %v1656 = vshrl.u32 %v1460, 16
      %v1658 = vshll.u32 %v1460, 16
      %v1660 = vrot.slane %v1658, 1
      %v1661 = vor.u32 %v1656, %v1660
      %v1663 = vshll.u32 %v1540, 16
      %v1665 = vrot.slane %v1663, 1
      %v1666 = vsel %vm521, %v1661, %v1665
      %v1668 = vshrl.u32 %v1461, 16
      %v1670 = vshll.u32 %v1461, 16
      %v1672 = vrot.slane %v1670, 1
      %v1673 = vor.u32 %v1668, %v1672
      %v1675 = vshll.u32 %v1541, 16
      %v1677 = vrot.slane %v1675, 1
      %v1678 = vsel %vm521, %v1673, %v1677
      %v1680 = vshrl.u32 %v1462, 16
      %v1682 = vshll.u32 %v1462, 16
      %v1684 = vrot.slane %v1682, 1
      %v1685 = vor.u32 %v1680, %v1684
      %v1687 = vshll.u32 %v1542, 16
      %v1689 = vrot.slane %v1687, 1
      %v1690 = vsel %vm521, %v1685, %v1689
      %v1692 = vshrl.u32 %v1463, 16
      %v1694 = vshll.u32 %v1463, 16
      %v1696 = vrot.slane %v1694, 1
      %v1697 = vor.u32 %v1692, %v1696
      %v1699 = vshll.u32 %v1543, 16
      %v1701 = vrot.slane %v1699, 1
      %v1702 = vsel %vm521, %v1697, %v1701
      %v1704 = vshrl.u32 %v1464, 16
      %v1706 = vshll.u32 %v1464, 16
      %v1708 = vrot.slane %v1706, 1
      %v1709 = vor.u32 %v1704, %v1708
      %v1711 = vshll.u32 %v1544, 16
      %v1713 = vrot.slane %v1711, 1
      %v1714 = vsel %vm521, %v1709, %v1713
      %v1716 = vshrl.u32 %v1465, 16
      %v1718 = vshll.u32 %v1465, 16
      %v1720 = vrot.slane %v1718, 1
      %v1721 = vor.u32 %v1716, %v1720
      %v1723 = vshll.u32 %v1545, 16
      %v1725 = vrot.slane %v1723, 1
      %v1726 = vsel %vm521, %v1721, %v1725
      %v1728 = vshrl.u32 %v1466, 16
      %v1730 = vshll.u32 %v1466, 16
      %v1732 = vrot.slane %v1730, 1
      %v1733 = vor.u32 %v1728, %v1732
      %v1735 = vshll.u32 %v1546, 16
      %v1737 = vrot.slane %v1735, 1
      %v1738 = vsel %vm521, %v1733, %v1737
      %1739 = vrot.lane.b32.xlu0 %v1558, 28
      %v1740 = vpop.permute.xlu0 %1739
      %1741 = vrot.lane.b32.xlu0 %v1570, 28
      %v1742 = vpop.permute.xlu0 %1741
      %1743 = vrot.lane.b32.xlu0 %v1582, 28
      %v1744 = vpop.permute.xlu0 %1743
      %1745 = vrot.lane.b32.xlu0 %v1594, 28
      %v1746 = vpop.permute.xlu0 %1745
      %1747 = vrot.lane.b32.xlu0 %v1606, 28
      %v1748 = vpop.permute.xlu0 %1747
      %1749 = vrot.lane.b32.xlu0 %v1618, 28
      %v1750 = vpop.permute.xlu0 %1749
      %1751 = vrot.lane.b32.xlu0 %v1630, 28
      %v1752 = vpop.permute.xlu0 %1751
      %1753 = vrot.lane.b32.xlu0 %v1642, 28
      %v1754 = vpop.permute.xlu0 %1753
      %1755 = vrot.lane.b32.xlu0 %v1654, 28
      %v1756 = vpop.permute.xlu0 %1755
      %1757 = vrot.lane.b32.xlu0 %v1666, 28
      %v1758 = vpop.permute.xlu0 %1757
      %1759 = vrot.lane.b32.xlu0 %v1678, 28
      %v1760 = vpop.permute.xlu0 %1759
      %1761 = vrot.lane.b32.xlu0 %v1690, 28
      %v1762 = vpop.permute.xlu0 %1761
      %1763 = vrot.lane.b32.xlu0 %v1702, 28
      %v1764 = vpop.permute.xlu0 %1763
      %1765 = vrot.lane.b32.xlu0 %v1714, 28
      %v1766 = vpop.permute.xlu0 %1765
      %1767 = vrot.lane.b32.xlu0 %v1726, 28
      %v1768 = vpop.permute.xlu0 %1767
      %1769 = vrot.lane.b32.xlu0 %v1738, 28
      %v1770 = vpop.permute.xlu0 %1769
      %v1787 = vunpack.c.l.b16 %v377
      %v1788 = vunpack.c.l.b16 %v378
      %v1789 = vunpack.c.l.b16 %v379
      %v1790 = vunpack.c.l.b16 %v380
      %v1791 = vunpack.c.l.b16 %v381
      %v1792 = vunpack.c.l.b16 %v382
      %v1793 = vunpack.c.l.b16 %v383
      %v1794 = vunpack.c.l.b16 %v384
      %v1795 = vunpack.c.l.b16 %v385
      %v1796 = vunpack.c.l.b16 %v386
      %v1797 = vunpack.c.l.b16 %v387
      %v1798 = vunpack.c.l.b16 %v388
      %v1799 = vunpack.c.l.b16 %v389
      %v1800 = vunpack.c.l.b16 %v390
      %v1801 = vunpack.c.l.b16 %v391
      %v1802 = vunpack.c.l.b16 %v392
      %v1803 = vpack.c.b16 %v1420, %v1787
      %v1804 = vpack.c.b16 %v1422, %v1788
      %v1805 = vpack.c.b16 %v1424, %v1789
      %v1806 = vpack.c.b16 %v1426, %v1790
      %v1807 = vpack.c.b16 %v1428, %v1791
      %v1808 = vpack.c.b16 %v1430, %v1792
      %v1809 = vpack.c.b16 %v1432, %v1793
      %v1810 = vpack.c.b16 %v1434, %v1794
      %v1811 = vpack.c.b16 %v1436, %v1795
      %v1812 = vpack.c.b16 %v1438, %v1796
      %v1813 = vpack.c.b16 %v1440, %v1797
      %v1814 = vpack.c.b16 %v1442, %v1798
      %v1815 = vpack.c.b16 %v1444, %v1799
      %v1816 = vpack.c.b16 %v1446, %v1800
      %v1817 = vpack.c.b16 %v1448, %v1801
      %v1818 = vpack.c.b16 %v1450, %v1802
      %v1819 = vrot.slane %v1803, 1
      %v1820 = vrot.slane %v1531, 1
      %v1821 = vsel %vm794, %v1819, %v1820
      %v1822 = vrot.slane %v1804, 1
      %v1823 = vrot.slane %v1532, 1
      %v1824 = vsel %vm794, %v1822, %v1823
      %v1825 = vrot.slane %v1805, 1
      %v1826 = vrot.slane %v1533, 1
      %v1827 = vsel %vm794, %v1825, %v1826
      %v1828 = vrot.slane %v1806, 1
      %v1829 = vrot.slane %v1534, 1
      %v1830 = vsel %vm794, %v1828, %v1829
      %v1831 = vrot.slane %v1807, 1
      %v1832 = vrot.slane %v1535, 1
      %v1833 = vsel %vm794, %v1831, %v1832
      %v1834 = vrot.slane %v1808, 1
      %v1835 = vrot.slane %v1536, 1
      %v1836 = vsel %vm794, %v1834, %v1835
      %v1837 = vrot.slane %v1809, 1
      %v1838 = vrot.slane %v1537, 1
      %v1839 = vsel %vm794, %v1837, %v1838
      %v1840 = vrot.slane %v1810, 1
      %v1841 = vrot.slane %v1538, 1
      %v1842 = vsel %vm794, %v1840, %v1841
      %v1843 = vrot.slane %v1811, 1
      %v1844 = vrot.slane %v1539, 1
      %v1845 = vsel %vm794, %v1843, %v1844
      %v1846 = vrot.slane %v1812, 1
      %v1847 = vrot.slane %v1540, 1
      %v1848 = vsel %vm794, %v1846, %v1847
      %v1849 = vrot.slane %v1813, 1
      %v1850 = vrot.slane %v1541, 1
      %v1851 = vsel %vm794, %v1849, %v1850
      %v1852 = vrot.slane %v1814, 1
      %v1853 = vrot.slane %v1542, 1
      %v1854 = vsel %vm794, %v1852, %v1853
      %v1855 = vrot.slane %v1815, 1
      %v1856 = vrot.slane %v1543, 1
      %v1857 = vsel %vm794, %v1855, %v1856
      %v1858 = vrot.slane %v1816, 1
      %v1859 = vrot.slane %v1544, 1
      %v1860 = vsel %vm794, %v1858, %v1859
      %v1861 = vrot.slane %v1817, 1
      %v1862 = vrot.slane %v1545, 1
      %v1863 = vsel %vm794, %v1861, %v1862
      %v1864 = vrot.slane %v1818, 1
      %v1865 = vrot.slane %v1546, 1
      %v1866 = vsel %vm794, %v1864, %v1865
      %1867 = vrot.lane.b32.xlu0 %v1821, 32
      %v1868 = vpop.permute.xlu0 %1867
      %1869 = vrot.lane.b32.xlu0 %v1824, 32
      %v1870 = vpop.permute.xlu0 %1869
      %1871 = vrot.lane.b32.xlu0 %v1827, 32
      %v1872 = vpop.permute.xlu0 %1871
      %1873 = vrot.lane.b32.xlu0 %v1830, 32
      %v1874 = vpop.permute.xlu0 %1873
      %1875 = vrot.lane.b32.xlu0 %v1833, 32
      %v1876 = vpop.permute.xlu0 %1875
      %1877 = vrot.lane.b32.xlu0 %v1836, 32
      %v1878 = vpop.permute.xlu0 %1877
      %1879 = vrot.lane.b32.xlu0 %v1839, 32
      %v1880 = vpop.permute.xlu0 %1879
      %1881 = vrot.lane.b32.xlu0 %v1842, 32
      %v1882 = vpop.permute.xlu0 %1881
      %1883 = vrot.lane.b32.xlu0 %v1845, 32
      %v1884 = vpop.permute.xlu0 %1883
      %1885 = vrot.lane.b32.xlu0 %v1848, 32
      %v1886 = vpop.permute.xlu0 %1885
      %1887 = vrot.lane.b32.xlu0 %v1851, 32
      %v1888 = vpop.permute.xlu0 %1887
      %1889 = vrot.lane.b32.xlu0 %v1854, 32
      %v1890 = vpop.permute.xlu0 %1889
      %1891 = vrot.lane.b32.xlu0 %v1857, 32
      %v1892 = vpop.permute.xlu0 %1891
      %1893 = vrot.lane.b32.xlu0 %v1860, 32
      %v1894 = vpop.permute.xlu0 %1893
      %1895 = vrot.lane.b32.xlu0 %v1863, 32
      %v1896 = vpop.permute.xlu0 %1895
      %1897 = vrot.lane.b32.xlu0 %v1866, 32
      %v1898 = vpop.permute.xlu0 %1897
      %vm1899 = vcmask 31744
      %v1901 = vsel %vm1899, %v457, %v715
      %v1903 = vsel %vm1899, %v458, %v717
      %v1905 = vsel %vm1899, %v459, %v719
      %v1907 = vsel %vm1899, %v460, %v721
      %v1909 = vsel %vm1899, %v461, %v723
      %v1911 = vsel %vm1899, %v462, %v725
      %v1913 = vsel %vm1899, %v463, %v727
      %v1915 = vsel %vm1899, %v464, %v729
      %v1917 = vsel %vm1899, %v465, %v731
      %v1919 = vsel %vm1899, %v466, %v733
      %v1921 = vsel %vm1899, %v467, %v735
      %v1923 = vsel %vm1899, %v468, %v737
      %v1925 = vsel %vm1899, %v469, %v739
      %v1927 = vsel %vm1899, %v470, %v741
      %v1929 = vsel %vm1899, %v471, %v743
      %v1931 = vsel %vm1899, %v472, %v745
      %vm1932 = vcmask 64512
      %v1934 = vsel %vm1932, %v1901, %v844
      %v1936 = vsel %vm1932, %v1903, %v846
      %v1938 = vsel %vm1932, %v1905, %v848
      %v1940 = vsel %vm1932, %v1907, %v850
      %v1942 = vsel %vm1932, %v1909, %v852
      %v1944 = vsel %vm1932, %v1911, %v854
      %v1946 = vsel %vm1932, %v1913, %v856
      %v1948 = vsel %vm1932, %v1915, %v858
      %v1950 = vsel %vm1932, %v1917, %v860
      %v1952 = vsel %vm1932, %v1919, %v862
      %v1954 = vsel %vm1932, %v1921, %v864
      %v1956 = vsel %vm1932, %v1923, %v866
      %v1958 = vsel %vm1932, %v1925, %v868
      %v1960 = vsel %vm1932, %v1927, %v870
      %v1962 = vsel %vm1932, %v1929, %v872
      %v1964 = vsel %vm1932, %v1931, %v874
      %vm1965 = vcmask 97280
      %v1967 = vsel %vm1965, %v1934, %v956
      %v1969 = vsel %vm1965, %v1936, %v958
      %v1971 = vsel %vm1965, %v1938, %v960
      %v1973 = vsel %vm1965, %v1940, %v962
      %v1975 = vsel %vm1965, %v1942, %v964
      %v1977 = vsel %vm1965, %v1944, %v966
      %v1979 = vsel %vm1965, %v1946, %v968
      %v1981 = vsel %vm1965, %v1948, %v970
      %v1983 = vsel %vm1965, %v1950, %v972
      %v1985 = vsel %vm1965, %v1952, %v974
      %v1987 = vsel %vm1965, %v1954, %v976
      %v1989 = vsel %vm1965, %v1956, %v978
      %v1991 = vsel %vm1965, %v1958, %v980
      %v1993 = vsel %vm1965, %v1960, %v982
      %v1995 = vsel %vm1965, %v1962, %v984
      %v1997 = vsel %vm1965, %v1964, %v986
      %vm1998 = vcmask 130048
      %v2000 = vsel %vm1998, %v1967, %v1228
      %v2002 = vsel %vm1998, %v1969, %v1230
      %v2004 = vsel %vm1998, %v1971, %v1232
      %v2006 = vsel %vm1998, %v1973, %v1234
      %v2008 = vsel %vm1998, %v1975, %v1236
      %v2010 = vsel %vm1998, %v1977, %v1238
      %v2012 = vsel %vm1998, %v1979, %v1240
      %v2014 = vsel %vm1998, %v1981, %v1242
      %v2016 = vsel %vm1998, %v1983, %v1244
      %v2018 = vsel %vm1998, %v1985, %v1246
      %v2020 = vsel %vm1998, %v1987, %v1248
      %v2022 = vsel %vm1998, %v1989, %v1250
      %v2024 = vsel %vm1998, %v1991, %v1252
      %v2026 = vsel %vm1998, %v1993, %v1254
      %v2028 = vsel %vm1998, %v1995, %v1256
      %v2030 = vsel %vm1998, %v1997, %v1258
      %vm2031 = vcmask 162816
      %v2033 = vsel %vm2031, %v2000, %v1356
      %v2035 = vsel %vm2031, %v2002, %v1358
      %v2037 = vsel %vm2031, %v2004, %v1360
      %v2039 = vsel %vm2031, %v2006, %v1362
      %v2041 = vsel %vm2031, %v2008, %v1364
      %v2043 = vsel %vm2031, %v2010, %v1366
      %v2045 = vsel %vm2031, %v2012, %v1368
      %v2047 = vsel %vm2031, %v2014, %v1370
      %v2049 = vsel %vm2031, %v2016, %v1372
      %v2051 = vsel %vm2031, %v2018, %v1374
      %v2053 = vsel %vm2031, %v2020, %v1376
      %v2055 = vsel %vm2031, %v2022, %v1378
      %v2057 = vsel %vm2031, %v2024, %v1380
      %v2059 = vsel %vm2031, %v2026, %v1382
      %v2061 = vsel %vm2031, %v2028, %v1384
      %v2063 = vsel %vm2031, %v2030, %v1386
      %vm2064 = vcmask 195584
      %v2066 = vsel %vm2064, %v2033, %v1468
      %v2068 = vsel %vm2064, %v2035, %v1470
      %v2070 = vsel %vm2064, %v2037, %v1472
      %v2072 = vsel %vm2064, %v2039, %v1474
      %v2074 = vsel %vm2064, %v2041, %v1476
      %v2076 = vsel %vm2064, %v2043, %v1478
      %v2078 = vsel %vm2064, %v2045, %v1480
      %v2080 = vsel %vm2064, %v2047, %v1482
      %v2082 = vsel %vm2064, %v2049, %v1484
      %v2084 = vsel %vm2064, %v2051, %v1486
      %v2086 = vsel %vm2064, %v2053, %v1488
      %v2088 = vsel %vm2064, %v2055, %v1490
      %v2090 = vsel %vm2064, %v2057, %v1492
      %v2092 = vsel %vm2064, %v2059, %v1494
      %v2094 = vsel %vm2064, %v2061, %v1496
      %v2096 = vsel %vm2064, %v2063, %v1498
      %vm2097 = vcmask 228352
      %v2099 = vsel %vm2097, %v2066, %v1740
      %v2101 = vsel %vm2097, %v2068, %v1742
      %v2103 = vsel %vm2097, %v2070, %v1744
      %v2105 = vsel %vm2097, %v2072, %v1746
      %v2107 = vsel %vm2097, %v2074, %v1748
      %v2109 = vsel %vm2097, %v2076, %v1750
      %v2111 = vsel %vm2097, %v2078, %v1752
      %v2113 = vsel %vm2097, %v2080, %v1754
      %v2115 = vsel %vm2097, %v2082, %v1756
      %v2117 = vsel %vm2097, %v2084, %v1758
      %v2119 = vsel %vm2097, %v2086, %v1760
      %v2121 = vsel %vm2097, %v2088, %v1762
      %v2123 = vsel %vm2097, %v2090, %v1764
      %v2125 = vsel %vm2097, %v2092, %v1766
      %v2127 = vsel %vm2097, %v2094, %v1768
      %v2129 = vsel %vm2097, %v2096, %v1770
      %vm2130 = vcmask 261120
      %v2132 = vsel %vm2130, %v2099, %v1868
      %v2134 = vsel %vm2130, %v2101, %v1870
      %v2136 = vsel %vm2130, %v2103, %v1872
      %v2138 = vsel %vm2130, %v2105, %v1874
      %v2140 = vsel %vm2130, %v2107, %v1876
      %v2142 = vsel %vm2130, %v2109, %v1878
      %v2144 = vsel %vm2130, %v2111, %v1880
      %v2146 = vsel %vm2130, %v2113, %v1882
      %v2148 = vsel %vm2130, %v2115, %v1884
      %v2150 = vsel %vm2130, %v2117, %v1886
      %v2152 = vsel %vm2130, %v2119, %v1888
      %v2154 = vsel %vm2130, %v2121, %v1890
      %v2156 = vsel %vm2130, %v2123, %v1892
      %v2158 = vsel %vm2130, %v2125, %v1894
      %v2160 = vsel %vm2130, %v2127, %v1896
      %v2162 = vsel %vm2130, %v2129, %v1898
      %v2163 = vld [vmem:[%s1] sm:$0xf]
      %v2164 = vld [vmem:[%s1 + $0x4] sm:$0xf]
      %v2165 = vld [vmem:[%s1 + $0x8] sm:$0xf]
      %v2166 = vld [vmem:[%s1 + $0xc] sm:$0xf]
      %v2167 = vld [vmem:[%s1 + $0x10] sm:$0x3]
      %v2173 = vunpack.c.l.b16 %v2163
      %v2174 = vunpack.c.l.b16 %v2164
      %v2175 = vunpack.c.l.b16 %v2165
      %v2176 = vunpack.c.l.b16 %v2166
      %v2177 = vunpack.c.l.b16 %v2167
      %v2178 = vpack.c.b16 %v2174, %v2173
      %v2179 = vpack.c.b16 %v2176, %v2175
      %v2180 = vpack.c.b16 %v2177, %v2177
      %vm2183 = vcmask 293888
      %v2184 = vsel %vm2183, %v2132, 0
      %v2186 = vsel %vm2183, %v2134, 0
      %v2188 = vsel %vm2183, %v2136, 0
      %v2190 = vsel %vm2183, %v2138, 0
      %v2192 = vsel %vm2183, %v2140, 0
      %v2194 = vsel %vm2183, %v2142, 0
      %v2196 = vsel %vm2183, %v2144, 0
      %v2198 = vsel %vm2183, %v2146, 0
      %v2200 = vsel %vm2183, %v2148, 0
      %v2202 = vsel %vm2183, %v2150, 0
      %v2204 = vsel %vm2183, %v2152, 0
      %v2206 = vsel %vm2183, %v2154, 0
      %v2208 = vsel %vm2183, %v2156, 0
      %v2210 = vsel %vm2183, %v2158, 0
      %v2212 = vsel %vm2183, %v2160, 0
      %v2214 = vsel %vm2183, %v2162, 0
      %vm2216 = vcmask 1041408
      %v2218 = vsel %vm2216, %v2180, 0
      %2220 = vmatprep.subr.bf16.mxu0 0
      %2221 = vmatpush1.bf16.msra.mxu0 0
      %2222 = vmatprep.subr.bf16.mxu0 0
      %2223 = vmatpush1.bf16.msra.mxu0 0
      %2224 = vmatprep.subr.bf16.mxu0 0
      %2225 = vmatpush1.bf16.msra.mxu0 0
      %2226 = vmatprep.subr.bf16.mxu0 0
      %2227 = vmatpush1.bf16.msra.mxu0 0
      %2228 = vmatprep.subr.bf16.mxu0 0
      %2229 = vmatpush1.bf16.msra.mxu0 0
      %2230 = vmatprep.subr.bf16.mxu0 0
      %2231 = vmatpush1.bf16.msra.mxu0 %v2218
      %2232 = vmatprep.subr.bf16.mxu0 0
      %2233 = vmatpush1.bf16.msra.mxu0 %v2179
      %2234 = vmatprep.subr.bf16.mxu0 0
      %2235 = vmatpush1.bf16.msra.mxu0 %v2178
      %2236 = vmatprep.subr.bf16.mxu0 0
      %2237 = vmatpush2.bf16.msra.mxu0 0
      %2238 = vmatprep.subr.bf16.mxu0 0
      %2239 = vmatpush2.bf16.msra.mxu0 0
      %2240 = vmatprep.subr.bf16.mxu0 0
      %2241 = vmatpush2.bf16.msra.mxu0 0
      %2242 = vmatprep.subr.bf16.mxu0 0
      %2243 = vmatpush2.bf16.msra.mxu0 0
      %2244 = vmatprep.subr.bf16.mxu0 0
      %2245 = vmatpush2.bf16.msra.mxu0 0
      %2246 = vmatprep.subr.bf16.mxu0 0
      %2247 = vmatpush2.bf16.msra.mxu0 0
      %2248 = vmatprep.subr.bf16.mxu0 0
      %2249 = vmatpush2.bf16.msra.mxu0 0
      %2250 = vmatprep.subr.bf16.mxu0 0
      %2251 = vmatpush2.bf16.msra.mxu0 0
      %2252 = vmatprep.mubr.bf16.mxu0 0
      %2253 = vmatmul.mubr.bf16.gmra.mxu0 %v2184
      %v2254 = vpop.f32.mrf.mxu0
      %v2255 = vadd.f32 0.0, %v2254
      %v2256 = vpop.f32.mrf.mxu0
      %v2257 = vpop.f32.mrf.mxu0
      %v2258 = vadd.f32 0.0, %v2257
      %v2259 = vpop.f32.mrf.mxu0
      %2260 = vmatprep.mubr.bf16.mxu0 0
      %2261 = vmatmul.mubr.bf16.gmra.mxu0 %v2186
      %v2262 = vpop.f32.mrf.mxu0
      %v2263 = vadd.f32 0.0, %v2262
      %v2264 = vpop.f32.mrf.mxu0
      %v2265 = vpop.f32.mrf.mxu0
      %v2266 = vadd.f32 0.0, %v2265
      %v2267 = vpop.f32.mrf.mxu0
      %2268 = vmatprep.mubr.bf16.mxu0 0
      %2269 = vmatmul.mubr.bf16.gmra.mxu0 %v2188
      %v2270 = vpop.f32.mrf.mxu0
      %v2271 = vadd.f32 0.0, %v2270
      %v2272 = vpop.f32.mrf.mxu0
      %v2273 = vpop.f32.mrf.mxu0
      %v2274 = vadd.f32 0.0, %v2273
      %v2275 = vpop.f32.mrf.mxu0
      %2276 = vmatprep.mubr.bf16.mxu0 0
      %2277 = vmatmul.mubr.bf16.gmra.mxu0 %v2190
      %v2278 = vpop.f32.mrf.mxu0
      %v2279 = vadd.f32 0.0, %v2278
      %v2280 = vpop.f32.mrf.mxu0
      %v2281 = vpop.f32.mrf.mxu0
      %v2282 = vadd.f32 0.0, %v2281
      %v2283 = vpop.f32.mrf.mxu0
      %2284 = vmatprep.mubr.bf16.mxu0 0
      %2285 = vmatmul.mubr.bf16.gmra.mxu0 %v2192
      %v2286 = vpop.f32.mrf.mxu0
      %v2287 = vadd.f32 0.0, %v2286
      %v2288 = vpop.f32.mrf.mxu0
      %v2289 = vpop.f32.mrf.mxu0
      %v2290 = vadd.f32 0.0, %v2289
      %v2291 = vpop.f32.mrf.mxu0
      %2292 = vmatprep.mubr.bf16.mxu0 0
      %2293 = vmatmul.mubr.bf16.gmra.mxu0 %v2194
      %v2294 = vpop.f32.mrf.mxu0
      %v2295 = vadd.f32 0.0, %v2294
      %v2296 = vpop.f32.mrf.mxu0
      %v2297 = vpop.f32.mrf.mxu0
      %v2298 = vadd.f32 0.0, %v2297
      %v2299 = vpop.f32.mrf.mxu0
      %2300 = vmatprep.mubr.bf16.mxu0 0
      %2301 = vmatmul.mubr.bf16.gmra.mxu0 %v2196
      %v2302 = vpop.f32.mrf.mxu0
      %v2303 = vadd.f32 0.0, %v2302
      %v2304 = vpop.f32.mrf.mxu0
      %v2305 = vpop.f32.mrf.mxu0
      %v2306 = vadd.f32 0.0, %v2305
      %v2307 = vpop.f32.mrf.mxu0
      %2308 = vmatprep.mubr.bf16.mxu0 0
      %2309 = vmatmul.mubr.bf16.gmra.mxu0 %v2198
      %v2310 = vpop.f32.mrf.mxu0
      %v2311 = vadd.f32 0.0, %v2310
      %v2312 = vpop.f32.mrf.mxu0
      %v2313 = vpop.f32.mrf.mxu0
      %v2314 = vadd.f32 0.0, %v2313
      %v2315 = vpop.f32.mrf.mxu0
      %2316 = vmatprep.mubr.bf16.mxu0 0
      %2317 = vmatmul.mubr.bf16.gmra.mxu0 %v2200
      %v2318 = vpop.f32.mrf.mxu0
      %v2319 = vadd.f32 0.0, %v2318
      %v2320 = vpop.f32.mrf.mxu0
      %v2321 = vpop.f32.mrf.mxu0
      %v2322 = vadd.f32 0.0, %v2321
      %v2323 = vpop.f32.mrf.mxu0
      %2324 = vmatprep.mubr.bf16.mxu0 0
      %2325 = vmatmul.mubr.bf16.gmra.mxu0 %v2202
      %v2326 = vpop.f32.mrf.mxu0
      %v2327 = vadd.f32 0.0, %v2326
      %v2328 = vpop.f32.mrf.mxu0
      %v2329 = vpop.f32.mrf.mxu0
      %v2330 = vadd.f32 0.0, %v2329
      %v2331 = vpop.f32.mrf.mxu0
      %2332 = vmatprep.mubr.bf16.mxu0 0
      %2333 = vmatmul.mubr.bf16.gmra.mxu0 %v2204
      %v2334 = vpop.f32.mrf.mxu0
      %v2335 = vadd.f32 0.0, %v2334
      %v2336 = vpop.f32.mrf.mxu0
      %v2337 = vpop.f32.mrf.mxu0
      %v2338 = vadd.f32 0.0, %v2337
      %v2339 = vpop.f32.mrf.mxu0
      %2340 = vmatprep.mubr.bf16.mxu0 0
      %2341 = vmatmul.mubr.bf16.gmra.mxu0 %v2206
      %v2342 = vpop.f32.mrf.mxu0
      %v2343 = vadd.f32 0.0, %v2342
      %v2344 = vpop.f32.mrf.mxu0
      %v2345 = vpop.f32.mrf.mxu0
      %v2346 = vadd.f32 0.0, %v2345
      %v2347 = vpop.f32.mrf.mxu0
      %2348 = vmatprep.mubr.bf16.mxu0 0
      %2349 = vmatmul.mubr.bf16.gmra.mxu0 %v2208
      %v2350 = vpop.f32.mrf.mxu0
      %v2351 = vadd.f32 0.0, %v2350
      %v2352 = vpop.f32.mrf.mxu0
      %v2353 = vpop.f32.mrf.mxu0
      %v2354 = vadd.f32 0.0, %v2353
      %v2355 = vpop.f32.mrf.mxu0
      %2356 = vmatprep.mubr.bf16.mxu0 0
      %2357 = vmatmul.mubr.bf16.gmra.mxu0 %v2210
      %v2358 = vpop.f32.mrf.mxu0
      %v2359 = vadd.f32 0.0, %v2358
      %v2360 = vpop.f32.mrf.mxu0
      %v2361 = vpop.f32.mrf.mxu0
      %v2362 = vadd.f32 0.0, %v2361
      %v2363 = vpop.f32.mrf.mxu0
      %2364 = vmatprep.mubr.bf16.mxu0 0
      %2365 = vmatmul.mubr.bf16.gmra.mxu0 %v2212
      %v2366 = vpop.f32.mrf.mxu0
      %v2367 = vadd.f32 0.0, %v2366
      %v2368 = vpop.f32.mrf.mxu0
      %v2369 = vpop.f32.mrf.mxu0
      %v2370 = vadd.f32 0.0, %v2369
      %v2371 = vpop.f32.mrf.mxu0
      %2372 = vmatprep.mubr.bf16.mxu0 0
      %2373 = vmatmul.mubr.bf16.gmra.mxu0 %v2214
      %v2374 = vpop.f32.mrf.mxu0
      %v2375 = vadd.f32 0.0, %v2374
      %v2376 = vpop.f32.mrf.mxu0
      %v2377 = vpop.f32.mrf.mxu0
      %v2378 = vadd.f32 0.0, %v2377
      %v2379 = vpop.f32.mrf.mxu0
      %2380 = vdwg.mxu0
      %v2381 = vld [vmem:[%s2] sm:$0x1]
      %v2383 = vlaneseq
      %v2384 = vshrl.u32 %v2383, 7
      %v2385 = vsub.s32 0, %v2384
      %v2386 = vrot.slane %v2381, %v2385
      %v2388 = vmul.f32 %v2255, %v2386
      %v2389 = vmul.f32 %v2258, %v2386
      %v2390 = vmul.f32 %v2263, %v2386
      %v2391 = vmul.f32 %v2266, %v2386
      %v2392 = vmul.f32 %v2271, %v2386
      %v2393 = vmul.f32 %v2274, %v2386
      %v2394 = vmul.f32 %v2279, %v2386
      %v2395 = vmul.f32 %v2282, %v2386
      %v2396 = vmul.f32 %v2287, %v2386
      %v2397 = vmul.f32 %v2290, %v2386
      %v2398 = vmul.f32 %v2295, %v2386
      %v2399 = vmul.f32 %v2298, %v2386
      %v2400 = vmul.f32 %v2303, %v2386
      %v2401 = vmul.f32 %v2306, %v2386
      %v2402 = vmul.f32 %v2311, %v2386
      %v2403 = vmul.f32 %v2314, %v2386
      %v2404 = vmul.f32 %v2319, %v2386
      %v2405 = vmul.f32 %v2322, %v2386
      %v2406 = vmul.f32 %v2327, %v2386
      %v2407 = vmul.f32 %v2330, %v2386
      %v2408 = vmul.f32 %v2335, %v2386
      %v2409 = vmul.f32 %v2338, %v2386
      %v2410 = vmul.f32 %v2343, %v2386
      %v2411 = vmul.f32 %v2346, %v2386
      %v2412 = vmul.f32 %v2351, %v2386
      %v2413 = vmul.f32 %v2354, %v2386
      %v2414 = vmul.f32 %v2359, %v2386
      %v2415 = vmul.f32 %v2362, %v2386
      %v2416 = vmul.f32 %v2367, %v2386
      %v2417 = vmul.f32 %v2370, %v2386
      %v2418 = vmul.f32 %v2375, %v2386
      %v2419 = vmul.f32 %v2378, %v2386
      %v2420 = vld [vmem:[%s3] sm:$0x1]
      %v2422 = vlaneseq
      %v2423 = vshrl.u32 %v2422, 7
      %v2424 = vsub.s32 0, %v2423
      %v2425 = vrot.slane %v2420, %v2424
      %v2427 = vadd.f32 %v2388, %v2425
      %v2428 = vadd.f32 %v2389, %v2425
      %v2429 = vadd.f32 %v2390, %v2425
      %v2430 = vadd.f32 %v2391, %v2425
      %v2431 = vadd.f32 %v2392, %v2425
      %v2432 = vadd.f32 %v2393, %v2425
      %v2433 = vadd.f32 %v2394, %v2425
      %v2434 = vadd.f32 %v2395, %v2425
      %v2435 = vadd.f32 %v2396, %v2425
      %v2436 = vadd.f32 %v2397, %v2425
      %v2437 = vadd.f32 %v2398, %v2425
      %v2438 = vadd.f32 %v2399, %v2425
      %v2439 = vadd.f32 %v2400, %v2425
      %v2440 = vadd.f32 %v2401, %v2425
      %v2441 = vadd.f32 %v2402, %v2425
      %v2442 = vadd.f32 %v2403, %v2425
      %v2443 = vadd.f32 %v2404, %v2425
      %v2444 = vadd.f32 %v2405, %v2425
      %v2445 = vadd.f32 %v2406, %v2425
      %v2446 = vadd.f32 %v2407, %v2425
      %v2447 = vadd.f32 %v2408, %v2425
      %v2448 = vadd.f32 %v2409, %v2425
      %v2449 = vadd.f32 %v2410, %v2425
      %v2450 = vadd.f32 %v2411, %v2425
      %v2451 = vadd.f32 %v2412, %v2425
      %v2452 = vadd.f32 %v2413, %v2425
      %v2453 = vadd.f32 %v2414, %v2425
      %v2454 = vadd.f32 %v2415, %v2425
      %v2455 = vadd.f32 %v2416, %v2425
      %v2456 = vadd.f32 %v2417, %v2425
      %v2457 = vadd.f32 %v2418, %v2425
      %v2458 = vadd.f32 %v2419, %v2425
      %v2459 = vmax.f32 %v2427, 0.0
      %v2460 = vmax.f32 %v2428, 0.0
      %v2461 = vmax.f32 %v2429, 0.0
      %v2462 = vmax.f32 %v2430, 0.0
      %v2463 = vmax.f32 %v2431, 0.0
      %v2464 = vmax.f32 %v2432, 0.0
      %v2465 = vmax.f32 %v2433, 0.0
      %v2466 = vmax.f32 %v2434, 0.0
      %v2467 = vmax.f32 %v2435, 0.0
      %v2468 = vmax.f32 %v2436, 0.0
      %v2469 = vmax.f32 %v2437, 0.0
      %v2470 = vmax.f32 %v2438, 0.0
      %v2471 = vmax.f32 %v2439, 0.0
      %v2472 = vmax.f32 %v2440, 0.0
      %v2473 = vmax.f32 %v2441, 0.0
      %v2474 = vmax.f32 %v2442, 0.0
      %v2475 = vmax.f32 %v2443, 0.0
      %v2476 = vmax.f32 %v2444, 0.0
      %v2477 = vmax.f32 %v2445, 0.0
      %v2478 = vmax.f32 %v2446, 0.0
      %v2479 = vmax.f32 %v2447, 0.0
      %v2480 = vmax.f32 %v2448, 0.0
      %v2481 = vmax.f32 %v2449, 0.0
      %v2482 = vmax.f32 %v2450, 0.0
      %v2483 = vmax.f32 %v2451, 0.0
      %v2484 = vmax.f32 %v2452, 0.0
      %v2485 = vmax.f32 %v2453, 0.0
      %v2486 = vmax.f32 %v2454, 0.0
      %v2487 = vmax.f32 %v2455, 0.0
      %v2488 = vmax.f32 %v2456, 0.0
      %v2489 = vmax.f32 %v2457, 0.0
      %v2490 = vmax.f32 %v2458, 0.0
      %2491 = vst.msk [vmem:[%s197] sm:$0xff] %vm2130, %v2459
      %2492 = vst.msk [vmem:[%s197 + $0x8] sm:$0xff] %vm2130, %v2460
      %2493 = vst.msk [vmem:[%s197 + $0x10] sm:$0xff] %vm2130, %v2461
      %2494 = vst.msk [vmem:[%s197 + $0x18] sm:$0xff] %vm2130, %v2462
      %2495 = vst.msk [vmem:[%s197 + $0x20] sm:$0xff] %vm2130, %v2463
      %2496 = vst.msk [vmem:[%s197 + $0x28] sm:$0xff] %vm2130, %v2464
      %2497 = vst.msk [vmem:[%s197 + $0x30] sm:$0xff] %vm2130, %v2465
      %2498 = vst.msk [vmem:[%s197 + $0x38] sm:$0xff] %vm2130, %v2466
      %2499 = vst.msk [vmem:[%s197 + $0x40] sm:$0xff] %vm2130, %v2467
      %2500 = vst.msk [vmem:[%s197 + $0x48] sm:$0xff] %vm2130, %v2468
      %2501 = vst.msk [vmem:[%s197 + $0x50] sm:$0xff] %vm2130, %v2469
      %2502 = vst.msk [vmem:[%s197 + $0x58] sm:$0xff] %vm2130, %v2470
      %2503 = vst.msk [vmem:[%s197 + $0x60] sm:$0xff] %vm2130, %v2471
      %2504 = vst.msk [vmem:[%s197 + $0x68] sm:$0xff] %vm2130, %v2472
      %2505 = vst.msk [vmem:[%s197 + $0x70] sm:$0xff] %vm2130, %v2473
      %2506 = vst.msk [vmem:[%s197 + $0x78] sm:$0xff] %vm2130, %v2474
      %2507 = vst.msk [vmem:[%s197 + $0x80] sm:$0xff] %vm2130, %v2475
      %2508 = vst.msk [vmem:[%s197 + $0x88] sm:$0xff] %vm2130, %v2476
      %2509 = vst.msk [vmem:[%s197 + $0x90] sm:$0xff] %vm2130, %v2477
      %2510 = vst.msk [vmem:[%s197 + $0x98] sm:$0xff] %vm2130, %v2478
      %2511 = vst.msk [vmem:[%s197 + $0xa0] sm:$0xff] %vm2130, %v2479
      %2512 = vst.msk [vmem:[%s197 + $0xa8] sm:$0xff] %vm2130, %v2480
      %2513 = vst.msk [vmem:[%s197 + $0xb0] sm:$0xff] %vm2130, %v2481
      %2514 = vst.msk [vmem:[%s197 + $0xb8] sm:$0xff] %vm2130, %v2482
      %2515 = vst.msk [vmem:[%s197 + $0xc0] sm:$0xff] %vm2130, %v2483
      %2516 = vst.msk [vmem:[%s197 + $0xc8] sm:$0xff] %vm2130, %v2484
      %2517 = vst.msk [vmem:[%s197 + $0xd0] sm:$0xff] %vm2130, %v2485
      %2518 = vst.msk [vmem:[%s197 + $0xd8] sm:$0xff] %vm2130, %v2486
      %2519 = vst.msk [vmem:[%s197 + $0xe0] sm:$0xff] %vm2130, %v2487
      %2520 = vst.msk [vmem:[%s197 + $0xe8] sm:$0xff] %vm2130, %v2488
      %2521 = vst.msk [vmem:[%s197 + $0xf0] sm:$0xff] %vm2130, %v2489
      %2522 = vst.msk [vmem:[%s197 + $0xf8] sm:$0xff] %vm2130, %v2490
      %p2523 = scmp.lt.s32.totalorder %s15, 1
      %s2524 = scalar_select %p2523, %s15, 1
      %s2525 = smul.addr %s2524, 32
      %s2526 = smul.addr %s2525, 8
      %s2527 = scalar_lea.vmem %s4, %s2526
      // Predicated region
      $region37: #{unet_up_conv.3} parent=35 // pred_check
        %p2528 = pneg %p122
      $region38: #{unet_up_conv.3} parent=35 // pred_check_branch
        %2530 = sbr.rel (%p2528) target = $region40
      $region39: #{unet_up_conv.3} parent=35 // pred_region
        _
      $region40: #{unet_up_conv.3} parent=35 // pred_fallthru
        _
    $region36: #{unet_up_conv.3} parent=5 // pred_fallthru
      _
    %p2531 = scmp.le.s32.totalorder 2, %s10
    // Predicated region
    $region41: #{unet_up_conv.3} parent=5 // pred_check
      %p2532 = pneg %p2531
    $region42: #{unet_up_conv.3} parent=5 // pred_check_branch
      %2534 = sbr.rel (%p2532) target = $region44
    $region43: #{unet_up_conv.3} parent=5 // pred_region
      %s2535 = ssub.s32 %s10, 2
      // Predicated region
      $region45: #{unet_up_conv.3} parent=43 // pred_check
        %p2536 = pneg %p128
      $region46: #{unet_up_conv.3} parent=43 // pred_check_branch
        %2538 = sbr.rel (%p2536) target = $region48
      $region47: #{unet_up_conv.3} parent=43 // pred_region
        %p2539 = scmp.lt.s32.totalorder %s16, 1
        %s2540 = scalar_select %p2539, %s16, 1
        %s2541 = smul.addr %s2540, 32
        %s2542 = smul.addr %s2541, 8
        %s2543 = scalar_lea.vmem %s4, %s2542
      $region48: #{unet_up_conv.3} parent=43 // pred_fallthru
        _
    $region44: #{unet_up_conv.3} parent=5 // pred_fallthru
      _
  $region6: #{unet_up_conv.3} parent=0 // loop_footer
    %s14 = sadd.s32 1, %s10
  $region7: #{unet_up_conv.3} parent=0 // loop_footer_branch
    %9 = sbr.rel target = $region3
  $region8: #{unet_up_conv.3} parent=0 // loop_exit
    _

</llo_original>
